<compile_context>
chip_gen: v7x
topology: tpu7x:2x2x1
jax: 0.10.0
libtpu: 0.0.40
codegen_flags: <defaults>
</compile_context>

<pallas_src>
import functools

import jax
import jax.numpy as jnp
from jax.experimental import pallas as pl
from jax.experimental.pallas import tpu as pltpu

NEG_SLOPE = 0.2       # dgl GATConv default negative_slope
MASK_BIG = 1e30       # finite "minus infinity" for non-edges
DENOM_EPS = 1e-20     # normal-range denom guard (1e-38 can flush-to-zero on TPU)


def _round_up(x, m):
    return (x + m - 1) // m * m


def _gat_kernel(el_t_ref, er_ref, adj_ref, h_src_ref, bias_ref, out_ref,
                m_ref, l_ref, acc_ref, *, num_heads, head_dim):
    """One (dst tile, src tile) grid step with online-softmax accumulation."""
    j = pl.program_id(1)

    @pl.when(j == 0)
    def _init():
        m_ref[...] = jnp.full(m_ref.shape, -MASK_BIG, dtype=jnp.float32)
        l_ref[...] = jnp.zeros(l_ref.shape, dtype=jnp.float32)
        acc_ref[...] = jnp.zeros(acc_ref.shape, dtype=jnp.float32)

    adj = adj_ref[...].astype(jnp.float32)        # (T, Ts) 0/1, int8 in HBM
    er = er_ref[...]                              # (T, H)  f32
    el_t = el_t_ref[...]                          # (H, Ts) f32 (pre-transposed in wrapper)
    h_src = h_src_ref[...]                        # (Ts, H*D) bf16

    m_list, l_list, acc_list = [], [], []
    # Static unroll over heads (H is small); fori_loop only needed for large H/Ns.
    for hd in range(num_heads):
        lo = hd * head_dim
        hi = lo + head_dim

        # e[v, u] = leaky_relu(er[v] + el[u]); non-edges -> finite -1e30 (no neg slab).
        e = er[:, hd:hd + 1] + el_t[hd:hd + 1, :]                  # (T, Ts)
        e = jnp.where(e > 0, e, NEG_SLOPE * e)                     # leaky relu
        e = jnp.where(adj > 0, e, -MASK_BIG)                       # mask folded in

        # Online softmax update (f32 statistics).
        m_prev = m_ref[:, hd:hd + 1]                               # (T, 1)
        m_new = jnp.maximum(m_prev, jnp.max(e, axis=1, keepdims=True))
        corr = jnp.exp(m_prev - m_new)                             # (T, 1)
        p = jnp.exp(e - m_new) * adj                               # exact 0 off-edge;
                                                                   # keeps zero-in-degree rows at 0
        l_new = corr * l_ref[:, hd:hd + 1] + jnp.sum(p, axis=1, keepdims=True)

        # Weighted aggregation of source features: bf16 MXU operands, f32 accumulate.
        contrib = jnp.dot(p.astype(jnp.bfloat16), h_src[:, lo:hi],
                          preferred_element_type=jnp.float32)      # (T, D)
        acc_new = corr * acc_ref[:, lo:hi] + contrib

        m_list.append(m_new)
        l_list.append(l_new)
        acc_list.append(acc_new)

    # Single lane-dense scratch stores (instead of per-head slice stores).
    m_ref[...] = jnp.concatenate(m_list, axis=-1)
    l_ref[...] = jnp.concatenate(l_list, axis=-1)
    acc_ref[...] = jnp.concatenate(acc_list, axis=-1)

    @pl.when(j == pl.num_programs(1) - 1)
    def _finalize():
        inv_l = pl.reciprocal(l_ref[...] + DENOM_EPS, approx=True)   # (T, H), EUP vrcp
        outs = [acc_ref[:, h * head_dim:(h + 1) * head_dim] * inv_l[:, h:h + 1]
                for h in range(num_heads)]
        res = jnp.concatenate(outs, axis=-1) + bias_ref[...]
        # One unmasked lane-dense (T, H*D) store.
        out_ref[...] = jnp.maximum(res, 0.0).astype(out_ref.dtype)


def gat_conv_forward(feat, adj, w, attn_l, attn_r, bias, *, num_heads,
                     tile_dst=256, tile_src=512):
    """feat (N, F_in), adj (N, N) 0/1 mask (dst, src), w (F_in, H*D),
    attn_{l,r} (H, D), bias (1, H*D). Returns (N, H*D) f32."""
    n, _ = feat.shape
    hd_total = w.shape[1]
    head_dim = hd_total // num_heads

    # ---- Hoisted projections (done once, plain XLA matmuls in f32). ----
    h = jnp.dot(feat, w)                                      # (N, H*D)
    h3 = h.reshape(n, num_heads, head_dim)
    el_t = jnp.einsum('nhd,hd->hn', h3, attn_l)               # (H, N) pre-transposed
    er = jnp.einsum('nhd,hd->nh', h3, attn_r)                 # (N, H)

    # ---- Pad node count so src/dst tile evenly (tiles are multiples of 128). ----
    n_pad = _round_up(n, 128)
    tile_dst = min(tile_dst, n_pad)
    tile_src = min(tile_src, n_pad)
    n_pad = _round_up(n_pad, max(tile_dst, tile_src))
    assert n_pad % tile_dst == 0 and n_pad % tile_src == 0

    h_p = jnp.zeros((n_pad, hd_total), jnp.bfloat16).at[:n, :].set(h.astype(jnp.bfloat16))
    el_t_p = jnp.zeros((num_heads, n_pad), jnp.float32).at[:, :n].set(el_t)
    er_p = jnp.zeros((n_pad, num_heads), jnp.float32).at[:n, :].set(er)
    adj_p = jnp.zeros((n_pad, n_pad), jnp.int8).at[:n, :n].set((adj > 0).astype(jnp.int8))

    grid = (n_pad // tile_dst, n_pad // tile_src)
    kernel = functools.partial(_gat_kernel, num_heads=num_heads, head_dim=head_dim)

    out = pl.pallas_call(
        kernel,
        out_shape=jax.ShapeDtypeStruct((n_pad, hd_total), jnp.float32),
        grid_spec=pltpu.PrefetchScalarGridSpec(
            num_scalar_prefetch=0,
            grid=grid,
            in_specs=[
                pl.BlockSpec((num_heads, tile_src), lambda i, j: (0, j)),   # el^T  (H, Ts)
                pl.BlockSpec((tile_dst, num_heads), lambda i, j: (i, 0)),   # er    (T, H)
                pl.BlockSpec((tile_dst, tile_src), lambda i, j: (i, j)),    # adj   (T, Ts) int8
                pl.BlockSpec((tile_src, hd_total), lambda i, j: (j, 0)),    # h_src (Ts, H*D) bf16
                pl.BlockSpec((1, hd_total), lambda i, j: (0, 0)),           # bias
            ],
            out_specs=pl.BlockSpec((tile_dst, hd_total), lambda i, j: (i, 0)),
            scratch_shapes=[
                pltpu.VMEM((tile_dst, num_heads), jnp.float32),             # running max
                pltpu.VMEM((tile_dst, num_heads), jnp.float32),             # running denom
                pltpu.VMEM((tile_dst, hd_total), jnp.float32),              # accumulator
            ],
        ),
        compiler_params=pltpu.CompilerParams(
            # dst tiles shard across TensorCores; src axis is the softmax reduction.
            dimension_semantics=("parallel", "arbitrary")),
    )(el_t_p, er_p, adj_p, h_p, bias)
    return out[:n]


def _reference(feat, adj, w, attn_l, attn_r, bias, num_heads):
    """Pure-JAX f32 reference of the same math for a correctness check."""
    n = feat.shape[0]
    head_dim = w.shape[1] // num_heads
    h = feat @ w
    h3 = h.reshape(n, num_heads, head_dim)
    el = jnp.einsum('nhd,hd->nh', h3, attn_l)
    er = jnp.einsum('nhd,hd->nh', h3, attn_r)
    e = el[None, :, :] + er[:, None, :]                 # (dst, src, head)
    e = jnp.where(e > 0, e, NEG_SLOPE * e)
    mask = adj[:, :, None] > 0
    e = jnp.where(mask, e, -jnp.inf)
    m = jnp.max(e, axis=1, keepdims=True)
    m = jnp.where(jnp.isfinite(m), m, 0.0)
    p = jnp.where(mask, jnp.exp(e - m), 0.0)
    denom = jnp.sum(p, axis=1, keepdims=True)
    alpha = p / jnp.maximum(denom, 1e-20)
    rst = jnp.einsum('vuh,uhd->vhd', alpha, h3)
    out = rst.reshape(n, num_heads * head_dim) + bias
    return jnp.maximum(out, 0.0)


if __name__ == "__main__":
    # Small deterministic problem: N nodes, in_feat -> out_feat with num_heads heads.
    N = 64
    in_feat = 32
    out_feat = 128
    num_heads = 4
    head_dim = out_feat // num_heads          # dgl GATConv(out_feat // num_heads per head)

    key = jax.random.PRNGKey(0)
    k_feat, k_adj, k_w, k_al, k_ar = jax.random.split(key, 5)

    feat = jax.random.normal(k_feat, (N, in_feat), dtype=jnp.float32)

    # Random directed graph as a dense adjacency mask (dst, src), ~25% density,
    # plus self-loops so most nodes have at least one incoming edge.
    adj = (jax.random.uniform(k_adj, (N, N)) < 0.25).astype(jnp.float32)
    adj = jnp.maximum(adj, jnp.eye(N, dtype=jnp.float32))

    # Deterministic parameter init (xavier-ish scaled normals, zero bias).
    w = jax.random.normal(k_w, (in_feat, out_feat), dtype=jnp.float32) * (1.0 / jnp.sqrt(in_feat))
    attn_l = jax.random.normal(k_al, (num_heads, head_dim), dtype=jnp.float32) * 0.1
    attn_r = jax.random.normal(k_ar, (num_heads, head_dim), dtype=jnp.float32) * 0.1
    bias = jnp.zeros((1, out_feat), dtype=jnp.float32)

    out = gat_conv_forward(feat, adj, w, attn_l, attn_r, bias, num_heads=num_heads)
    out = jax.block_until_ready(out)

    ref = _reference(feat, adj, w, attn_l, attn_r, bias, num_heads)
    assert out.shape == (N, out_feat)
    # bf16 aggregation operands + approx reciprocal -> slightly loose tolerance.
    assert jnp.allclose(out, ref, atol=2e-2, rtol=2e-2), "Pallas output mismatch vs reference"

    print("KERNEL_OK")
</pallas_src>

<mosaic_0001>
module attributes {stable_mosaic.version = 11 : i64} {
  func.func @_gat_kernel(%arg0: i32, %arg1: i32, %arg2: memref<4x128xf32, #tpu.memory_space<vmem>>, %arg3: memref<128x4xf32, #tpu.memory_space<vmem>>, %arg4: memref<128x128xi8, #tpu.memory_space<vmem>>, %arg5: memref<128x128xbf16, #tpu.memory_space<vmem>>, %arg6: memref<1x128xf32, #tpu.memory_space<vmem>>, %arg7: memref<128x128xf32, #tpu.memory_space<vmem>>, %arg8: memref<128x4xf32, #tpu.memory_space<vmem>>, %arg9: memref<128x4xf32, #tpu.memory_space<vmem>>, %arg10: memref<128x128xf32, #tpu.memory_space<vmem>>) attributes {dimension_semantics = [#tpu.dimension_semantics<parallel>, #tpu.dimension_semantics<arbitrary>], iteration_bounds = array<i64: 1, 1>, scalar_prefetch = 0 : i64, scratch_operands = 3 : i64, tpu.core_type = #tpu.core_type<tc>, window_params = [{transform_indices = @transform_0, window_bounds = array<i64: 4, 128>}, {transform_indices = @transform_1, window_bounds = array<i64: 128, 4>}, {transform_indices = @transform_2, window_bounds = array<i64: 128, 128>}, {transform_indices = @transform_3, window_bounds = array<i64: 128, 128>}, {pipeline_mode = #tpu.pipeline_mode<synchronous>, transform_indices = @transform_4, window_bounds = array<i64: 1, 128>}, {transform_indices = @transform_5, window_bounds = array<i64: 128, 128>}]} {
    %c0_i32 = arith.constant 0 : i32
    %0 = arith.cmpi eq, %arg1, %c0_i32 : i32
    %1 = arith.extui %0 : i1 to i32
    %c0_i32_0 = arith.constant 0 : i32
    %2 = arith.cmpi ne, %1, %c0_i32_0 : i32
    scf.if %2 {
      %cst_61 = arith.constant -1.000000e+30 : f32
      %161 = vector.broadcast %cst_61 : f32 to vector<128x4xf32>
      %c0_62 = arith.constant 0 : index
      %c0_63 = arith.constant 0 : index
      %162 = vector.load %arg8[%c0_62, %c0_63] : memref<128x4xf32, #tpu.memory_space<vmem>>, vector<128x4xf32>
      tpu.vector_store %arg8[%c0_62, %c0_63], %161 {strides = array<i32>} : memref<128x4xf32, #tpu.memory_space<vmem>>, vector<128x4xf32>,
      %cst_64 = arith.constant 0.000000e+00 : f32
      %163 = vector.broadcast %cst_64 : f32 to vector<128x4xf32>
      %c0_65 = arith.constant 0 : index
      %c0_66 = arith.constant 0 : index
      %164 = vector.load %arg9[%c0_65, %c0_66] : memref<128x4xf32, #tpu.memory_space<vmem>>, vector<128x4xf32>
      tpu.vector_store %arg9[%c0_65, %c0_66], %163 {strides = array<i32>} : memref<128x4xf32, #tpu.memory_space<vmem>>, vector<128x4xf32>,
      %cst_67 = arith.constant 0.000000e+00 : f32
      %165 = vector.broadcast %cst_67 : f32 to vector<128x128xf32>
      %c0_68 = arith.constant 0 : index
      %c0_69 = arith.constant 0 : index
      %166 = vector.load %arg10[%c0_68, %c0_69] : memref<128x128xf32, #tpu.memory_space<vmem>>, vector<128x128xf32>
      tpu.vector_store %arg10[%c0_68, %c0_69], %165 {strides = array<i32>} : memref<128x128xf32, #tpu.memory_space<vmem>>, vector<128x128xf32>,
    } else {
    }
    %c0 = arith.constant 0 : index
    %c0_1 = arith.constant 0 : index
    %3 = vector.load %arg4[%c0, %c0_1] : memref<128x128xi8, #tpu.memory_space<vmem>>, vector<128x128xi8>
    %4 = arith.sitofp %3 : vector<128x128xi8> to vector<128x128xf32>
    %c0_2 = arith.constant 0 : index
    %c0_3 = arith.constant 0 : index
    %5 = vector.load %arg3[%c0_2, %c0_3] : memref<128x4xf32, #tpu.memory_space<vmem>>, vector<128x4xf32>
    %c0_4 = arith.constant 0 : index
    %c0_5 = arith.constant 0 : index
    %6 = vector.load %arg2[%c0_4, %c0_5] : memref<4x128xf32, #tpu.memory_space<vmem>>, vector<4x128xf32>
    %c0_6 = arith.constant 0 : index
    %c0_7 = arith.constant 0 : index
    %7 = vector.load %arg5[%c0_6, %c0_7] : memref<128x128xbf16, #tpu.memory_space<vmem>>, vector<128x128xbf16>
    %8 = vector.extract_strided_slice %5 {offsets = [0, 0], sizes = [128, 1], strides = [1, 1]} : vector<128x4xf32> to vector<128x1xf32>
    %9 = vector.extract_strided_slice %6 {offsets = [0, 0], sizes = [1, 128], strides = [1, 1]} : vector<4x128xf32> to vector<1x128xf32>
    %10 = vector.broadcast %8 : vector<128x1xf32> to vector<128x128xf32>
    %11 = vector.broadcast %9 : vector<1x128xf32> to vector<128x128xf32>
    %12 = arith.addf %10, %11 : vector<128x128xf32>
    %cst = arith.constant 0.000000e+00 : f32
    %13 = vector.broadcast %cst : f32 to vector<128x128xf32>
    %14 = arith.cmpf ogt, %12, %13 : vector<128x128xf32>
    %cst_8 = arith.constant 2.000000e-01 : f32
    %15 = vector.broadcast %cst_8 : f32 to vector<128x128xf32>
    %16 = arith.mulf %15, %12 : vector<128x128xf32>
    %17 = arith.select %14, %12, %16 : vector<128x128xi1>, vector<128x128xf32>
    %cst_9 = arith.constant 0.000000e+00 : f32
    %18 = vector.broadcast %cst_9 : f32 to vector<128x128xf32>
    %19 = arith.cmpf ogt, %4, %18 : vector<128x128xf32>
    %cst_10 = arith.constant -1.000000e+30 : f32
    %20 = vector.broadcast %cst_10 : f32 to vector<128x128xf32>
    %21 = arith.select %19, %17, %20 : vector<128x128xi1>, vector<128x128xf32>
    %c0_11 = arith.constant 0 : index
    %c0_12 = arith.constant 0 : index
    %22 = vector.load %arg8[%c0_11, %c0_12] : memref<128x4xf32, #tpu.memory_space<vmem>>, vector<128x1xf32>
    %cst_13 = arith.constant dense<0xFF800000> : vector<128xf32>
    %23 = vector.multi_reduction <maximumf>, %21, %cst_13 [1] : vector<128x128xf32> to vector<128xf32>
    %24 = vector.shape_cast %23 : vector<128xf32> to vector<128x1xf32>
    %25 = arith.maximumf %22, %24 : vector<128x1xf32>
    %26 = arith.subf %22, %25 : vector<128x1xf32>
    %27 = math.exp %26 : vector<128x1xf32>
    %28 = vector.broadcast %25 : vector<128x1xf32> to vector<128x128xf32>
    %29 = arith.subf %21, %28 : vector<128x128xf32>
    %30 = math.exp %29 : vector<128x128xf32>
    %31 = arith.mulf %30, %4 : vector<128x128xf32>
    %c0_14 = arith.constant 0 : index
    %c0_15 = arith.constant 0 : index
    %32 = vector.load %arg9[%c0_14, %c0_15] : memref<128x4xf32, #tpu.memory_space<vmem>>, vector<128x1xf32>
    %33 = arith.mulf %27, %32 : vector<128x1xf32>
    %cst_16 = arith.constant dense<0.000000e+00> : vector<128xf32>
    %34 = vector.multi_reduction <add>, %31, %cst_16 [1] : vector<128x128xf32> to vector<128xf32>
    %35 = vector.shape_cast %34 : vector<128xf32> to vector<128x1xf32>
    %36 = arith.addf %33, %35 : vector<128x1xf32>
    %37 = arith.truncf %31 : vector<128x128xf32> to vector<128x128xbf16>
    %38 = vector.extract_strided_slice %7 {offsets = [0, 0], sizes = [128, 32], strides = [1, 1]} : vector<128x128xbf16> to vector<128x32xbf16>
    %cst_17 = arith.constant dense<0.000000e+00> : vector<128x32xf32>
    %39 = tpu.matmul %37, %38, %cst_17 {dimension_numbers = #tpu.dot_dimension_numbers<[1], [0], [0], [1], [0, 0, 1, 1], [], []>} : vector<128x128xbf16>, vector<128x32xbf16>, vector<128x32xf32> -> vector<128x32xf32>
    %c0_18 = arith.constant 0 : index
    %c0_19 = arith.constant 0 : index
    %40 = vector.load %arg10[%c0_18, %c0_19] : memref<128x128xf32, #tpu.memory_space<vmem>>, vector<128x32xf32>
    %41 = vector.broadcast %27 : vector<128x1xf32> to vector<128x32xf32>
    %42 = arith.mulf %41, %40 : vector<128x32xf32>
    %43 = arith.addf %42, %39 : vector<128x32xf32>
    %44 = vector.extract_strided_slice %5 {offsets = [0, 1], sizes = [128, 1], strides = [1, 1]} : vector<128x4xf32> to vector<128x1xf32>
    %45 = vector.extract_strided_slice %6 {offsets = [1, 0], sizes = [1, 128], strides = [1, 1]} : vector<4x128xf32> to vector<1x128xf32>
    %46 = vector.broadcast %44 : vector<128x1xf32> to vector<128x128xf32>
    %47 = vector.broadcast %45 : vector<1x128xf32> to vector<128x128xf32>
    %48 = arith.addf %46, %47 : vector<128x128xf32>
    %cst_20 = arith.constant 0.000000e+00 : f32
    %49 = vector.broadcast %cst_20 : f32 to vector<128x128xf32>
    %50 = arith.cmpf ogt, %48, %49 : vector<128x128xf32>
    %cst_21 = arith.constant 2.000000e-01 : f32
    %51 = vector.broadcast %cst_21 : f32 to vector<128x128xf32>
    %52 = arith.mulf %51, %48 : vector<128x128xf32>
    %53 = arith.select %50, %48, %52 : vector<128x128xi1>, vector<128x128xf32>
    %cst_22 = arith.constant 0.000000e+00 : f32
    %54 = vector.broadcast %cst_22 : f32 to vector<128x128xf32>
    %55 = arith.cmpf ogt, %4, %54 : vector<128x128xf32>
    %cst_23 = arith.constant -1.000000e+30 : f32
    %56 = vector.broadcast %cst_23 : f32 to vector<128x128xf32>
    %57 = arith.select %55, %53, %56 : vector<128x128xi1>, vector<128x128xf32>
    %c0_24 = arith.constant 0 : index
    %c1 = arith.constant 1 : index
    %58 = vector.load %arg8[%c0_24, %c1] : memref<128x4xf32, #tpu.memory_space<vmem>>, vector<128x1xf32>
    %cst_25 = arith.constant dense<0xFF800000> : vector<128xf32>
    %59 = vector.multi_reduction <maximumf>, %57, %cst_25 [1] : vector<128x128xf32> to vector<128xf32>
    %60 = vector.shape_cast %59 : vector<128xf32> to vector<128x1xf32>
    %61 = arith.maximumf %58, %60 : vector<128x1xf32>
    %62 = arith.subf %58, %61 : vector<128x1xf32>
    %63 = math.exp %62 : vector<128x1xf32>
    %64 = vector.broadcast %61 : vector<128x1xf32> to vector<128x128xf32>
    %65 = arith.subf %57, %64 : vector<128x128xf32>
    %66 = math.exp %65 : vector<128x128xf32>
    %67 = arith.mulf %66, %4 : vector<128x128xf32>
    %c0_26 = arith.constant 0 : index
    %c1_27 = arith.constant 1 : index
    %68 = vector.load %arg9[%c0_26, %c1_27] : memref<128x4xf32, #tpu.memory_space<vmem>>, vector<128x1xf32>
    %69 = arith.mulf %63, %68 : vector<128x1xf32>
    %cst_28 = arith.constant dense<0.000000e+00> : vector<128xf32>
    %70 = vector.multi_reduction <add>, %67, %cst_28 [1] : vector<128x128xf32> to vector<128xf32>
    %71 = vector.shape_cast %70 : vector<128xf32> to vector<128x1xf32>
    %72 = arith.addf %69, %71 : vector<128x1xf32>
    %73 = arith.truncf %67 : vector<128x128xf32> to vector<128x128xbf16>
    %74 = vector.extract_strided_slice %7 {offsets = [0, 32], sizes = [128, 32], strides = [1, 1]} : vector<128x128xbf16> to vector<128x32xbf16>
    %cst_29 = arith.constant dense<0.000000e+00> : vector<128x32xf32>
    %75 = tpu.matmul %73, %74, %cst_29 {dimension_numbers = #tpu.dot_dimension_numbers<[1], [0], [0], [1], [0, 0, 1, 1], [], []>} : vector<128x128xbf16>, vector<128x32xbf16>, vector<128x32xf32> -> vector<128x32xf32>
    %c0_30 = arith.constant 0 : index
    %c32 = arith.constant 32 : index
    %76 = vector.load %arg10[%c0_30, %c32] : memref<128x128xf32, #tpu.memory_space<vmem>>, vector<128x32xf32>
    %77 = vector.broadcast %63 : vector<128x1xf32> to vector<128x32xf32>
    %78 = arith.mulf %77, %76 : vector<128x32xf32>
    %79 = arith.addf %78, %75 : vector<128x32xf32>
    %80 = vector.extract_strided_slice %5 {offsets = [0, 2], sizes = [128, 1], strides = [1, 1]} : vector<128x4xf32> to vector<128x1xf32>
    %81 = vector.extract_strided_slice %6 {offsets = [2, 0], sizes = [1, 128], strides = [1, 1]} : vector<4x128xf32> to vector<1x128xf32>
    %82 = vector.broadcast %80 : vector<128x1xf32> to vector<128x128xf32>
    %83 = vector.broadcast %81 : vector<1x128xf32> to vector<128x128xf32>
    %84 = arith.addf %82, %83 : vector<128x128xf32>
    %cst_31 = arith.constant 0.000000e+00 : f32
    %85 = vector.broadcast %cst_31 : f32 to vector<128x128xf32>
    %86 = arith.cmpf ogt, %84, %85 : vector<128x128xf32>
    %cst_32 = arith.constant 2.000000e-01 : f32
    %87 = vector.broadcast %cst_32 : f32 to vector<128x128xf32>
    %88 = arith.mulf %87, %84 : vector<128x128xf32>
    %89 = arith.select %86, %84, %88 : vector<128x128xi1>, vector<128x128xf32>
    %cst_33 = arith.constant 0.000000e+00 : f32
    %90 = vector.broadcast %cst_33 : f32 to vector<128x128xf32>
    %91 = arith.cmpf ogt, %4, %90 : vector<128x128xf32>
    %cst_34 = arith.constant -1.000000e+30 : f32
    %92 = vector.broadcast %cst_34 : f32 to vector<128x128xf32>
    %93 = arith.select %91, %89, %92 : vector<128x128xi1>, vector<128x128xf32>
    %c0_35 = arith.constant 0 : index
    %c2 = arith.constant 2 : index
    %94 = vector.load %arg8[%c0_35, %c2] : memref<128x4xf32, #tpu.memory_space<vmem>>, vector<128x1xf32>
    %cst_36 = arith.constant dense<0xFF800000> : vector<128xf32>
    %95 = vector.multi_reduction <maximumf>, %93, %cst_36 [1] : vector<128x128xf32> to vector<128xf32>
    %96 = vector.shape_cast %95 : vector<128xf32> to vector<128x1xf32>
    %97 = arith.maximumf %94, %96 : vector<128x1xf32>
    %98 = arith.subf %94, %97 : vector<128x1xf32>
    %99 = math.exp %98 : vector<128x1xf32>
    %100 = vector.broadcast %97 : vector<128x1xf32> to vector<128x128xf32>
    %101 = arith.subf %93, %100 : vector<128x128xf32>
    %102 = math.exp %101 : vector<128x128xf32>
    %103 = arith.mulf %102, %4 : vector<128x128xf32>
    %c0_37 = arith.constant 0 : index
    %c2_38 = arith.constant 2 : index
    %104 = vector.load %arg9[%c0_37, %c2_38] : memref<128x4xf32, #tpu.memory_space<vmem>>, vector<128x1xf32>
    %105 = arith.mulf %99, %104 : vector<128x1xf32>
    %cst_39 = arith.constant dense<0.000000e+00> : vector<128xf32>
    %106 = vector.multi_reduction <add>, %103, %cst_39 [1] : vector<128x128xf32> to vector<128xf32>
    %107 = vector.shape_cast %106 : vector<128xf32> to vector<128x1xf32>
    %108 = arith.addf %105, %107 : vector<128x1xf32>
    %109 = arith.truncf %103 : vector<128x128xf32> to vector<128x128xbf16>
    %110 = vector.extract_strided_slice %7 {offsets = [0, 64], sizes = [128, 32], strides = [1, 1]} : vector<128x128xbf16> to vector<128x32xbf16>
    %cst_40 = arith.constant dense<0.000000e+00> : vector<128x32xf32>
    %111 = tpu.matmul %109, %110, %cst_40 {dimension_numbers = #tpu.dot_dimension_numbers<[1], [0], [0], [1], [0, 0, 1, 1], [], []>} : vector<128x128xbf16>, vector<128x32xbf16>, vector<128x32xf32> -> vector<128x32xf32>
    %c0_41 = arith.constant 0 : index
    %c64 = arith.constant 64 : index
    %112 = vector.load %arg10[%c0_41, %c64] : memref<128x128xf32, #tpu.memory_space<vmem>>, vector<128x32xf32>
    %113 = vector.broadcast %99 : vector<128x1xf32> to vector<128x32xf32>
    %114 = arith.mulf %113, %112 : vector<128x32xf32>
    %115 = arith.addf %114, %111 : vector<128x32xf32>
    %116 = vector.extract_strided_slice %5 {offsets = [0, 3], sizes = [128, 1], strides = [1, 1]} : vector<128x4xf32> to vector<128x1xf32>
    %117 = vector.extract_strided_slice %6 {offsets = [3, 0], sizes = [1, 128], strides = [1, 1]} : vector<4x128xf32> to vector<1x128xf32>
    %118 = vector.broadcast %116 : vector<128x1xf32> to vector<128x128xf32>
    %119 = vector.broadcast %117 : vector<1x128xf32> to vector<128x128xf32>
    %120 = arith.addf %118, %119 : vector<128x128xf32>
    %cst_42 = arith.constant 0.000000e+00 : f32
    %121 = vector.broadcast %cst_42 : f32 to vector<128x128xf32>
    %122 = arith.cmpf ogt, %120, %121 : vector<128x128xf32>
    %cst_43 = arith.constant 2.000000e-01 : f32
    %123 = vector.broadcast %cst_43 : f32 to vector<128x128xf32>
    %124 = arith.mulf %123, %120 : vector<128x128xf32>
    %125 = arith.select %122, %120, %124 : vector<128x128xi1>, vector<128x128xf32>
    %cst_44 = arith.constant 0.000000e+00 : f32
    %126 = vector.broadcast %cst_44 : f32 to vector<128x128xf32>
    %127 = arith.cmpf ogt, %4, %126 : vector<128x128xf32>
    %cst_45 = arith.constant -1.000000e+30 : f32
    %128 = vector.broadcast %cst_45 : f32 to vector<128x128xf32>
    %129 = arith.select %127, %125, %128 : vector<128x128xi1>, vector<128x128xf32>
    %c0_46 = arith.constant 0 : index
    %c3 = arith.constant 3 : index
    %130 = vector.load %arg8[%c0_46, %c3] : memref<128x4xf32, #tpu.memory_space<vmem>>, vector<128x1xf32>
    %cst_47 = arith.constant dense<0xFF800000> : vector<128xf32>
    %131 = vector.multi_reduction <maximumf>, %129, %cst_47 [1] : vector<128x128xf32> to vector<128xf32>
    %132 = vector.shape_cast %131 : vector<128xf32> to vector<128x1xf32>
    %133 = arith.maximumf %130, %132 : vector<128x1xf32>
    %134 = arith.subf %130, %133 : vector<128x1xf32>
    %135 = math.exp %134 : vector<128x1xf32>
    %136 = vector.broadcast %133 : vector<128x1xf32> to vector<128x128xf32>
    %137 = arith.subf %129, %136 : vector<128x128xf32>
    %138 = math.exp %137 : vector<128x128xf32>
    %139 = arith.mulf %138, %4 : vector<128x128xf32>
    %c0_48 = arith.constant 0 : index
    %c3_49 = arith.constant 3 : index
    %140 = vector.load %arg9[%c0_48, %c3_49] : memref<128x4xf32, #tpu.memory_space<vmem>>, vector<128x1xf32>
    %141 = arith.mulf %135, %140 : vector<128x1xf32>
    %cst_50 = arith.constant dense<0.000000e+00> : vector<128xf32>
    %142 = vector.multi_reduction <add>, %139, %cst_50 [1] : vector<128x128xf32> to vector<128xf32>
    %143 = vector.shape_cast %142 : vector<128xf32> to vector<128x1xf32>
    %144 = arith.addf %141, %143 : vector<128x1xf32>
    %145 = arith.truncf %139 : vector<128x128xf32> to vector<128x128xbf16>
    %146 = vector.extract_strided_slice %7 {offsets = [0, 96], sizes = [128, 32], strides = [1, 1]} : vector<128x128xbf16> to vector<128x32xbf16>
    %cst_51 = arith.constant dense<0.000000e+00> : vector<128x32xf32>
    %147 = tpu.matmul %145, %146, %cst_51 {dimension_numbers = #tpu.dot_dimension_numbers<[1], [0], [0], [1], [0, 0, 1, 1], [], []>} : vector<128x128xbf16>, vector<128x32xbf16>, vector<128x32xf32> -> vector<128x32xf32>
    %c0_52 = arith.constant 0 : index
    %c96 = arith.constant 96 : index
    %148 = vector.load %arg10[%c0_52, %c96] : memref<128x128xf32, #tpu.memory_space<vmem>>, vector<128x32xf32>
    %149 = vector.broadcast %135 : vector<128x1xf32> to vector<128x32xf32>
    %150 = arith.mulf %149, %148 : vector<128x32xf32>
    %151 = arith.addf %150, %147 : vector<128x32xf32>
    %152 = tpu.concatenate %25, %61, %97, %133 in 1 : vector<128x1xf32>, vector<128x1xf32>, vector<128x1xf32>, vector<128x1xf32> -> vector<128x4xf32>
    %c0_53 = arith.constant 0 : index
    %c0_54 = arith.constant 0 : index
    %153 = vector.load %arg8[%c0_53, %c0_54] : memref<128x4xf32, #tpu.memory_space<vmem>>, vector<128x4xf32>
    tpu.vector_store %arg8[%c0_53, %c0_54], %152 {strides = array<i32>} : memref<128x4xf32, #tpu.memory_space<vmem>>, vector<128x4xf32>,
    %154 = tpu.concatenate %36, %72, %108, %144 in 1 : vector<128x1xf32>, vector<128x1xf32>, vector<128x1xf32>, vector<128x1xf32> -> vector<128x4xf32>
    %c0_55 = arith.constant 0 : index
    %c0_56 = arith.constant 0 : index
    %155 = vector.load %arg9[%c0_55, %c0_56] : memref<128x4xf32, #tpu.memory_space<vmem>>, vector<128x4xf32>
    tpu.vector_store %arg9[%c0_55, %c0_56], %154 {strides = array<i32>} : memref<128x4xf32, #tpu.memory_space<vmem>>, vector<128x4xf32>,
    %156 = tpu.concatenate %43, %79, %115, %151 in 1 : vector<128x32xf32>, vector<128x32xf32>, vector<128x32xf32>, vector<128x32xf32> -> vector<128x128xf32>
    %c0_57 = arith.constant 0 : index
    %c0_58 = arith.constant 0 : index
    %157 = vector.load %arg10[%c0_57, %c0_58] : memref<128x128xf32, #tpu.memory_space<vmem>>, vector<128x128xf32>
    tpu.vector_store %arg10[%c0_57, %c0_58], %156 {strides = array<i32>} : memref<128x128xf32, #tpu.memory_space<vmem>>, vector<128x128xf32>,
    %c0_i32_59 = arith.constant 0 : i32
    %158 = arith.cmpi eq, %arg1, %c0_i32_59 : i32
    %159 = arith.extui %158 : i1 to i32
    %c0_i32_60 = arith.constant 0 : i32
    %160 = arith.cmpi ne, %159, %c0_i32_60 : i32
    scf.if %160 {
      %c0_61 = arith.constant 0 : index
      %c0_62 = arith.constant 0 : index
      %161 = vector.load %arg9[%c0_61, %c0_62] : memref<128x4xf32, #tpu.memory_space<vmem>>, vector<128x4xf32>
      %cst_63 = arith.constant 9.99999968E-21 : f32
      %162 = vector.broadcast %cst_63 : f32 to vector<128x4xf32>
      %163 = arith.addf %161, %162 : vector<128x4xf32>
      %164 = tpu.reciprocal %163 {approx = true} : vector<128x4xf32> -> vector<128x4xf32>
      %c0_64 = arith.constant 0 : index
      %c0_65 = arith.constant 0 : index
      %165 = vector.load %arg10[%c0_64, %c0_65] : memref<128x128xf32, #tpu.memory_space<vmem>>, vector<128x32xf32>
      %166 = vector.extract_strided_slice %164 {offsets = [0, 0], sizes = [128, 1], strides = [1, 1]} : vector<128x4xf32> to vector<128x1xf32>
      %167 = vector.broadcast %166 : vector<128x1xf32> to vector<128x32xf32>
      %168 = arith.mulf %165, %167 : vector<128x32xf32>
      %c0_66 = arith.constant 0 : index
      %c32_67 = arith.constant 32 : index
      %169 = vector.load %arg10[%c0_66, %c32_67] : memref<128x128xf32, #tpu.memory_space<vmem>>, vector<128x32xf32>
      %170 = vector.extract_strided_slice %164 {offsets = [0, 1], sizes = [128, 1], strides = [1, 1]} : vector<128x4xf32> to vector<128x1xf32>
      %171 = vector.broadcast %170 : vector<128x1xf32> to vector<128x32xf32>
      %172 = arith.mulf %169, %171 : vector<128x32xf32>
      %c0_68 = arith.constant 0 : index
      %c64_69 = arith.constant 64 : index
      %173 = vector.load %arg10[%c0_68, %c64_69] : memref<128x128xf32, #tpu.memory_space<vmem>>, vector<128x32xf32>
      %174 = vector.extract_strided_slice %164 {offsets = [0, 2], sizes = [128, 1], strides = [1, 1]} : vector<128x4xf32> to vector<128x1xf32>
      %175 = vector.broadcast %174 : vector<128x1xf32> to vector<128x32xf32>
      %176 = arith.mulf %173, %175 : vector<128x32xf32>
      %c0_70 = arith.constant 0 : index
      %c96_71 = arith.constant 96 : index
      %177 = vector.load %arg10[%c0_70, %c96_71] : memref<128x128xf32, #tpu.memory_space<vmem>>, vector<128x32xf32>
      %178 = vector.extract_strided_slice %164 {offsets = [0, 3], sizes = [128, 1], strides = [1, 1]} : vector<128x4xf32> to vector<128x1xf32>
      %179 = vector.broadcast %178 : vector<128x1xf32> to vector<128x32xf32>
      %180 = arith.mulf %177, %179 : vector<128x32xf32>
      %181 = tpu.concatenate %168, %172, %176, %180 in 1 : vector<128x32xf32>, vector<128x32xf32>, vector<128x32xf32>, vector<128x32xf32> -> vector<128x128xf32>
      %c0_72 = arith.constant 0 : index
      %c0_73 = arith.constant 0 : index
      %182 = vector.load %arg6[%c0_72, %c0_73] : memref<1x128xf32, #tpu.memory_space<vmem>>, vector<1x128xf32>
      %183 = vector.broadcast %182 : vector<1x128xf32> to vector<128x128xf32>
      %184 = arith.addf %181, %183 : vector<128x128xf32>
      %cst_74 = arith.constant 0.000000e+00 : f32
      %185 = vector.broadcast %cst_74 : f32 to vector<128x128xf32>
      %186 = arith.maximumf %184, %185 : vector<128x128xf32>
      %c0_75 = arith.constant 0 : index
      %c0_76 = arith.constant 0 : index
      %187 = vector.load %arg7[%c0_75, %c0_76] : memref<128x128xf32, #tpu.memory_space<vmem>>, vector<128x128xf32>
      tpu.vector_store %arg7[%c0_75, %c0_76], %186 {strides = array<i32>} : memref<128x128xf32, #tpu.memory_space<vmem>>, vector<128x128xf32>,
    } else {
    }
    return
  }
  func.func @transform_0(%arg0: i32, %arg1: i32) -> (i32, i32) {
    %c0_i32 = arith.constant 0 : i32
    %c0_i32_0 = arith.constant 0 : i32
    return %c0_i32, %arg1 : i32, i32
  }
  func.func @transform_1(%arg0: i32, %arg1: i32) -> (i32, i32) {
    %c0_i32 = arith.constant 0 : i32
    %c0_i32_0 = arith.constant 0 : i32
    return %arg0, %c0_i32 : i32, i32
  }
  func.func @transform_2(%arg0: i32, %arg1: i32) -> (i32, i32) {
    %c0_i32 = arith.constant 0 : i32
    return %arg0, %arg1 : i32, i32
  }
  func.func @transform_3(%arg0: i32, %arg1: i32) -> (i32, i32) {
    %c0_i32 = arith.constant 0 : i32
    %c0_i32_0 = arith.constant 0 : i32
    return %arg1, %c0_i32 : i32, i32
  }
  func.func @transform_4(%arg0: i32, %arg1: i32) -> (i32, i32) {
    %c0_i32 = arith.constant 0 : i32
    %c0_i32_0 = arith.constant 0 : i32
    %c0_i32_1 = arith.constant 0 : i32
    return %c0_i32, %c0_i32_0 : i32, i32
  }
  func.func @transform_5(%arg0: i32, %arg1: i32) -> (i32, i32) {
    %c0_i32 = arith.constant 0 : i32
    %c0_i32_0 = arith.constant 0 : i32
    return %arg0, %c0_i32 : i32, i32
  }
}

</mosaic_0001>

<llo_original>
// kernel: tpu_custom_call.1
$region0: #{tpu_custom_call.1}
  #allocation0 [shape = 'u32[]', space=smem, size = 0x4, offset = 0x4, fixed_abs, tag = 'smem constant byte address 0x4 - core index']
  #allocation1 [shape = 'u32[144,128]{1,0:T(1,128)}', space=vmem, size = 0x12000, scoped, tag = 'internal scratch']
  #allocation2 [shape = 'f32[128,4]{1,0:T(8,128)}', space=vmem, size = 0x10000, scoped, tag = 'scratch operand']
  #allocation3 [shape = 'f32[128,4]{1,0:T(8,128)}', space=vmem, size = 0x10000, scoped, tag = 'scratch operand']
  #allocation4 [shape = 'f32[128,128]{1,0:T(8,128)}', space=vmem, size = 0x10000, scoped, tag = 'scratch operand']
  %s0 = inlined_call_operand.vmem [shape: f32[4,128], index: 0, kind: input, shape index: {}]
  %s1 = inlined_call_operand.vmem [shape: f32[128,4], index: 1, kind: input, shape index: {}]
  %s2 = inlined_call_operand.vmem [shape: s8[128,128], index: 2, kind: input, shape index: {}]
  %s3 = inlined_call_operand.vmem [shape: bf16[128,128], index: 3, kind: input, shape index: {}]
  %s4 = inlined_call_operand.vmem [shape: f32[1,128], index: 4, kind: input, shape index: {}]
  %s5 = inlined_call_operand.hbm [shape: f32[128,128], index: 5, kind: output, shape index: {}]
  %s6 = sld [smem:[#allocation0]]
  $region38: #{tpu_custom_call.1} parent=0
    _
  %s8 = ssub.s32 1, %s6
  %s9 = scalar_select 0, %s8, %s6
  $region1: #{tpu_custom_call.1} parent=0
    #allocation5 [shape = 'u8[65536]{0}', space=vmem, size = 0x10000, scoped, tag = 'output window, operand 0, single buffered']
    #allocation6 [shape = 's32[1]{0}', space=sflag, size = 0x4, scoped, tag = 'scoped memory for tpu_custom_call.1']
    %10 = vsyncpa [#allocation6], 0
    // Predicated region
    $region2: #{tpu_custom_call.1} parent=1 // pred_check
      _
    $region3: #{tpu_custom_call.1} parent=1 // pred_check_branch
      %12 = sbr.rel (0) target = $region5
    $region4: #{tpu_custom_call.1} parent=1 // pred_region
      _
    $region5: #{tpu_custom_call.1} parent=1 // pred_fallthru
      _
    // Predicated region
    $region6: #{tpu_custom_call.1} parent=1 // pred_check
      _
    $region7: #{tpu_custom_call.1} parent=1 // pred_check_branch
      %14 = sbr.rel (0) target = $region9
    $region8: #{tpu_custom_call.1} parent=1 // pred_region
      _
    $region9: #{tpu_custom_call.1} parent=1 // pred_fallthru
      _
    // Predicated region
    $region10: #{tpu_custom_call.1} parent=1 // pred_check
      _
    $region11: #{tpu_custom_call.1} parent=1 // pred_check_branch
      %16 = sbr.rel (0) target = $region13
    $region12: #{tpu_custom_call.1} parent=1 // pred_region
      _
    $region13: #{tpu_custom_call.1} parent=1 // pred_fallthru
      _
    // Predicated region
    $region14: #{tpu_custom_call.1} parent=1 // pred_check
      _
    $region15: #{tpu_custom_call.1} parent=1 // pred_check_branch
      %18 = sbr.rel (0) target = $region17
    $region16: #{tpu_custom_call.1} parent=1 // pred_region
      _
    $region17: #{tpu_custom_call.1} parent=1 // pred_fallthru
      _
    // Predicated region
    $region18: #{tpu_custom_call.1} parent=1 // pred_check
      _
    $region19: #{tpu_custom_call.1} parent=1 // pred_check_branch
      %20 = sbr.rel (0) target = $region21
    $region20: #{tpu_custom_call.1} parent=1 // pred_region
      _
    $region21: #{tpu_custom_call.1} parent=1 // pred_fallthru
      _
    %p22 = scmp.eq.s32.totalorder 0, 0
    // Predicated region
    $region22: #{tpu_custom_call.1} parent=1 // pred_check
      %p23 = pneg %p22
    $region23: #{tpu_custom_call.1} parent=1 // pred_check_branch
      %25 = sbr.rel (%p23) target = $region25
    $region24: #{tpu_custom_call.1} parent=1 // pred_region
      %vm26 = vcmask 31744
      %27 = vst.msk [vmem:[#allocation2] sm:$0xff] %vm26, -1e+30
      %28 = vst.msk [vmem:[#allocation2 + $0x8] sm:$0xff] %vm26, -1e+30
      %29 = vst.msk [vmem:[#allocation2 + $0x10] sm:$0xff] %vm26, -1e+30
      %30 = vst.msk [vmem:[#allocation2 + $0x18] sm:$0xff] %vm26, -1e+30
      %31 = vst.msk [vmem:[#allocation2 + $0x20] sm:$0xff] %vm26, -1e+30
      %32 = vst.msk [vmem:[#allocation2 + $0x28] sm:$0xff] %vm26, -1e+30
      %33 = vst.msk [vmem:[#allocation2 + $0x30] sm:$0xff] %vm26, -1e+30
      %34 = vst.msk [vmem:[#allocation2 + $0x38] sm:$0xff] %vm26, -1e+30
      %35 = vst.msk [vmem:[#allocation2 + $0x40] sm:$0xff] %vm26, -1e+30
      %36 = vst.msk [vmem:[#allocation2 + $0x48] sm:$0xff] %vm26, -1e+30
      %37 = vst.msk [vmem:[#allocation2 + $0x50] sm:$0xff] %vm26, -1e+30
      %38 = vst.msk [vmem:[#allocation2 + $0x58] sm:$0xff] %vm26, -1e+30
      %39 = vst.msk [vmem:[#allocation2 + $0x60] sm:$0xff] %vm26, -1e+30
      %40 = vst.msk [vmem:[#allocation2 + $0x68] sm:$0xff] %vm26, -1e+30
      %41 = vst.msk [vmem:[#allocation2 + $0x70] sm:$0xff] %vm26, -1e+30
      %42 = vst.msk [vmem:[#allocation2 + $0x78] sm:$0xff] %vm26, -1e+30
      %43 = vst.msk [vmem:[#allocation3] sm:$0xff] %vm26, 0.0
      %44 = vst.msk [vmem:[#allocation3 + $0x8] sm:$0xff] %vm26, 0.0
      %45 = vst.msk [vmem:[#allocation3 + $0x10] sm:$0xff] %vm26, 0.0
      %46 = vst.msk [vmem:[#allocation3 + $0x18] sm:$0xff] %vm26, 0.0
      %47 = vst.msk [vmem:[#allocation3 + $0x20] sm:$0xff] %vm26, 0.0
      %48 = vst.msk [vmem:[#allocation3 + $0x28] sm:$0xff] %vm26, 0.0
      %49 = vst.msk [vmem:[#allocation3 + $0x30] sm:$0xff] %vm26, 0.0
      %50 = vst.msk [vmem:[#allocation3 + $0x38] sm:$0xff] %vm26, 0.0
      %51 = vst.msk [vmem:[#allocation3 + $0x40] sm:$0xff] %vm26, 0.0
      %52 = vst.msk [vmem:[#allocation3 + $0x48] sm:$0xff] %vm26, 0.0
      %53 = vst.msk [vmem:[#allocation3 + $0x50] sm:$0xff] %vm26, 0.0
      %54 = vst.msk [vmem:[#allocation3 + $0x58] sm:$0xff] %vm26, 0.0
      %55 = vst.msk [vmem:[#allocation3 + $0x60] sm:$0xff] %vm26, 0.0
      %56 = vst.msk [vmem:[#allocation3 + $0x68] sm:$0xff] %vm26, 0.0
      %57 = vst.msk [vmem:[#allocation3 + $0x70] sm:$0xff] %vm26, 0.0
      %58 = vst.msk [vmem:[#allocation3 + $0x78] sm:$0xff] %vm26, 0.0
      %59 = vst [vmem:[#allocation4] sm:$0xff] 0.0
      %60 = vst [vmem:[#allocation4 + $0x8] sm:$0xff] 0.0
      %61 = vst [vmem:[#allocation4 + $0x10] sm:$0xff] 0.0
      %62 = vst [vmem:[#allocation4 + $0x18] sm:$0xff] 0.0
      %63 = vst [vmem:[#allocation4 + $0x20] sm:$0xff] 0.0
      %64 = vst [vmem:[#allocation4 + $0x28] sm:$0xff] 0.0
      %65 = vst [vmem:[#allocation4 + $0x30] sm:$0xff] 0.0
      %66 = vst [vmem:[#allocation4 + $0x38] sm:$0xff] 0.0
      %67 = vst [vmem:[#allocation4 + $0x40] sm:$0xff] 0.0
      %68 = vst [vmem:[#allocation4 + $0x48] sm:$0xff] 0.0
      %69 = vst [vmem:[#allocation4 + $0x50] sm:$0xff] 0.0
      %70 = vst [vmem:[#allocation4 + $0x58] sm:$0xff] 0.0
      %71 = vst [vmem:[#allocation4 + $0x60] sm:$0xff] 0.0
      %72 = vst [vmem:[#allocation4 + $0x68] sm:$0xff] 0.0
      %73 = vst [vmem:[#allocation4 + $0x70] sm:$0xff] 0.0
      %74 = vst [vmem:[#allocation4 + $0x78] sm:$0xff] 0.0
    $region25: #{tpu_custom_call.1} parent=1 // pred_fallthru
      _
    %v75 = vld [vmem:[%s2] sm:$0xff]
    %v76 = vld [vmem:[%s2 + $0x8] sm:$0xff]
    %v77 = vld [vmem:[%s2 + $0x10] sm:$0xff]
    %v78 = vld [vmem:[%s2 + $0x18] sm:$0xff]
    %v79 = vunpack.c.0.s8 %v75
    %v80 = vunpack.c.1.s8 %v75
    %v81 = vunpack.c.2.s8 %v75
    %v82 = vunpack.c.3.s8 %v75
    %v83 = vunpack.c.0.s8 %v76
    %v84 = vunpack.c.1.s8 %v76
    %v85 = vunpack.c.2.s8 %v76
    %v86 = vunpack.c.3.s8 %v76
    %v87 = vunpack.c.0.s8 %v77
    %v88 = vunpack.c.1.s8 %v77
    %v89 = vunpack.c.2.s8 %v77
    %v90 = vunpack.c.3.s8 %v77
    %v91 = vunpack.c.0.s8 %v78
    %v92 = vunpack.c.1.s8 %v78
    %v93 = vunpack.c.2.s8 %v78
    %v94 = vunpack.c.3.s8 %v78
    %v95 = vcvt.s32.f32 %v79
    %v96 = vcvt.s32.f32 %v80
    %v97 = vcvt.s32.f32 %v81
    %v98 = vcvt.s32.f32 %v82
    %v99 = vcvt.s32.f32 %v83
    %v100 = vcvt.s32.f32 %v84
    %v101 = vcvt.s32.f32 %v85
    %v102 = vcvt.s32.f32 %v86
    %v103 = vcvt.s32.f32 %v87
    %v104 = vcvt.s32.f32 %v88
    %v105 = vcvt.s32.f32 %v89
    %v106 = vcvt.s32.f32 %v90
    %v107 = vcvt.s32.f32 %v91
    %v108 = vcvt.s32.f32 %v92
    %v109 = vcvt.s32.f32 %v93
    %v110 = vcvt.s32.f32 %v94
    %v111 = vld [vmem:[%s1] sm:$0xff]
    %v112 = vld [vmem:[%s1 + $0x8] sm:$0xff]
    %v113 = vld [vmem:[%s1 + $0x10] sm:$0xff]
    %v114 = vld [vmem:[%s1 + $0x18] sm:$0xff]
    %v115 = vld [vmem:[%s1 + $0x20] sm:$0xff]
    %v116 = vld [vmem:[%s1 + $0x28] sm:$0xff]
    %v117 = vld [vmem:[%s1 + $0x30] sm:$0xff]
    %v118 = vld [vmem:[%s1 + $0x38] sm:$0xff]
    %v119 = vld [vmem:[%s1 + $0x40] sm:$0xff]
    %v120 = vld [vmem:[%s1 + $0x48] sm:$0xff]
    %v121 = vld [vmem:[%s1 + $0x50] sm:$0xff]
    %v122 = vld [vmem:[%s1 + $0x58] sm:$0xff]
    %v123 = vld [vmem:[%s1 + $0x60] sm:$0xff]
    %v124 = vld [vmem:[%s1 + $0x68] sm:$0xff]
    %v125 = vld [vmem:[%s1 + $0x70] sm:$0xff]
    %v126 = vld [vmem:[%s1 + $0x78] sm:$0xff]
    %v127 = vld [vmem:[%s0] sm:$0xf]
    %v128 = vld [vmem:[%s3] sm:$0xf]
    %v129 = vld [vmem:[%s3 + $0x4] sm:$0xf]
    %v130 = vld [vmem:[%s3 + $0x8] sm:$0xf]
    %v131 = vld [vmem:[%s3 + $0xc] sm:$0xf]
    %v132 = vld [vmem:[%s3 + $0x10] sm:$0xf]
    %v133 = vld [vmem:[%s3 + $0x14] sm:$0xf]
    %v134 = vld [vmem:[%s3 + $0x18] sm:$0xf]
    %v135 = vld [vmem:[%s3 + $0x1c] sm:$0xf]
    %v136 = vld [vmem:[%s3 + $0x20] sm:$0xf]
    %v137 = vld [vmem:[%s3 + $0x24] sm:$0xf]
    %v138 = vld [vmem:[%s3 + $0x28] sm:$0xf]
    %v139 = vld [vmem:[%s3 + $0x2c] sm:$0xf]
    %v140 = vld [vmem:[%s3 + $0x30] sm:$0xf]
    %v141 = vld [vmem:[%s3 + $0x34] sm:$0xf]
    %v142 = vld [vmem:[%s3 + $0x38] sm:$0xf]
    %v143 = vld [vmem:[%s3 + $0x3c] sm:$0xf]
    %145 = vset.pattern.permute.xlu0 0
    %146 = vperm.xlu0 %145, %v111
    %v147 = vpop.permute.xlu0 %146
    %150 = vset.pattern.permute.xlu0 0
    %151 = vperm.xlu0 %150, %v112
    %v152 = vpop.permute.xlu0 %151
    %155 = vset.pattern.permute.xlu0 0
    %156 = vperm.xlu0 %155, %v113
    %v157 = vpop.permute.xlu0 %156
    %160 = vset.pattern.permute.xlu0 0
    %161 = vperm.xlu0 %160, %v114
    %v162 = vpop.permute.xlu0 %161
    %165 = vset.pattern.permute.xlu0 0
    %166 = vperm.xlu0 %165, %v115
    %v167 = vpop.permute.xlu0 %166
    %170 = vset.pattern.permute.xlu0 0
    %171 = vperm.xlu0 %170, %v116
    %v172 = vpop.permute.xlu0 %171
    %175 = vset.pattern.permute.xlu0 0
    %176 = vperm.xlu0 %175, %v117
    %v177 = vpop.permute.xlu0 %176
    %180 = vset.pattern.permute.xlu0 0
    %181 = vperm.xlu0 %180, %v118
    %v182 = vpop.permute.xlu0 %181
    %185 = vset.pattern.permute.xlu0 0
    %186 = vperm.xlu0 %185, %v119
    %v187 = vpop.permute.xlu0 %186
    %190 = vset.pattern.permute.xlu0 0
    %191 = vperm.xlu0 %190, %v120
    %v192 = vpop.permute.xlu0 %191
    %195 = vset.pattern.permute.xlu0 0
    %196 = vperm.xlu0 %195, %v121
    %v197 = vpop.permute.xlu0 %196
    %200 = vset.pattern.permute.xlu0 0
    %201 = vperm.xlu0 %200, %v122
    %v202 = vpop.permute.xlu0 %201
    %205 = vset.pattern.permute.xlu0 0
    %206 = vperm.xlu0 %205, %v123
    %v207 = vpop.permute.xlu0 %206
    %210 = vset.pattern.permute.xlu0 0
    %211 = vperm.xlu0 %210, %v124
    %v212 = vpop.permute.xlu0 %211
    %215 = vset.pattern.permute.xlu0 0
    %216 = vperm.xlu0 %215, %v125
    %v217 = vpop.permute.xlu0 %216
    %220 = vset.pattern.permute.xlu0 0
    %221 = vperm.xlu0 %220, %v126
    %v222 = vpop.permute.xlu0 %221
    %v224 = vlaneseq
    %v225 = vshrl.u32 %v224, 7
    %v226 = vsub.s32 0, %v225
    %v227 = vrot.slane %v127, %v226
    %v228 = vadd.f32 %v147, %v227
    %v229 = vadd.f32 %v152, %v227
    %v230 = vadd.f32 %v157, %v227
    %v231 = vadd.f32 %v162, %v227
    %v232 = vadd.f32 %v167, %v227
    %v233 = vadd.f32 %v172, %v227
    %v234 = vadd.f32 %v177, %v227
    %v235 = vadd.f32 %v182, %v227
    %v236 = vadd.f32 %v187, %v227
    %v237 = vadd.f32 %v192, %v227
    %v238 = vadd.f32 %v197, %v227
    %v239 = vadd.f32 %v202, %v227
    %v240 = vadd.f32 %v207, %v227
    %v241 = vadd.f32 %v212, %v227
    %v242 = vadd.f32 %v217, %v227
    %v243 = vadd.f32 %v222, %v227
    %vm244 = vcmp.gt.f32.partialorder %v228, 0.0
    %vm245 = vcmp.gt.f32.partialorder %v229, 0.0
    %vm246 = vcmp.gt.f32.partialorder %v230, 0.0
    %vm247 = vcmp.gt.f32.partialorder %v231, 0.0
    %vm248 = vcmp.gt.f32.partialorder %v232, 0.0
    %vm249 = vcmp.gt.f32.partialorder %v233, 0.0
    %vm250 = vcmp.gt.f32.partialorder %v234, 0.0
    %vm251 = vcmp.gt.f32.partialorder %v235, 0.0
    %vm252 = vcmp.gt.f32.partialorder %v236, 0.0
    %vm253 = vcmp.gt.f32.partialorder %v237, 0.0
    %vm254 = vcmp.gt.f32.partialorder %v238, 0.0
    %vm255 = vcmp.gt.f32.partialorder %v239, 0.0
    %vm256 = vcmp.gt.f32.partialorder %v240, 0.0
    %vm257 = vcmp.gt.f32.partialorder %v241, 0.0
    %vm258 = vcmp.gt.f32.partialorder %v242, 0.0
    %vm259 = vcmp.gt.f32.partialorder %v243, 0.0
    %v260 = vmul.f32 %v228, 0.2
    %v261 = vmul.f32 %v229, 0.2
    %v262 = vmul.f32 %v230, 0.2
    %v263 = vmul.f32 %v231, 0.2
    %v264 = vmul.f32 %v232, 0.2
    %v265 = vmul.f32 %v233, 0.2
    %v266 = vmul.f32 %v234, 0.2
    %v267 = vmul.f32 %v235, 0.2
    %v268 = vmul.f32 %v236, 0.2
    %v269 = vmul.f32 %v237, 0.2
    %v270 = vmul.f32 %v238, 0.2
    %v271 = vmul.f32 %v239, 0.2
    %v272 = vmul.f32 %v240, 0.2
    %v273 = vmul.f32 %v241, 0.2
    %v274 = vmul.f32 %v242, 0.2
    %v275 = vmul.f32 %v243, 0.2
    %v276 = vsel %vm244, %v228, %v260
    %v277 = vsel %vm245, %v229, %v261
    %v278 = vsel %vm246, %v230, %v262
    %v279 = vsel %vm247, %v231, %v263
    %v280 = vsel %vm248, %v232, %v264
    %v281 = vsel %vm249, %v233, %v265
    %v282 = vsel %vm250, %v234, %v266
    %v283 = vsel %vm251, %v235, %v267
    %v284 = vsel %vm252, %v236, %v268
    %v285 = vsel %vm253, %v237, %v269
    %v286 = vsel %vm254, %v238, %v270
    %v287 = vsel %vm255, %v239, %v271
    %v288 = vsel %vm256, %v240, %v272
    %v289 = vsel %vm257, %v241, %v273
    %v290 = vsel %vm258, %v242, %v274
    %v291 = vsel %vm259, %v243, %v275
    %vm292 = vcmp.gt.f32.partialorder %v95, 0.0
    %vm293 = vcmp.gt.f32.partialorder %v96, 0.0
    %vm294 = vcmp.gt.f32.partialorder %v97, 0.0
    %vm295 = vcmp.gt.f32.partialorder %v98, 0.0
    %vm296 = vcmp.gt.f32.partialorder %v99, 0.0
    %vm297 = vcmp.gt.f32.partialorder %v100, 0.0
    %vm298 = vcmp.gt.f32.partialorder %v101, 0.0
    %vm299 = vcmp.gt.f32.partialorder %v102, 0.0
    %vm300 = vcmp.gt.f32.partialorder %v103, 0.0
    %vm301 = vcmp.gt.f32.partialorder %v104, 0.0
    %vm302 = vcmp.gt.f32.partialorder %v105, 0.0
    %vm303 = vcmp.gt.f32.partialorder %v106, 0.0
    %vm304 = vcmp.gt.f32.partialorder %v107, 0.0
    %vm305 = vcmp.gt.f32.partialorder %v108, 0.0
    %vm306 = vcmp.gt.f32.partialorder %v109, 0.0
    %vm307 = vcmp.gt.f32.partialorder %v110, 0.0
    %v308 = vsel %vm292, %v276, -1e+30
    %v309 = vsel %vm293, %v277, -1e+30
    %v310 = vsel %vm294, %v278, -1e+30
    %v311 = vsel %vm295, %v279, -1e+30
    %v312 = vsel %vm296, %v280, -1e+30
    %v313 = vsel %vm297, %v281, -1e+30
    %v314 = vsel %vm298, %v282, -1e+30
    %v315 = vsel %vm299, %v283, -1e+30
    %v316 = vsel %vm300, %v284, -1e+30
    %v317 = vsel %vm301, %v285, -1e+30
    %v318 = vsel %vm302, %v286, -1e+30
    %v319 = vsel %vm303, %v287, -1e+30
    %v320 = vsel %vm304, %v288, -1e+30
    %v321 = vsel %vm305, %v289, -1e+30
    %v322 = vsel %vm306, %v290, -1e+30
    %v323 = vsel %vm307, %v291, -1e+30
    %v324 = vld [vmem:[#allocation2] sm:$0xff]
    %v325 = vld [vmem:[#allocation2 + $0x8] sm:$0xff]
    %v326 = vld [vmem:[#allocation2 + $0x10] sm:$0xff]
    %v327 = vld [vmem:[#allocation2 + $0x18] sm:$0xff]
    %v328 = vld [vmem:[#allocation2 + $0x20] sm:$0xff]
    %v329 = vld [vmem:[#allocation2 + $0x28] sm:$0xff]
    %v330 = vld [vmem:[#allocation2 + $0x30] sm:$0xff]
    %v331 = vld [vmem:[#allocation2 + $0x38] sm:$0xff]
    %v332 = vld [vmem:[#allocation2 + $0x40] sm:$0xff]
    %v333 = vld [vmem:[#allocation2 + $0x48] sm:$0xff]
    %v334 = vld [vmem:[#allocation2 + $0x50] sm:$0xff]
    %v335 = vld [vmem:[#allocation2 + $0x58] sm:$0xff]
    %v336 = vld [vmem:[#allocation2 + $0x60] sm:$0xff]
    %v337 = vld [vmem:[#allocation2 + $0x68] sm:$0xff]
    %v338 = vld [vmem:[#allocation2 + $0x70] sm:$0xff]
    %v339 = vld [vmem:[#allocation2 + $0x78] sm:$0xff]
    %340 = vmax.xlane.f32.xlu0 %v308
    %v341 = vpop.xlane.xlu0 %340
    %342 = vmax.xlane.f32.xlu0 %v309
    %v343 = vpop.xlane.xlu0 %342
    %344 = vmax.xlane.f32.xlu0 %v310
    %v345 = vpop.xlane.xlu0 %344
    %346 = vmax.xlane.f32.xlu0 %v311
    %v347 = vpop.xlane.xlu0 %346
    %348 = vmax.xlane.f32.xlu0 %v312
    %v349 = vpop.xlane.xlu0 %348
    %350 = vmax.xlane.f32.xlu0 %v313
    %v351 = vpop.xlane.xlu0 %350
    %352 = vmax.xlane.f32.xlu0 %v314
    %v353 = vpop.xlane.xlu0 %352
    %354 = vmax.xlane.f32.xlu0 %v315
    %v355 = vpop.xlane.xlu0 %354
    %356 = vmax.xlane.f32.xlu0 %v316
    %v357 = vpop.xlane.xlu0 %356
    %358 = vmax.xlane.f32.xlu0 %v317
    %v359 = vpop.xlane.xlu0 %358
    %360 = vmax.xlane.f32.xlu0 %v318
    %v361 = vpop.xlane.xlu0 %360
    %362 = vmax.xlane.f32.xlu0 %v319
    %v363 = vpop.xlane.xlu0 %362
    %364 = vmax.xlane.f32.xlu0 %v320
    %v365 = vpop.xlane.xlu0 %364
    %366 = vmax.xlane.f32.xlu0 %v321
    %v367 = vpop.xlane.xlu0 %366
    %368 = vmax.xlane.f32.xlu0 %v322
    %v369 = vpop.xlane.xlu0 %368
    %370 = vmax.xlane.f32.xlu0 %v323
    %v371 = vpop.xlane.xlu0 %370
    %v372 = vmax.f32 %v324, %v341
    %v373 = vmax.f32 %v325, %v343
    %v374 = vmax.f32 %v326, %v345
    %v375 = vmax.f32 %v327, %v347
    %v376 = vmax.f32 %v328, %v349
    %v377 = vmax.f32 %v329, %v351
    %v378 = vmax.f32 %v330, %v353
    %v379 = vmax.f32 %v331, %v355
    %v380 = vmax.f32 %v332, %v357
    %v381 = vmax.f32 %v333, %v359
    %v382 = vmax.f32 %v334, %v361
    %v383 = vmax.f32 %v335, %v363
    %v384 = vmax.f32 %v336, %v365
    %v385 = vmax.f32 %v337, %v367
    %v386 = vmax.f32 %v338, %v369
    %v387 = vmax.f32 %v339, %v371
    %v388 = vsub.f32 %v324, %v372
    %v389 = vsub.f32 %v325, %v373
    %v390 = vsub.f32 %v326, %v374
    %v391 = vsub.f32 %v327, %v375
    %v392 = vsub.f32 %v328, %v376
    %v393 = vsub.f32 %v329, %v377
    %v394 = vsub.f32 %v330, %v378
    %v395 = vsub.f32 %v331, %v379
    %v396 = vsub.f32 %v332, %v380
    %v397 = vsub.f32 %v333, %v381
    %v398 = vsub.f32 %v334, %v382
    %v399 = vsub.f32 %v335, %v383
    %v400 = vsub.f32 %v336, %v384
    %v401 = vsub.f32 %v337, %v385
    %v402 = vsub.f32 %v338, %v386
    %v403 = vsub.f32 %v339, %v387
    %v404 = vmul.f32 %v388, 1.442695
    %v405 = vpow.pop %v404
    %v406 = vmul.f32 %v389, 1.442695
    %v407 = vpow.pop %v406
    %v408 = vmul.f32 %v390, 1.442695
    %v409 = vpow.pop %v408
    %v410 = vmul.f32 %v391, 1.442695
    %v411 = vpow.pop %v410
    %v412 = vmul.f32 %v392, 1.442695
    %v413 = vpow.pop %v412
    %v414 = vmul.f32 %v393, 1.442695
    %v415 = vpow.pop %v414
    %v416 = vmul.f32 %v394, 1.442695
    %v417 = vpow.pop %v416
    %v418 = vmul.f32 %v395, 1.442695
    %v419 = vpow.pop %v418
    %v420 = vmul.f32 %v396, 1.442695
    %v421 = vpow.pop %v420
    %v422 = vmul.f32 %v397, 1.442695
    %v423 = vpow.pop %v422
    %v424 = vmul.f32 %v398, 1.442695
    %v425 = vpow.pop %v424
    %v426 = vmul.f32 %v399, 1.442695
    %v427 = vpow.pop %v426
    %v428 = vmul.f32 %v400, 1.442695
    %v429 = vpow.pop %v428
    %v430 = vmul.f32 %v401, 1.442695
    %v431 = vpow.pop %v430
    %v432 = vmul.f32 %v402, 1.442695
    %v433 = vpow.pop %v432
    %v434 = vmul.f32 %v403, 1.442695
    %v435 = vpow.pop %v434
    %437 = vset.pattern.permute.xlu0 0
    %438 = vperm.xlu0 %437, %v372
    %v439 = vpop.permute.xlu0 %438
    %442 = vset.pattern.permute.xlu0 0
    %443 = vperm.xlu0 %442, %v373
    %v444 = vpop.permute.xlu0 %443
    %447 = vset.pattern.permute.xlu0 0
    %448 = vperm.xlu0 %447, %v374
    %v449 = vpop.permute.xlu0 %448
    %452 = vset.pattern.permute.xlu0 0
    %453 = vperm.xlu0 %452, %v375
    %v454 = vpop.permute.xlu0 %453
    %457 = vset.pattern.permute.xlu0 0
    %458 = vperm.xlu0 %457, %v376
    %v459 = vpop.permute.xlu0 %458
    %462 = vset.pattern.permute.xlu0 0
    %463 = vperm.xlu0 %462, %v377
    %v464 = vpop.permute.xlu0 %463
    %467 = vset.pattern.permute.xlu0 0
    %468 = vperm.xlu0 %467, %v378
    %v469 = vpop.permute.xlu0 %468
    %472 = vset.pattern.permute.xlu0 0
    %473 = vperm.xlu0 %472, %v379
    %v474 = vpop.permute.xlu0 %473
    %477 = vset.pattern.permute.xlu0 0
    %478 = vperm.xlu0 %477, %v380
    %v479 = vpop.permute.xlu0 %478
    %482 = vset.pattern.permute.xlu0 0
    %483 = vperm.xlu0 %482, %v381
    %v484 = vpop.permute.xlu0 %483
    %487 = vset.pattern.permute.xlu0 0
    %488 = vperm.xlu0 %487, %v382
    %v489 = vpop.permute.xlu0 %488
    %492 = vset.pattern.permute.xlu0 0
    %493 = vperm.xlu0 %492, %v383
    %v494 = vpop.permute.xlu0 %493
    %497 = vset.pattern.permute.xlu0 0
    %498 = vperm.xlu0 %497, %v384
    %v499 = vpop.permute.xlu0 %498
    %502 = vset.pattern.permute.xlu0 0
    %503 = vperm.xlu0 %502, %v385
    %v504 = vpop.permute.xlu0 %503
    %507 = vset.pattern.permute.xlu0 0
    %508 = vperm.xlu0 %507, %v386
    %v509 = vpop.permute.xlu0 %508
    %512 = vset.pattern.permute.xlu0 0
    %513 = vperm.xlu0 %512, %v387
    %v514 = vpop.permute.xlu0 %513
    %v516 = vsub.f32 %v308, %v439
    %v517 = vsub.f32 %v309, %v444
    %v518 = vsub.f32 %v310, %v449
    %v519 = vsub.f32 %v311, %v454
    %v520 = vsub.f32 %v312, %v459
    %v521 = vsub.f32 %v313, %v464
    %v522 = vsub.f32 %v314, %v469
    %v523 = vsub.f32 %v315, %v474
    %v524 = vsub.f32 %v316, %v479
    %v525 = vsub.f32 %v317, %v484
    %v526 = vsub.f32 %v318, %v489
    %v527 = vsub.f32 %v319, %v494
    %v528 = vsub.f32 %v320, %v499
    %v529 = vsub.f32 %v321, %v504
    %v530 = vsub.f32 %v322, %v509
    %v531 = vsub.f32 %v323, %v514
    %v532 = vmul.f32 %v516, 1.442695
    %v533 = vpow.pop %v532
    %v534 = vmul.f32 %v517, 1.442695
    %v535 = vpow.pop %v534
    %v536 = vmul.f32 %v518, 1.442695
    %v537 = vpow.pop %v536
    %v538 = vmul.f32 %v519, 1.442695
    %v539 = vpow.pop %v538
    %v540 = vmul.f32 %v520, 1.442695
    %v541 = vpow.pop %v540
    %v542 = vmul.f32 %v521, 1.442695
    %v543 = vpow.pop %v542
    %v544 = vmul.f32 %v522, 1.442695
    %v545 = vpow.pop %v544
    %v546 = vmul.f32 %v523, 1.442695
    %v547 = vpow.pop %v546
    %v548 = vmul.f32 %v524, 1.442695
    %v549 = vpow.pop %v548
    %v550 = vmul.f32 %v525, 1.442695
    %v551 = vpow.pop %v550
    %v552 = vmul.f32 %v526, 1.442695
    %v553 = vpow.pop %v552
    %v554 = vmul.f32 %v527, 1.442695
    %v555 = vpow.pop %v554
    %v556 = vmul.f32 %v528, 1.442695
    %v557 = vpow.pop %v556
    %v558 = vmul.f32 %v529, 1.442695
    %v559 = vpow.pop %v558
    %v560 = vmul.f32 %v530, 1.442695
    %v561 = vpow.pop %v560
    %v562 = vmul.f32 %v531, 1.442695
    %v563 = vpow.pop %v562
    %v564 = vmul.f32 %v533, %v95
    %v565 = vmul.f32 %v535, %v96
    %v566 = vmul.f32 %v537, %v97
    %v567 = vmul.f32 %v539, %v98
    %v568 = vmul.f32 %v541, %v99
    %v569 = vmul.f32 %v543, %v100
    %v570 = vmul.f32 %v545, %v101
    %v571 = vmul.f32 %v547, %v102
    %v572 = vmul.f32 %v549, %v103
    %v573 = vmul.f32 %v551, %v104
    %v574 = vmul.f32 %v553, %v105
    %v575 = vmul.f32 %v555, %v106
    %v576 = vmul.f32 %v557, %v107
    %v577 = vmul.f32 %v559, %v108
    %v578 = vmul.f32 %v561, %v109
    %v579 = vmul.f32 %v563, %v110
    %v580 = vld [vmem:[#allocation3] sm:$0xff]
    %v581 = vld [vmem:[#allocation3 + $0x8] sm:$0xff]
    %v582 = vld [vmem:[#allocation3 + $0x10] sm:$0xff]
    %v583 = vld [vmem:[#allocation3 + $0x18] sm:$0xff]
    %v584 = vld [vmem:[#allocation3 + $0x20] sm:$0xff]
    %v585 = vld [vmem:[#allocation3 + $0x28] sm:$0xff]
    %v586 = vld [vmem:[#allocation3 + $0x30] sm:$0xff]
    %v587 = vld [vmem:[#allocation3 + $0x38] sm:$0xff]
    %v588 = vld [vmem:[#allocation3 + $0x40] sm:$0xff]
    %v589 = vld [vmem:[#allocation3 + $0x48] sm:$0xff]
    %v590 = vld [vmem:[#allocation3 + $0x50] sm:$0xff]
    %v591 = vld [vmem:[#allocation3 + $0x58] sm:$0xff]
    %v592 = vld [vmem:[#allocation3 + $0x60] sm:$0xff]
    %v593 = vld [vmem:[#allocation3 + $0x68] sm:$0xff]
    %v594 = vld [vmem:[#allocation3 + $0x70] sm:$0xff]
    %v595 = vld [vmem:[#allocation3 + $0x78] sm:$0xff]
    %v596 = vmul.f32 %v405, %v580
    %v597 = vmul.f32 %v407, %v581
    %v598 = vmul.f32 %v409, %v582
    %v599 = vmul.f32 %v411, %v583
    %v600 = vmul.f32 %v413, %v584
    %v601 = vmul.f32 %v415, %v585
    %v602 = vmul.f32 %v417, %v586
    %v603 = vmul.f32 %v419, %v587
    %v604 = vmul.f32 %v421, %v588
    %v605 = vmul.f32 %v423, %v589
    %v606 = vmul.f32 %v425, %v590
    %v607 = vmul.f32 %v427, %v591
    %v608 = vmul.f32 %v429, %v592
    %v609 = vmul.f32 %v431, %v593
    %v610 = vmul.f32 %v433, %v594
    %v611 = vmul.f32 %v435, %v595
    %612 = vadd.xlane.f32.xlu0 %v564
    %v613 = vpop.xlane.xlu0 %612
    %614 = vadd.xlane.f32.xlu0 %v565
    %v615 = vpop.xlane.xlu0 %614
    %616 = vadd.xlane.f32.xlu0 %v566
    %v617 = vpop.xlane.xlu0 %616
    %618 = vadd.xlane.f32.xlu0 %v567
    %v619 = vpop.xlane.xlu0 %618
    %620 = vadd.xlane.f32.xlu0 %v568
    %v621 = vpop.xlane.xlu0 %620
    %622 = vadd.xlane.f32.xlu0 %v569
    %v623 = vpop.xlane.xlu0 %622
    %624 = vadd.xlane.f32.xlu0 %v570
    %v625 = vpop.xlane.xlu0 %624
    %626 = vadd.xlane.f32.xlu0 %v571
    %v627 = vpop.xlane.xlu0 %626
    %628 = vadd.xlane.f32.xlu0 %v572
    %v629 = vpop.xlane.xlu0 %628
    %630 = vadd.xlane.f32.xlu0 %v573
    %v631 = vpop.xlane.xlu0 %630
    %632 = vadd.xlane.f32.xlu0 %v574
    %v633 = vpop.xlane.xlu0 %632
    %634 = vadd.xlane.f32.xlu0 %v575
    %v635 = vpop.xlane.xlu0 %634
    %636 = vadd.xlane.f32.xlu0 %v576
    %v637 = vpop.xlane.xlu0 %636
    %638 = vadd.xlane.f32.xlu0 %v577
    %v639 = vpop.xlane.xlu0 %638
    %640 = vadd.xlane.f32.xlu0 %v578
    %v641 = vpop.xlane.xlu0 %640
    %642 = vadd.xlane.f32.xlu0 %v579
    %v643 = vpop.xlane.xlu0 %642
    %v644 = vadd.f32 %v596, %v613
    %v645 = vadd.f32 %v597, %v615
    %v646 = vadd.f32 %v598, %v617
    %v647 = vadd.f32 %v599, %v619
    %v648 = vadd.f32 %v600, %v621
    %v649 = vadd.f32 %v601, %v623
    %v650 = vadd.f32 %v602, %v625
    %v651 = vadd.f32 %v603, %v627
    %v652 = vadd.f32 %v604, %v629
    %v653 = vadd.f32 %v605, %v631
    %v654 = vadd.f32 %v606, %v633
    %v655 = vadd.f32 %v607, %v635
    %v656 = vadd.f32 %v608, %v637
    %v657 = vadd.f32 %v609, %v639
    %v658 = vadd.f32 %v610, %v641
    %v659 = vadd.f32 %v611, %v643
    %v660 = vpack.c.bf16 %v565, %v564
    %v661 = vpack.c.bf16 %v567, %v566
    %v662 = vpack.c.bf16 %v569, %v568
    %v663 = vpack.c.bf16 %v571, %v570
    %v664 = vpack.c.bf16 %v573, %v572
    %v665 = vpack.c.bf16 %v575, %v574
    %v666 = vpack.c.bf16 %v577, %v576
    %v667 = vpack.c.bf16 %v579, %v578
    %v684 = vunpack.c.l.b16 %v128
    %v685 = vunpack.c.l.b16 %v129
    %v686 = vunpack.c.l.b16 %v130
    %v687 = vunpack.c.l.b16 %v131
    %v688 = vunpack.c.l.b16 %v132
    %v689 = vunpack.c.l.b16 %v133
    %v690 = vunpack.c.l.b16 %v134
    %v691 = vunpack.c.l.b16 %v135
    %v692 = vunpack.c.l.b16 %v136
    %v693 = vunpack.c.l.b16 %v137
    %v694 = vunpack.c.l.b16 %v138
    %v695 = vunpack.c.l.b16 %v139
    %v696 = vunpack.c.l.b16 %v140
    %v697 = vunpack.c.l.b16 %v141
    %v698 = vunpack.c.l.b16 %v142
    %v699 = vunpack.c.l.b16 %v143
    %v700 = vpack.c.b16 %v685, %v684
    %v701 = vpack.c.b16 %v687, %v686
    %v702 = vpack.c.b16 %v689, %v688
    %v703 = vpack.c.b16 %v691, %v690
    %v704 = vpack.c.b16 %v693, %v692
    %v705 = vpack.c.b16 %v695, %v694
    %v706 = vpack.c.b16 %v697, %v696
    %v707 = vpack.c.b16 %v699, %v698
    %716 = vmatprep.subr.bf16.mxu0 0
    %717 = vmatpush1.bf16.msra.mxu0 %v700
    %718 = vmatprep.subr.bf16.mxu0 0
    %719 = vmatpush1.bf16.msra.mxu0 %v701
    %720 = vmatprep.subr.bf16.mxu0 0
    %721 = vmatpush1.bf16.msra.mxu0 %v702
    %722 = vmatprep.subr.bf16.mxu0 0
    %723 = vmatpush1.bf16.msra.mxu0 %v703
    %724 = vmatprep.subr.bf16.mxu0 0
    %725 = vmatpush1.bf16.msra.mxu0 %v704
    %726 = vmatprep.subr.bf16.mxu0 0
    %727 = vmatpush1.bf16.msra.mxu0 %v705
    %728 = vmatprep.subr.bf16.mxu0 0
    %729 = vmatpush1.bf16.msra.mxu0 %v706
    %730 = vmatprep.subr.bf16.mxu0 0
    %731 = vmatpush1.bf16.msra.mxu0 %v707
    %732 = vmatprep.subr.bf16.mxu0 0
    %733 = vmatpush1.bf16.msra.mxu0 0
    %734 = vmatprep.subr.bf16.mxu0 0
    %735 = vmatpush1.bf16.msra.mxu0 0
    %736 = vmatprep.subr.bf16.mxu0 0
    %737 = vmatpush1.bf16.msra.mxu0 0
    %738 = vmatprep.subr.bf16.mxu0 0
    %739 = vmatpush1.bf16.msra.mxu0 0
    %740 = vmatprep.subr.bf16.mxu0 0
    %741 = vmatpush1.bf16.msra.mxu0 0
    %742 = vmatprep.subr.bf16.mxu0 0
    %743 = vmatpush1.bf16.msra.mxu0 0
    %744 = vmatprep.subr.bf16.mxu0 0
    %745 = vmatpush1.bf16.msra.mxu0 0
    %746 = vmatprep.subr.bf16.mxu0 0
    %747 = vmatpush1.bf16.msra.mxu0 0
    %748 = vmatprep.mubr.bf16.mxu0 0
    %749 = vmatmul.mubr.bf16.gmra.mrb[0].mxu0 %v660
    %v750 = vpop.f32.mrb[0].mxu0
    %v751 = vadd.f32 0.0, %v750
    %v752 = vpop.f32.mrb[0].mxu0
    %v753 = vpop.f32.mrb[0].mxu0
    %v754 = vadd.f32 0.0, %v753
    %v755 = vpop.f32.mrb[0].mxu0
    %756 = vmatprep.mubr.bf16.mxu0 0
    %757 = vmatmul.mubr.bf16.gmra.mrb[0].mxu0 %v661
    %v758 = vpop.f32.mrb[0].mxu0
    %v759 = vadd.f32 0.0, %v758
    %v760 = vpop.f32.mrb[0].mxu0
    %v761 = vpop.f32.mrb[0].mxu0
    %v762 = vadd.f32 0.0, %v761
    %v763 = vpop.f32.mrb[0].mxu0
    %764 = vmatprep.mubr.bf16.mxu0 0
    %765 = vmatmul.mubr.bf16.gmra.mrb[0].mxu0 %v662
    %v766 = vpop.f32.mrb[0].mxu0
    %v767 = vadd.f32 0.0, %v766
    %v768 = vpop.f32.mrb[0].mxu0
    %v769 = vpop.f32.mrb[0].mxu0
    %v770 = vadd.f32 0.0, %v769
    %v771 = vpop.f32.mrb[0].mxu0
    %772 = vmatprep.mubr.bf16.mxu0 0
    %773 = vmatmul.mubr.bf16.gmra.mrb[0].mxu0 %v663
    %v774 = vpop.f32.mrb[0].mxu0
    %v775 = vadd.f32 0.0, %v774
    %v776 = vpop.f32.mrb[0].mxu0
    %v777 = vpop.f32.mrb[0].mxu0
    %v778 = vadd.f32 0.0, %v777
    %v779 = vpop.f32.mrb[0].mxu0
    %780 = vmatprep.mubr.bf16.mxu0 0
    %781 = vmatmul.mubr.bf16.gmra.mrb[0].mxu0 %v664
    %v782 = vpop.f32.mrb[0].mxu0
    %v783 = vadd.f32 0.0, %v782
    %v784 = vpop.f32.mrb[0].mxu0
    %v785 = vpop.f32.mrb[0].mxu0
    %v786 = vadd.f32 0.0, %v785
    %v787 = vpop.f32.mrb[0].mxu0
    %788 = vmatprep.mubr.bf16.mxu0 0
    %789 = vmatmul.mubr.bf16.gmra.mrb[0].mxu0 %v665
    %v790 = vpop.f32.mrb[0].mxu0
    %v791 = vadd.f32 0.0, %v790
    %v792 = vpop.f32.mrb[0].mxu0
    %v793 = vpop.f32.mrb[0].mxu0
    %v794 = vadd.f32 0.0, %v793
    %v795 = vpop.f32.mrb[0].mxu0
    %796 = vmatprep.mubr.bf16.mxu0 0
    %797 = vmatmul.mubr.bf16.gmra.mrb[0].mxu0 %v666
    %v798 = vpop.f32.mrb[0].mxu0
    %v799 = vadd.f32 0.0, %v798
    %v800 = vpop.f32.mrb[0].mxu0
    %v801 = vpop.f32.mrb[0].mxu0
    %v802 = vadd.f32 0.0, %v801
    %v803 = vpop.f32.mrb[0].mxu0
    %804 = vmatprep.mubr.bf16.mxu0 0
    %805 = vmatmul.mubr.bf16.gmra.mrb[0].mxu0 %v667
    %v806 = vpop.f32.mrb[0].mxu0
    %v807 = vadd.f32 0.0, %v806
    %v808 = vpop.f32.mrb[0].mxu0
    %v809 = vpop.f32.mrb[0].mxu0
    %v810 = vadd.f32 0.0, %v809
    %v811 = vpop.f32.mrb[0].mxu0
    %812 = vdwg.mxu0
    %v813 = vld [vmem:[#allocation4] sm:$0xff]
    %v814 = vld [vmem:[#allocation4 + $0x8] sm:$0xff]
    %v815 = vld [vmem:[#allocation4 + $0x10] sm:$0xff]
    %v816 = vld [vmem:[#allocation4 + $0x18] sm:$0xff]
    %v817 = vld [vmem:[#allocation4 + $0x20] sm:$0xff]
    %v818 = vld [vmem:[#allocation4 + $0x28] sm:$0xff]
    %v819 = vld [vmem:[#allocation4 + $0x30] sm:$0xff]
    %v820 = vld [vmem:[#allocation4 + $0x38] sm:$0xff]
    %v821 = vld [vmem:[#allocation4 + $0x40] sm:$0xff]
    %v822 = vld [vmem:[#allocation4 + $0x48] sm:$0xff]
    %v823 = vld [vmem:[#allocation4 + $0x50] sm:$0xff]
    %v824 = vld [vmem:[#allocation4 + $0x58] sm:$0xff]
    %v825 = vld [vmem:[#allocation4 + $0x60] sm:$0xff]
    %v826 = vld [vmem:[#allocation4 + $0x68] sm:$0xff]
    %v827 = vld [vmem:[#allocation4 + $0x70] sm:$0xff]
    %v828 = vld [vmem:[#allocation4 + $0x78] sm:$0xff]
    %830 = vset.pattern.permute.xlu0 0
    %831 = vperm.xlu0 %830, %v405
    %v832 = vpop.permute.xlu0 %831
    %835 = vset.pattern.permute.xlu0 0
    %836 = vperm.xlu0 %835, %v407
    %v837 = vpop.permute.xlu0 %836
    %840 = vset.pattern.permute.xlu0 0
    %841 = vperm.xlu0 %840, %v409
    %v842 = vpop.permute.xlu0 %841
    %845 = vset.pattern.permute.xlu0 0
    %846 = vperm.xlu0 %845, %v411
    %v847 = vpop.permute.xlu0 %846
    %850 = vset.pattern.permute.xlu0 0
    %851 = vperm.xlu0 %850, %v413
    %v852 = vpop.permute.xlu0 %851
    %855 = vset.pattern.permute.xlu0 0
    %856 = vperm.xlu0 %855, %v415
    %v857 = vpop.permute.xlu0 %856
    %860 = vset.pattern.permute.xlu0 0
    %861 = vperm.xlu0 %860, %v417
    %v862 = vpop.permute.xlu0 %861
    %865 = vset.pattern.permute.xlu0 0
    %866 = vperm.xlu0 %865, %v419
    %v867 = vpop.permute.xlu0 %866
    %870 = vset.pattern.permute.xlu0 0
    %871 = vperm.xlu0 %870, %v421
    %v872 = vpop.permute.xlu0 %871
    %875 = vset.pattern.permute.xlu0 0
    %876 = vperm.xlu0 %875, %v423
    %v877 = vpop.permute.xlu0 %876
    %880 = vset.pattern.permute.xlu0 0
    %881 = vperm.xlu0 %880, %v425
    %v882 = vpop.permute.xlu0 %881
    %885 = vset.pattern.permute.xlu0 0
    %886 = vperm.xlu0 %885, %v427
    %v887 = vpop.permute.xlu0 %886
    %890 = vset.pattern.permute.xlu0 0
    %891 = vperm.xlu0 %890, %v429
    %v892 = vpop.permute.xlu0 %891
    %895 = vset.pattern.permute.xlu0 0
    %896 = vperm.xlu0 %895, %v431
    %v897 = vpop.permute.xlu0 %896
    %900 = vset.pattern.permute.xlu0 0
    %901 = vperm.xlu0 %900, %v433
    %v902 = vpop.permute.xlu0 %901
    %905 = vset.pattern.permute.xlu0 0
    %906 = vperm.xlu0 %905, %v435
    %v907 = vpop.permute.xlu0 %906
    %v909 = vmul.f32 %v832, %v813
    %v910 = vmul.f32 %v837, %v814
    %v911 = vmul.f32 %v842, %v815
    %v912 = vmul.f32 %v847, %v816
    %v913 = vmul.f32 %v852, %v817
    %v914 = vmul.f32 %v857, %v818
    %v915 = vmul.f32 %v862, %v819
    %v916 = vmul.f32 %v867, %v820
    %v917 = vmul.f32 %v872, %v821
    %v918 = vmul.f32 %v877, %v822
    %v919 = vmul.f32 %v882, %v823
    %v920 = vmul.f32 %v887, %v824
    %v921 = vmul.f32 %v892, %v825
    %v922 = vmul.f32 %v897, %v826
    %v923 = vmul.f32 %v902, %v827
    %v924 = vmul.f32 %v907, %v828
    %v925 = vadd.f32 %v909, %v751
    %v926 = vadd.f32 %v910, %v754
    %v927 = vadd.f32 %v911, %v759
    %v928 = vadd.f32 %v912, %v762
    %v929 = vadd.f32 %v913, %v767
    %v930 = vadd.f32 %v914, %v770
    %v931 = vadd.f32 %v915, %v775
    %v932 = vadd.f32 %v916, %v778
    %v933 = vadd.f32 %v917, %v783
    %v934 = vadd.f32 %v918, %v786
    %v935 = vadd.f32 %v919, %v791
    %v936 = vadd.f32 %v920, %v794
    %v937 = vadd.f32 %v921, %v799
    %v938 = vadd.f32 %v922, %v802
    %v939 = vadd.f32 %v923, %v807
    %v940 = vadd.f32 %v924, %v810
    %941 = vset.pattern.permute.xlu0 1
    %942 = vperm.xlu0 %941, %v111
    %v943 = vpop.permute.xlu0 %942
    %945 = vset.pattern.permute.xlu0 1
    %946 = vperm.xlu0 %945, %v112
    %v947 = vpop.permute.xlu0 %946
    %949 = vset.pattern.permute.xlu0 1
    %950 = vperm.xlu0 %949, %v113
    %v951 = vpop.permute.xlu0 %950
    %953 = vset.pattern.permute.xlu0 1
    %954 = vperm.xlu0 %953, %v114
    %v955 = vpop.permute.xlu0 %954
    %957 = vset.pattern.permute.xlu0 1
    %958 = vperm.xlu0 %957, %v115
    %v959 = vpop.permute.xlu0 %958
    %961 = vset.pattern.permute.xlu0 1
    %962 = vperm.xlu0 %961, %v116
    %v963 = vpop.permute.xlu0 %962
    %965 = vset.pattern.permute.xlu0 1
    %966 = vperm.xlu0 %965, %v117
    %v967 = vpop.permute.xlu0 %966
    %969 = vset.pattern.permute.xlu0 1
    %970 = vperm.xlu0 %969, %v118
    %v971 = vpop.permute.xlu0 %970
    %973 = vset.pattern.permute.xlu0 1
    %974 = vperm.xlu0 %973, %v119
    %v975 = vpop.permute.xlu0 %974
    %977 = vset.pattern.permute.xlu0 1
    %978 = vperm.xlu0 %977, %v120
    %v979 = vpop.permute.xlu0 %978
    %981 = vset.pattern.permute.xlu0 1
    %982 = vperm.xlu0 %981, %v121
    %v983 = vpop.permute.xlu0 %982
    %985 = vset.pattern.permute.xlu0 1
    %986 = vperm.xlu0 %985, %v122
    %v987 = vpop.permute.xlu0 %986
    %989 = vset.pattern.permute.xlu0 1
    %990 = vperm.xlu0 %989, %v123
    %v991 = vpop.permute.xlu0 %990
    %993 = vset.pattern.permute.xlu0 1
    %994 = vperm.xlu0 %993, %v124
    %v995 = vpop.permute.xlu0 %994
    %997 = vset.pattern.permute.xlu0 1
    %998 = vperm.xlu0 %997, %v125
    %v999 = vpop.permute.xlu0 %998
    %1001 = vset.pattern.permute.xlu0 1
    %1002 = vperm.xlu0 %1001, %v126
    %v1003 = vpop.permute.xlu0 %1002
    %v1005 = vlaneseq
    %v1006 = vshrl.u32 %v1005, 7
    %v1007 = vsub.s32 1, %v1006
    %v1008 = vrot.slane %v127, %v1007
    %v1009 = vadd.f32 %v943, %v1008
    %v1010 = vadd.f32 %v947, %v1008
    %v1011 = vadd.f32 %v951, %v1008
    %v1012 = vadd.f32 %v955, %v1008
    %v1013 = vadd.f32 %v959, %v1008
    %v1014 = vadd.f32 %v963, %v1008
    %v1015 = vadd.f32 %v967, %v1008
    %v1016 = vadd.f32 %v971, %v1008
    %v1017 = vadd.f32 %v975, %v1008
    %v1018 = vadd.f32 %v979, %v1008
    %v1019 = vadd.f32 %v983, %v1008
    %v1020 = vadd.f32 %v987, %v1008
    %v1021 = vadd.f32 %v991, %v1008
    %v1022 = vadd.f32 %v995, %v1008
    %v1023 = vadd.f32 %v999, %v1008
    %v1024 = vadd.f32 %v1003, %v1008
    %vm1025 = vcmp.gt.f32.partialorder %v1009, 0.0
    %vm1026 = vcmp.gt.f32.partialorder %v1010, 0.0
    %vm1027 = vcmp.gt.f32.partialorder %v1011, 0.0
    %vm1028 = vcmp.gt.f32.partialorder %v1012, 0.0
    %vm1029 = vcmp.gt.f32.partialorder %v1013, 0.0
    %vm1030 = vcmp.gt.f32.partialorder %v1014, 0.0
    %vm1031 = vcmp.gt.f32.partialorder %v1015, 0.0
    %vm1032 = vcmp.gt.f32.partialorder %v1016, 0.0
    %vm1033 = vcmp.gt.f32.partialorder %v1017, 0.0
    %vm1034 = vcmp.gt.f32.partialorder %v1018, 0.0
    %vm1035 = vcmp.gt.f32.partialorder %v1019, 0.0
    %vm1036 = vcmp.gt.f32.partialorder %v1020, 0.0
    %vm1037 = vcmp.gt.f32.partialorder %v1021, 0.0
    %vm1038 = vcmp.gt.f32.partialorder %v1022, 0.0
    %vm1039 = vcmp.gt.f32.partialorder %v1023, 0.0
    %vm1040 = vcmp.gt.f32.partialorder %v1024, 0.0
    %v1041 = vmul.f32 %v1009, 0.2
    %v1042 = vmul.f32 %v1010, 0.2
    %v1043 = vmul.f32 %v1011, 0.2
    %v1044 = vmul.f32 %v1012, 0.2
    %v1045 = vmul.f32 %v1013, 0.2
    %v1046 = vmul.f32 %v1014, 0.2
    %v1047 = vmul.f32 %v1015, 0.2
    %v1048 = vmul.f32 %v1016, 0.2
    %v1049 = vmul.f32 %v1017, 0.2
    %v1050 = vmul.f32 %v1018, 0.2
    %v1051 = vmul.f32 %v1019, 0.2
    %v1052 = vmul.f32 %v1020, 0.2
    %v1053 = vmul.f32 %v1021, 0.2
    %v1054 = vmul.f32 %v1022, 0.2
    %v1055 = vmul.f32 %v1023, 0.2
    %v1056 = vmul.f32 %v1024, 0.2
    %v1057 = vsel %vm1025, %v1009, %v1041
    %v1058 = vsel %vm1026, %v1010, %v1042
    %v1059 = vsel %vm1027, %v1011, %v1043
    %v1060 = vsel %vm1028, %v1012, %v1044
    %v1061 = vsel %vm1029, %v1013, %v1045
    %v1062 = vsel %vm1030, %v1014, %v1046
    %v1063 = vsel %vm1031, %v1015, %v1047
    %v1064 = vsel %vm1032, %v1016, %v1048
    %v1065 = vsel %vm1033, %v1017, %v1049
    %v1066 = vsel %vm1034, %v1018, %v1050
    %v1067 = vsel %vm1035, %v1019, %v1051
    %v1068 = vsel %vm1036, %v1020, %v1052
    %v1069 = vsel %vm1037, %v1021, %v1053
    %v1070 = vsel %vm1038, %v1022, %v1054
    %v1071 = vsel %vm1039, %v1023, %v1055
    %v1072 = vsel %vm1040, %v1024, %v1056
    %v1073 = vsel %vm292, %v1057, -1e+30
    %v1074 = vsel %vm293, %v1058, -1e+30
    %v1075 = vsel %vm294, %v1059, -1e+30
    %v1076 = vsel %vm295, %v1060, -1e+30
    %v1077 = vsel %vm296, %v1061, -1e+30
    %v1078 = vsel %vm297, %v1062, -1e+30
    %v1079 = vsel %vm298, %v1063, -1e+30
    %v1080 = vsel %vm299, %v1064, -1e+30
    %v1081 = vsel %vm300, %v1065, -1e+30
    %v1082 = vsel %vm301, %v1066, -1e+30
    %v1083 = vsel %vm302, %v1067, -1e+30
    %v1084 = vsel %vm303, %v1068, -1e+30
    %v1085 = vsel %vm304, %v1069, -1e+30
    %v1086 = vsel %vm305, %v1070, -1e+30
    %v1087 = vsel %vm306, %v1071, -1e+30
    %v1088 = vsel %vm307, %v1072, -1e+30
    %1089 = vmax.xlane.f32.xlu0 %v1073
    %v1090 = vpop.xlane.xlu0 %1089
    %1091 = vmax.xlane.f32.xlu0 %v1074
    %v1092 = vpop.xlane.xlu0 %1091
    %1093 = vmax.xlane.f32.xlu0 %v1075
    %v1094 = vpop.xlane.xlu0 %1093
    %1095 = vmax.xlane.f32.xlu0 %v1076
    %v1096 = vpop.xlane.xlu0 %1095
    %1097 = vmax.xlane.f32.xlu0 %v1077
    %v1098 = vpop.xlane.xlu0 %1097
    %1099 = vmax.xlane.f32.xlu0 %v1078
    %v1100 = vpop.xlane.xlu0 %1099
    %1101 = vmax.xlane.f32.xlu0 %v1079
    %v1102 = vpop.xlane.xlu0 %1101
    %1103 = vmax.xlane.f32.xlu0 %v1080
    %v1104 = vpop.xlane.xlu0 %1103
    %1105 = vmax.xlane.f32.xlu0 %v1081
    %v1106 = vpop.xlane.xlu0 %1105
    %1107 = vmax.xlane.f32.xlu0 %v1082
    %v1108 = vpop.xlane.xlu0 %1107
    %1109 = vmax.xlane.f32.xlu0 %v1083
    %v1110 = vpop.xlane.xlu0 %1109
    %1111 = vmax.xlane.f32.xlu0 %v1084
    %v1112 = vpop.xlane.xlu0 %1111
    %1113 = vmax.xlane.f32.xlu0 %v1085
    %v1114 = vpop.xlane.xlu0 %1113
    %1115 = vmax.xlane.f32.xlu0 %v1086
    %v1116 = vpop.xlane.xlu0 %1115
    %1117 = vmax.xlane.f32.xlu0 %v1087
    %v1118 = vpop.xlane.xlu0 %1117
    %1119 = vmax.xlane.f32.xlu0 %v1088
    %v1120 = vpop.xlane.xlu0 %1119
    %v1121 = vmax.f32 %v324, %v1090
    %v1122 = vmax.f32 %v325, %v1092
    %v1123 = vmax.f32 %v326, %v1094
    %v1124 = vmax.f32 %v327, %v1096
    %v1125 = vmax.f32 %v328, %v1098
    %v1126 = vmax.f32 %v329, %v1100
    %v1127 = vmax.f32 %v330, %v1102
    %v1128 = vmax.f32 %v331, %v1104
    %v1129 = vmax.f32 %v332, %v1106
    %v1130 = vmax.f32 %v333, %v1108
    %v1131 = vmax.f32 %v334, %v1110
    %v1132 = vmax.f32 %v335, %v1112
    %v1133 = vmax.f32 %v336, %v1114
    %v1134 = vmax.f32 %v337, %v1116
    %v1135 = vmax.f32 %v338, %v1118
    %v1136 = vmax.f32 %v339, %v1120
    %v1137 = vsub.f32 %v324, %v1121
    %v1138 = vsub.f32 %v325, %v1122
    %v1139 = vsub.f32 %v326, %v1123
    %v1140 = vsub.f32 %v327, %v1124
    %v1141 = vsub.f32 %v328, %v1125
    %v1142 = vsub.f32 %v329, %v1126
    %v1143 = vsub.f32 %v330, %v1127
    %v1144 = vsub.f32 %v331, %v1128
    %v1145 = vsub.f32 %v332, %v1129
    %v1146 = vsub.f32 %v333, %v1130
    %v1147 = vsub.f32 %v334, %v1131
    %v1148 = vsub.f32 %v335, %v1132
    %v1149 = vsub.f32 %v336, %v1133
    %v1150 = vsub.f32 %v337, %v1134
    %v1151 = vsub.f32 %v338, %v1135
    %v1152 = vsub.f32 %v339, %v1136
    %v1153 = vmul.f32 %v1137, 1.442695
    %v1154 = vpow.pop %v1153
    %v1155 = vmul.f32 %v1138, 1.442695
    %v1156 = vpow.pop %v1155
    %v1157 = vmul.f32 %v1139, 1.442695
    %v1158 = vpow.pop %v1157
    %v1159 = vmul.f32 %v1140, 1.442695
    %v1160 = vpow.pop %v1159
    %v1161 = vmul.f32 %v1141, 1.442695
    %v1162 = vpow.pop %v1161
    %v1163 = vmul.f32 %v1142, 1.442695
    %v1164 = vpow.pop %v1163
    %v1165 = vmul.f32 %v1143, 1.442695
    %v1166 = vpow.pop %v1165
    %v1167 = vmul.f32 %v1144, 1.442695
    %v1168 = vpow.pop %v1167
    %v1169 = vmul.f32 %v1145, 1.442695
    %v1170 = vpow.pop %v1169
    %v1171 = vmul.f32 %v1146, 1.442695
    %v1172 = vpow.pop %v1171
    %v1173 = vmul.f32 %v1147, 1.442695
    %v1174 = vpow.pop %v1173
    %v1175 = vmul.f32 %v1148, 1.442695
    %v1176 = vpow.pop %v1175
    %v1177 = vmul.f32 %v1149, 1.442695
    %v1178 = vpow.pop %v1177
    %v1179 = vmul.f32 %v1150, 1.442695
    %v1180 = vpow.pop %v1179
    %v1181 = vmul.f32 %v1151, 1.442695
    %v1182 = vpow.pop %v1181
    %v1183 = vmul.f32 %v1152, 1.442695
    %v1184 = vpow.pop %v1183
    %1186 = vset.pattern.permute.xlu0 1
    %1187 = vperm.xlu0 %1186, %v1121
    %v1188 = vpop.permute.xlu0 %1187
    %1191 = vset.pattern.permute.xlu0 1
    %1192 = vperm.xlu0 %1191, %v1122
    %v1193 = vpop.permute.xlu0 %1192
    %1196 = vset.pattern.permute.xlu0 1
    %1197 = vperm.xlu0 %1196, %v1123
    %v1198 = vpop.permute.xlu0 %1197
    %1201 = vset.pattern.permute.xlu0 1
    %1202 = vperm.xlu0 %1201, %v1124
    %v1203 = vpop.permute.xlu0 %1202
    %1206 = vset.pattern.permute.xlu0 1
    %1207 = vperm.xlu0 %1206, %v1125
    %v1208 = vpop.permute.xlu0 %1207
    %1211 = vset.pattern.permute.xlu0 1
    %1212 = vperm.xlu0 %1211, %v1126
    %v1213 = vpop.permute.xlu0 %1212
    %1216 = vset.pattern.permute.xlu0 1
    %1217 = vperm.xlu0 %1216, %v1127
    %v1218 = vpop.permute.xlu0 %1217
    %1221 = vset.pattern.permute.xlu0 1
    %1222 = vperm.xlu0 %1221, %v1128
    %v1223 = vpop.permute.xlu0 %1222
    %1226 = vset.pattern.permute.xlu0 1
    %1227 = vperm.xlu0 %1226, %v1129
    %v1228 = vpop.permute.xlu0 %1227
    %1231 = vset.pattern.permute.xlu0 1
    %1232 = vperm.xlu0 %1231, %v1130
    %v1233 = vpop.permute.xlu0 %1232
    %1236 = vset.pattern.permute.xlu0 1
    %1237 = vperm.xlu0 %1236, %v1131
    %v1238 = vpop.permute.xlu0 %1237
    %1241 = vset.pattern.permute.xlu0 1
    %1242 = vperm.xlu0 %1241, %v1132
    %v1243 = vpop.permute.xlu0 %1242
    %1246 = vset.pattern.permute.xlu0 1
    %1247 = vperm.xlu0 %1246, %v1133
    %v1248 = vpop.permute.xlu0 %1247
    %1251 = vset.pattern.permute.xlu0 1
    %1252 = vperm.xlu0 %1251, %v1134
    %v1253 = vpop.permute.xlu0 %1252
    %1256 = vset.pattern.permute.xlu0 1
    %1257 = vperm.xlu0 %1256, %v1135
    %v1258 = vpop.permute.xlu0 %1257
    %1261 = vset.pattern.permute.xlu0 1
    %1262 = vperm.xlu0 %1261, %v1136
    %v1263 = vpop.permute.xlu0 %1262
    %v1265 = vsub.f32 %v1073, %v1188
    %v1266 = vsub.f32 %v1074, %v1193
    %v1267 = vsub.f32 %v1075, %v1198
    %v1268 = vsub.f32 %v1076, %v1203
    %v1269 = vsub.f32 %v1077, %v1208
    %v1270 = vsub.f32 %v1078, %v1213
    %v1271 = vsub.f32 %v1079, %v1218
    %v1272 = vsub.f32 %v1080, %v1223
    %v1273 = vsub.f32 %v1081, %v1228
    %v1274 = vsub.f32 %v1082, %v1233
    %v1275 = vsub.f32 %v1083, %v1238
    %v1276 = vsub.f32 %v1084, %v1243
    %v1277 = vsub.f32 %v1085, %v1248
    %v1278 = vsub.f32 %v1086, %v1253
    %v1279 = vsub.f32 %v1087, %v1258
    %v1280 = vsub.f32 %v1088, %v1263
    %v1281 = vmul.f32 %v1265, 1.442695
    %v1282 = vpow.pop %v1281
    %v1283 = vmul.f32 %v1266, 1.442695
    %v1284 = vpow.pop %v1283
    %v1285 = vmul.f32 %v1267, 1.442695
    %v1286 = vpow.pop %v1285
    %v1287 = vmul.f32 %v1268, 1.442695
    %v1288 = vpow.pop %v1287
    %v1289 = vmul.f32 %v1269, 1.442695
    %v1290 = vpow.pop %v1289
    %v1291 = vmul.f32 %v1270, 1.442695
    %v1292 = vpow.pop %v1291
    %v1293 = vmul.f32 %v1271, 1.442695
    %v1294 = vpow.pop %v1293
    %v1295 = vmul.f32 %v1272, 1.442695
    %v1296 = vpow.pop %v1295
    %v1297 = vmul.f32 %v1273, 1.442695
    %v1298 = vpow.pop %v1297
    %v1299 = vmul.f32 %v1274, 1.442695
    %v1300 = vpow.pop %v1299
    %v1301 = vmul.f32 %v1275, 1.442695
    %v1302 = vpow.pop %v1301
    %v1303 = vmul.f32 %v1276, 1.442695
    %v1304 = vpow.pop %v1303
    %v1305 = vmul.f32 %v1277, 1.442695
    %v1306 = vpow.pop %v1305
    %v1307 = vmul.f32 %v1278, 1.442695
    %v1308 = vpow.pop %v1307
    %v1309 = vmul.f32 %v1279, 1.442695
    %v1310 = vpow.pop %v1309
    %v1311 = vmul.f32 %v1280, 1.442695
    %v1312 = vpow.pop %v1311
    %v1313 = vmul.f32 %v1282, %v95
    %v1314 = vmul.f32 %v1284, %v96
    %v1315 = vmul.f32 %v1286, %v97
    %v1316 = vmul.f32 %v1288, %v98
    %v1317 = vmul.f32 %v1290, %v99
    %v1318 = vmul.f32 %v1292, %v100
    %v1319 = vmul.f32 %v1294, %v101
    %v1320 = vmul.f32 %v1296, %v102
    %v1321 = vmul.f32 %v1298, %v103
    %v1322 = vmul.f32 %v1300, %v104
    %v1323 = vmul.f32 %v1302, %v105
    %v1324 = vmul.f32 %v1304, %v106
    %v1325 = vmul.f32 %v1306, %v107
    %v1326 = vmul.f32 %v1308, %v108
    %v1327 = vmul.f32 %v1310, %v109
    %v1328 = vmul.f32 %v1312, %v110
    %v1329 = vmul.f32 %v1154, %v580
    %v1330 = vmul.f32 %v1156, %v581
    %v1331 = vmul.f32 %v1158, %v582
    %v1332 = vmul.f32 %v1160, %v583
    %v1333 = vmul.f32 %v1162, %v584
    %v1334 = vmul.f32 %v1164, %v585
    %v1335 = vmul.f32 %v1166, %v586
    %v1336 = vmul.f32 %v1168, %v587
    %v1337 = vmul.f32 %v1170, %v588
    %v1338 = vmul.f32 %v1172, %v589
    %v1339 = vmul.f32 %v1174, %v590
    %v1340 = vmul.f32 %v1176, %v591
    %v1341 = vmul.f32 %v1178, %v592
    %v1342 = vmul.f32 %v1180, %v593
    %v1343 = vmul.f32 %v1182, %v594
    %v1344 = vmul.f32 %v1184, %v595
    %1345 = vadd.xlane.f32.xlu0 %v1313
    %v1346 = vpop.xlane.xlu0 %1345
    %1347 = vadd.xlane.f32.xlu0 %v1314
    %v1348 = vpop.xlane.xlu0 %1347
    %1349 = vadd.xlane.f32.xlu0 %v1315
    %v1350 = vpop.xlane.xlu0 %1349
    %1351 = vadd.xlane.f32.xlu0 %v1316
    %v1352 = vpop.xlane.xlu0 %1351
    %1353 = vadd.xlane.f32.xlu0 %v1317
    %v1354 = vpop.xlane.xlu0 %1353
    %1355 = vadd.xlane.f32.xlu0 %v1318
    %v1356 = vpop.xlane.xlu0 %1355
    %1357 = vadd.xlane.f32.xlu0 %v1319
    %v1358 = vpop.xlane.xlu0 %1357
    %1359 = vadd.xlane.f32.xlu0 %v1320
    %v1360 = vpop.xlane.xlu0 %1359
    %1361 = vadd.xlane.f32.xlu0 %v1321
    %v1362 = vpop.xlane.xlu0 %1361
    %1363 = vadd.xlane.f32.xlu0 %v1322
    %v1364 = vpop.xlane.xlu0 %1363
    %1365 = vadd.xlane.f32.xlu0 %v1323
    %v1366 = vpop.xlane.xlu0 %1365
    %1367 = vadd.xlane.f32.xlu0 %v1324
    %v1368 = vpop.xlane.xlu0 %1367
    %1369 = vadd.xlane.f32.xlu0 %v1325
    %v1370 = vpop.xlane.xlu0 %1369
    %1371 = vadd.xlane.f32.xlu0 %v1326
    %v1372 = vpop.xlane.xlu0 %1371
    %1373 = vadd.xlane.f32.xlu0 %v1327
    %v1374 = vpop.xlane.xlu0 %1373
    %1375 = vadd.xlane.f32.xlu0 %v1328
    %v1376 = vpop.xlane.xlu0 %1375
    %v1377 = vadd.f32 %v1329, %v1346
    %v1378 = vadd.f32 %v1330, %v1348
    %v1379 = vadd.f32 %v1331, %v1350
    %v1380 = vadd.f32 %v1332, %v1352
    %v1381 = vadd.f32 %v1333, %v1354
    %v1382 = vadd.f32 %v1334, %v1356
    %v1383 = vadd.f32 %v1335, %v1358
    %v1384 = vadd.f32 %v1336, %v1360
    %v1385 = vadd.f32 %v1337, %v1362
    %v1386 = vadd.f32 %v1338, %v1364
    %v1387 = vadd.f32 %v1339, %v1366
    %v1388 = vadd.f32 %v1340, %v1368
    %v1389 = vadd.f32 %v1341, %v1370
    %v1390 = vadd.f32 %v1342, %v1372
    %v1391 = vadd.f32 %v1343, %v1374
    %v1392 = vadd.f32 %v1344, %v1376
    %v1393 = vpack.c.bf16 %v1314, %v1313
    %v1394 = vpack.c.bf16 %v1316, %v1315
    %v1395 = vpack.c.bf16 %v1318, %v1317
    %v1396 = vpack.c.bf16 %v1320, %v1319
    %v1397 = vpack.c.bf16 %v1322, %v1321
    %v1398 = vpack.c.bf16 %v1324, %v1323
    %v1399 = vpack.c.bf16 %v1326, %v1325
    %v1400 = vpack.c.bf16 %v1328, %v1327
    %1401 = vrot.lane.b32.xlu0 %v700, 96
    %v1402 = vpop.permute.xlu0 %1401
    %1403 = vrot.lane.b32.xlu0 %v701, 96
    %v1404 = vpop.permute.xlu0 %1403
    %1405 = vrot.lane.b32.xlu0 %v702, 96
    %v1406 = vpop.permute.xlu0 %1405
    %1407 = vrot.lane.b32.xlu0 %v703, 96
    %v1408 = vpop.permute.xlu0 %1407
    %1409 = vrot.lane.b32.xlu0 %v704, 96
    %v1410 = vpop.permute.xlu0 %1409
    %1411 = vrot.lane.b32.xlu0 %v705, 96
    %v1412 = vpop.permute.xlu0 %1411
    %1413 = vrot.lane.b32.xlu0 %v706, 96
    %v1414 = vpop.permute.xlu0 %1413
    %1415 = vrot.lane.b32.xlu0 %v707, 96
    %v1416 = vpop.permute.xlu0 %1415
    %1425 = vmatprep.subr.bf16.mxu0 0
    %1426 = vmatpush1.bf16.msra.mxu0 %v1402
    %1427 = vmatprep.subr.bf16.mxu0 0
    %1428 = vmatpush1.bf16.msra.mxu0 %v1404
    %1429 = vmatprep.subr.bf16.mxu0 0
    %1430 = vmatpush1.bf16.msra.mxu0 %v1406
    %1431 = vmatprep.subr.bf16.mxu0 0
    %1432 = vmatpush1.bf16.msra.mxu0 %v1408
    %1433 = vmatprep.subr.bf16.mxu0 0
    %1434 = vmatpush1.bf16.msra.mxu0 %v1410
    %1435 = vmatprep.subr.bf16.mxu0 0
    %1436 = vmatpush1.bf16.msra.mxu0 %v1412
    %1437 = vmatprep.subr.bf16.mxu0 0
    %1438 = vmatpush1.bf16.msra.mxu0 %v1414
    %1439 = vmatprep.subr.bf16.mxu0 0
    %1440 = vmatpush1.bf16.msra.mxu0 %v1416
    %1441 = vmatprep.subr.bf16.mxu0 0
    %1442 = vmatpush1.bf16.msra.mxu0 0
    %1443 = vmatprep.subr.bf16.mxu0 0
    %1444 = vmatpush1.bf16.msra.mxu0 0
    %1445 = vmatprep.subr.bf16.mxu0 0
    %1446 = vmatpush1.bf16.msra.mxu0 0
    %1447 = vmatprep.subr.bf16.mxu0 0
    %1448 = vmatpush1.bf16.msra.mxu0 0
    %1449 = vmatprep.subr.bf16.mxu0 0
    %1450 = vmatpush1.bf16.msra.mxu0 0
    %1451 = vmatprep.subr.bf16.mxu0 0
    %1452 = vmatpush1.bf16.msra.mxu0 0
    %1453 = vmatprep.subr.bf16.mxu0 0
    %1454 = vmatpush1.bf16.msra.mxu0 0
    %1455 = vmatprep.subr.bf16.mxu0 0
    %1456 = vmatpush1.bf16.msra.mxu0 0
    %1457 = vmatprep.mubr.bf16.mxu0 0
    %1458 = vmatmul.mubr.bf16.gmra.mrb[0].mxu0 %v1393
    %v1459 = vpop.f32.mrb[0].mxu0
    %v1460 = vadd.f32 0.0, %v1459
    %v1461 = vpop.f32.mrb[0].mxu0
    %v1462 = vpop.f32.mrb[0].mxu0
    %v1463 = vadd.f32 0.0, %v1462
    %v1464 = vpop.f32.mrb[0].mxu0
    %1465 = vmatprep.mubr.bf16.mxu0 0
    %1466 = vmatmul.mubr.bf16.gmra.mrb[0].mxu0 %v1394
    %v1467 = vpop.f32.mrb[0].mxu0
    %v1468 = vadd.f32 0.0, %v1467
    %v1469 = vpop.f32.mrb[0].mxu0
    %v1470 = vpop.f32.mrb[0].mxu0
    %v1471 = vadd.f32 0.0, %v1470
    %v1472 = vpop.f32.mrb[0].mxu0
    %1473 = vmatprep.mubr.bf16.mxu0 0
    %1474 = vmatmul.mubr.bf16.gmra.mrb[0].mxu0 %v1395
    %v1475 = vpop.f32.mrb[0].mxu0
    %v1476 = vadd.f32 0.0, %v1475
    %v1477 = vpop.f32.mrb[0].mxu0
    %v1478 = vpop.f32.mrb[0].mxu0
    %v1479 = vadd.f32 0.0, %v1478
    %v1480 = vpop.f32.mrb[0].mxu0
    %1481 = vmatprep.mubr.bf16.mxu0 0
    %1482 = vmatmul.mubr.bf16.gmra.mrb[0].mxu0 %v1396
    %v1483 = vpop.f32.mrb[0].mxu0
    %v1484 = vadd.f32 0.0, %v1483
    %v1485 = vpop.f32.mrb[0].mxu0
    %v1486 = vpop.f32.mrb[0].mxu0
    %v1487 = vadd.f32 0.0, %v1486
    %v1488 = vpop.f32.mrb[0].mxu0
    %1489 = vmatprep.mubr.bf16.mxu0 0
    %1490 = vmatmul.mubr.bf16.gmra.mrb[0].mxu0 %v1397
    %v1491 = vpop.f32.mrb[0].mxu0
    %v1492 = vadd.f32 0.0, %v1491
    %v1493 = vpop.f32.mrb[0].mxu0
    %v1494 = vpop.f32.mrb[0].mxu0
    %v1495 = vadd.f32 0.0, %v1494
    %v1496 = vpop.f32.mrb[0].mxu0
    %1497 = vmatprep.mubr.bf16.mxu0 0
    %1498 = vmatmul.mubr.bf16.gmra.mrb[0].mxu0 %v1398
    %v1499 = vpop.f32.mrb[0].mxu0
    %v1500 = vadd.f32 0.0, %v1499
    %v1501 = vpop.f32.mrb[0].mxu0
    %v1502 = vpop.f32.mrb[0].mxu0
    %v1503 = vadd.f32 0.0, %v1502
    %v1504 = vpop.f32.mrb[0].mxu0
    %1505 = vmatprep.mubr.bf16.mxu0 0
    %1506 = vmatmul.mubr.bf16.gmra.mrb[0].mxu0 %v1399
    %v1507 = vpop.f32.mrb[0].mxu0
    %v1508 = vadd.f32 0.0, %v1507
    %v1509 = vpop.f32.mrb[0].mxu0
    %v1510 = vpop.f32.mrb[0].mxu0
    %v1511 = vadd.f32 0.0, %v1510
    %v1512 = vpop.f32.mrb[0].mxu0
    %1513 = vmatprep.mubr.bf16.mxu0 0
    %1514 = vmatmul.mubr.bf16.gmra.mrb[0].mxu0 %v1400
    %v1515 = vpop.f32.mrb[0].mxu0
    %v1516 = vadd.f32 0.0, %v1515
    %v1517 = vpop.f32.mrb[0].mxu0
    %v1518 = vpop.f32.mrb[0].mxu0
    %v1519 = vadd.f32 0.0, %v1518
    %v1520 = vpop.f32.mrb[0].mxu0
    %1521 = vdwg.mxu0
    %1523 = vset.pattern.permute.xlu0 1
    %1524 = vperm.xlu0 %1523, %v1154
    %v1525 = vpop.permute.xlu0 %1524
    %1528 = vset.pattern.permute.xlu0 1
    %1529 = vperm.xlu0 %1528, %v1156
    %v1530 = vpop.permute.xlu0 %1529
    %1533 = vset.pattern.permute.xlu0 1
    %1534 = vperm.xlu0 %1533, %v1158
    %v1535 = vpop.permute.xlu0 %1534
    %1538 = vset.pattern.permute.xlu0 1
    %1539 = vperm.xlu0 %1538, %v1160
    %v1540 = vpop.permute.xlu0 %1539
    %1543 = vset.pattern.permute.xlu0 1
    %1544 = vperm.xlu0 %1543, %v1162
    %v1545 = vpop.permute.xlu0 %1544
    %1548 = vset.pattern.permute.xlu0 1
    %1549 = vperm.xlu0 %1548, %v1164
    %v1550 = vpop.permute.xlu0 %1549
    %1553 = vset.pattern.permute.xlu0 1
    %1554 = vperm.xlu0 %1553, %v1166
    %v1555 = vpop.permute.xlu0 %1554
    %1558 = vset.pattern.permute.xlu0 1
    %1559 = vperm.xlu0 %1558, %v1168
    %v1560 = vpop.permute.xlu0 %1559
    %1563 = vset.pattern.permute.xlu0 1
    %1564 = vperm.xlu0 %1563, %v1170
    %v1565 = vpop.permute.xlu0 %1564
    %1568 = vset.pattern.permute.xlu0 1
    %1569 = vperm.xlu0 %1568, %v1172
    %v1570 = vpop.permute.xlu0 %1569
    %1573 = vset.pattern.permute.xlu0 1
    %1574 = vperm.xlu0 %1573, %v1174
    %v1575 = vpop.permute.xlu0 %1574
    %1578 = vset.pattern.permute.xlu0 1
    %1579 = vperm.xlu0 %1578, %v1176
    %v1580 = vpop.permute.xlu0 %1579
    %1583 = vset.pattern.permute.xlu0 1
    %1584 = vperm.xlu0 %1583, %v1178
    %v1585 = vpop.permute.xlu0 %1584
    %1588 = vset.pattern.permute.xlu0 1
    %1589 = vperm.xlu0 %1588, %v1180
    %v1590 = vpop.permute.xlu0 %1589
    %1593 = vset.pattern.permute.xlu0 1
    %1594 = vperm.xlu0 %1593, %v1182
    %v1595 = vpop.permute.xlu0 %1594
    %1598 = vset.pattern.permute.xlu0 1
    %1599 = vperm.xlu0 %1598, %v1184
    %v1600 = vpop.permute.xlu0 %1599
    %v1602 = vmul.f32 %v1525, %v813
    %v1603 = vmul.f32 %v1530, %v814
    %v1604 = vmul.f32 %v1535, %v815
    %v1605 = vmul.f32 %v1540, %v816
    %v1606 = vmul.f32 %v1545, %v817
    %v1607 = vmul.f32 %v1550, %v818
    %v1608 = vmul.f32 %v1555, %v819
    %v1609 = vmul.f32 %v1560, %v820
    %v1610 = vmul.f32 %v1565, %v821
    %v1611 = vmul.f32 %v1570, %v822
    %v1612 = vmul.f32 %v1575, %v823
    %v1613 = vmul.f32 %v1580, %v824
    %v1614 = vmul.f32 %v1585, %v825
    %v1615 = vmul.f32 %v1590, %v826
    %v1616 = vmul.f32 %v1595, %v827
    %v1617 = vmul.f32 %v1600, %v828
    %1634 = vrot.lane.b32.xlu0 %v1460, 32
    %v1635 = vpop.permute.xlu0 %1634
    %1636 = vrot.lane.b32.xlu0 %v1463, 32
    %v1637 = vpop.permute.xlu0 %1636
    %1638 = vrot.lane.b32.xlu0 %v1468, 32
    %v1639 = vpop.permute.xlu0 %1638
    %1640 = vrot.lane.b32.xlu0 %v1471, 32
    %v1641 = vpop.permute.xlu0 %1640
    %1642 = vrot.lane.b32.xlu0 %v1476, 32
    %v1643 = vpop.permute.xlu0 %1642
    %1644 = vrot.lane.b32.xlu0 %v1479, 32
    %v1645 = vpop.permute.xlu0 %1644
    %1646 = vrot.lane.b32.xlu0 %v1484, 32
    %v1647 = vpop.permute.xlu0 %1646
    %1648 = vrot.lane.b32.xlu0 %v1487, 32
    %v1649 = vpop.permute.xlu0 %1648
    %1650 = vrot.lane.b32.xlu0 %v1492, 32
    %v1651 = vpop.permute.xlu0 %1650
    %1652 = vrot.lane.b32.xlu0 %v1495, 32
    %v1653 = vpop.permute.xlu0 %1652
    %1654 = vrot.lane.b32.xlu0 %v1500, 32
    %v1655 = vpop.permute.xlu0 %1654
    %1656 = vrot.lane.b32.xlu0 %v1503, 32
    %v1657 = vpop.permute.xlu0 %1656
    %1658 = vrot.lane.b32.xlu0 %v1508, 32
    %v1659 = vpop.permute.xlu0 %1658
    %1660 = vrot.lane.b32.xlu0 %v1511, 32
    %v1661 = vpop.permute.xlu0 %1660
    %1662 = vrot.lane.b32.xlu0 %v1516, 32
    %v1663 = vpop.permute.xlu0 %1662
    %1664 = vrot.lane.b32.xlu0 %v1519, 32
    %v1665 = vpop.permute.xlu0 %1664
    %v1682 = vadd.f32 %v1602, %v1635
    %v1683 = vadd.f32 %v1603, %v1637
    %v1684 = vadd.f32 %v1604, %v1639
    %v1685 = vadd.f32 %v1605, %v1641
    %v1686 = vadd.f32 %v1606, %v1643
    %v1687 = vadd.f32 %v1607, %v1645
    %v1688 = vadd.f32 %v1608, %v1647
    %v1689 = vadd.f32 %v1609, %v1649
    %v1690 = vadd.f32 %v1610, %v1651
    %v1691 = vadd.f32 %v1611, %v1653
    %v1692 = vadd.f32 %v1612, %v1655
    %v1693 = vadd.f32 %v1613, %v1657
    %v1694 = vadd.f32 %v1614, %v1659
    %v1695 = vadd.f32 %v1615, %v1661
    %v1696 = vadd.f32 %v1616, %v1663
    %v1697 = vadd.f32 %v1617, %v1665
    %1698 = vset.pattern.permute.xlu0 2
    %1699 = vperm.xlu0 %1698, %v111
    %v1700 = vpop.permute.xlu0 %1699
    %1702 = vset.pattern.permute.xlu0 2
    %1703 = vperm.xlu0 %1702, %v112
    %v1704 = vpop.permute.xlu0 %1703
    %1706 = vset.pattern.permute.xlu0 2
    %1707 = vperm.xlu0 %1706, %v113
    %v1708 = vpop.permute.xlu0 %1707
    %1710 = vset.pattern.permute.xlu0 2
    %1711 = vperm.xlu0 %1710, %v114
    %v1712 = vpop.permute.xlu0 %1711
    %1714 = vset.pattern.permute.xlu0 2
    %1715 = vperm.xlu0 %1714, %v115
    %v1716 = vpop.permute.xlu0 %1715
    %1718 = vset.pattern.permute.xlu0 2
    %1719 = vperm.xlu0 %1718, %v116
    %v1720 = vpop.permute.xlu0 %1719
    %1722 = vset.pattern.permute.xlu0 2
    %1723 = vperm.xlu0 %1722, %v117
    %v1724 = vpop.permute.xlu0 %1723
    %1726 = vset.pattern.permute.xlu0 2
    %1727 = vperm.xlu0 %1726, %v118
    %v1728 = vpop.permute.xlu0 %1727
    %1730 = vset.pattern.permute.xlu0 2
    %1731 = vperm.xlu0 %1730, %v119
    %v1732 = vpop.permute.xlu0 %1731
    %1734 = vset.pattern.permute.xlu0 2
    %1735 = vperm.xlu0 %1734, %v120
    %v1736 = vpop.permute.xlu0 %1735
    %1738 = vset.pattern.permute.xlu0 2
    %1739 = vperm.xlu0 %1738, %v121
    %v1740 = vpop.permute.xlu0 %1739
    %1742 = vset.pattern.permute.xlu0 2
    %1743 = vperm.xlu0 %1742, %v122
    %v1744 = vpop.permute.xlu0 %1743
    %1746 = vset.pattern.permute.xlu0 2
    %1747 = vperm.xlu0 %1746, %v123
    %v1748 = vpop.permute.xlu0 %1747
    %1750 = vset.pattern.permute.xlu0 2
    %1751 = vperm.xlu0 %1750, %v124
    %v1752 = vpop.permute.xlu0 %1751
    %1754 = vset.pattern.permute.xlu0 2
    %1755 = vperm.xlu0 %1754, %v125
    %v1756 = vpop.permute.xlu0 %1755
    %1758 = vset.pattern.permute.xlu0 2
    %1759 = vperm.xlu0 %1758, %v126
    %v1760 = vpop.permute.xlu0 %1759
    %v1762 = vlaneseq
    %v1763 = vshrl.u32 %v1762, 7
    %v1764 = vsub.s32 2, %v1763
    %v1765 = vrot.slane %v127, %v1764
    %v1766 = vadd.f32 %v1700, %v1765
    %v1767 = vadd.f32 %v1704, %v1765
    %v1768 = vadd.f32 %v1708, %v1765
    %v1769 = vadd.f32 %v1712, %v1765
    %v1770 = vadd.f32 %v1716, %v1765
    %v1771 = vadd.f32 %v1720, %v1765
    %v1772 = vadd.f32 %v1724, %v1765
    %v1773 = vadd.f32 %v1728, %v1765
    %v1774 = vadd.f32 %v1732, %v1765
    %v1775 = vadd.f32 %v1736, %v1765
    %v1776 = vadd.f32 %v1740, %v1765
    %v1777 = vadd.f32 %v1744, %v1765
    %v1778 = vadd.f32 %v1748, %v1765
    %v1779 = vadd.f32 %v1752, %v1765
    %v1780 = vadd.f32 %v1756, %v1765
    %v1781 = vadd.f32 %v1760, %v1765
    %vm1782 = vcmp.gt.f32.partialorder %v1766, 0.0
    %vm1783 = vcmp.gt.f32.partialorder %v1767, 0.0
    %vm1784 = vcmp.gt.f32.partialorder %v1768, 0.0
    %vm1785 = vcmp.gt.f32.partialorder %v1769, 0.0
    %vm1786 = vcmp.gt.f32.partialorder %v1770, 0.0
    %vm1787 = vcmp.gt.f32.partialorder %v1771, 0.0
    %vm1788 = vcmp.gt.f32.partialorder %v1772, 0.0
    %vm1789 = vcmp.gt.f32.partialorder %v1773, 0.0
    %vm1790 = vcmp.gt.f32.partialorder %v1774, 0.0
    %vm1791 = vcmp.gt.f32.partialorder %v1775, 0.0
    %vm1792 = vcmp.gt.f32.partialorder %v1776, 0.0
    %vm1793 = vcmp.gt.f32.partialorder %v1777, 0.0
    %vm1794 = vcmp.gt.f32.partialorder %v1778, 0.0
    %vm1795 = vcmp.gt.f32.partialorder %v1779, 0.0
    %vm1796 = vcmp.gt.f32.partialorder %v1780, 0.0
    %vm1797 = vcmp.gt.f32.partialorder %v1781, 0.0
    %v1798 = vmul.f32 %v1766, 0.2
    %v1799 = vmul.f32 %v1767, 0.2
    %v1800 = vmul.f32 %v1768, 0.2
    %v1801 = vmul.f32 %v1769, 0.2
    %v1802 = vmul.f32 %v1770, 0.2
    %v1803 = vmul.f32 %v1771, 0.2
    %v1804 = vmul.f32 %v1772, 0.2
    %v1805 = vmul.f32 %v1773, 0.2
    %v1806 = vmul.f32 %v1774, 0.2
    %v1807 = vmul.f32 %v1775, 0.2
    %v1808 = vmul.f32 %v1776, 0.2
    %v1809 = vmul.f32 %v1777, 0.2
    %v1810 = vmul.f32 %v1778, 0.2
    %v1811 = vmul.f32 %v1779, 0.2
    %v1812 = vmul.f32 %v1780, 0.2
    %v1813 = vmul.f32 %v1781, 0.2
    %v1814 = vsel %vm1782, %v1766, %v1798
    %v1815 = vsel %vm1783, %v1767, %v1799
    %v1816 = vsel %vm1784, %v1768, %v1800
    %v1817 = vsel %vm1785, %v1769, %v1801
    %v1818 = vsel %vm1786, %v1770, %v1802
    %v1819 = vsel %vm1787, %v1771, %v1803
    %v1820 = vsel %vm1788, %v1772, %v1804
    %v1821 = vsel %vm1789, %v1773, %v1805
    %v1822 = vsel %vm1790, %v1774, %v1806
    %v1823 = vsel %vm1791, %v1775, %v1807
    %v1824 = vsel %vm1792, %v1776, %v1808
    %v1825 = vsel %vm1793, %v1777, %v1809
    %v1826 = vsel %vm1794, %v1778, %v1810
    %v1827 = vsel %vm1795, %v1779, %v1811
    %v1828 = vsel %vm1796, %v1780, %v1812
    %v1829 = vsel %vm1797, %v1781, %v1813
    %v1830 = vsel %vm292, %v1814, -1e+30
    %v1831 = vsel %vm293, %v1815, -1e+30
    %v1832 = vsel %vm294, %v1816, -1e+30
    %v1833 = vsel %vm295, %v1817, -1e+30
    %v1834 = vsel %vm296, %v1818, -1e+30
    %v1835 = vsel %vm297, %v1819, -1e+30
    %v1836 = vsel %vm298, %v1820, -1e+30
    %v1837 = vsel %vm299, %v1821, -1e+30
    %v1838 = vsel %vm300, %v1822, -1e+30
    %v1839 = vsel %vm301, %v1823, -1e+30
    %v1840 = vsel %vm302, %v1824, -1e+30
    %v1841 = vsel %vm303, %v1825, -1e+30
    %v1842 = vsel %vm304, %v1826, -1e+30
    %v1843 = vsel %vm305, %v1827, -1e+30
    %v1844 = vsel %vm306, %v1828, -1e+30
    %v1845 = vsel %vm307, %v1829, -1e+30
    %1846 = vmax.xlane.f32.xlu0 %v1830
    %v1847 = vpop.xlane.xlu0 %1846
    %1848 = vmax.xlane.f32.xlu0 %v1831
    %v1849 = vpop.xlane.xlu0 %1848
    %1850 = vmax.xlane.f32.xlu0 %v1832
    %v1851 = vpop.xlane.xlu0 %1850
    %1852 = vmax.xlane.f32.xlu0 %v1833
    %v1853 = vpop.xlane.xlu0 %1852
    %1854 = vmax.xlane.f32.xlu0 %v1834
    %v1855 = vpop.xlane.xlu0 %1854
    %1856 = vmax.xlane.f32.xlu0 %v1835
    %v1857 = vpop.xlane.xlu0 %1856
    %1858 = vmax.xlane.f32.xlu0 %v1836
    %v1859 = vpop.xlane.xlu0 %1858
    %1860 = vmax.xlane.f32.xlu0 %v1837
    %v1861 = vpop.xlane.xlu0 %1860
    %1862 = vmax.xlane.f32.xlu0 %v1838
    %v1863 = vpop.xlane.xlu0 %1862
    %1864 = vmax.xlane.f32.xlu0 %v1839
    %v1865 = vpop.xlane.xlu0 %1864
    %1866 = vmax.xlane.f32.xlu0 %v1840
    %v1867 = vpop.xlane.xlu0 %1866
    %1868 = vmax.xlane.f32.xlu0 %v1841
    %v1869 = vpop.xlane.xlu0 %1868
    %1870 = vmax.xlane.f32.xlu0 %v1842
    %v1871 = vpop.xlane.xlu0 %1870
    %1872 = vmax.xlane.f32.xlu0 %v1843
    %v1873 = vpop.xlane.xlu0 %1872
    %1874 = vmax.xlane.f32.xlu0 %v1844
    %v1875 = vpop.xlane.xlu0 %1874
    %1876 = vmax.xlane.f32.xlu0 %v1845
    %v1877 = vpop.xlane.xlu0 %1876
    %v1878 = vmax.f32 %v324, %v1847
    %v1879 = vmax.f32 %v325, %v1849
    %v1880 = vmax.f32 %v326, %v1851
    %v1881 = vmax.f32 %v327, %v1853
    %v1882 = vmax.f32 %v328, %v1855
    %v1883 = vmax.f32 %v329, %v1857
    %v1884 = vmax.f32 %v330, %v1859
    %v1885 = vmax.f32 %v331, %v1861
    %v1886 = vmax.f32 %v332, %v1863
    %v1887 = vmax.f32 %v333, %v1865
    %v1888 = vmax.f32 %v334, %v1867
    %v1889 = vmax.f32 %v335, %v1869
    %v1890 = vmax.f32 %v336, %v1871
    %v1891 = vmax.f32 %v337, %v1873
    %v1892 = vmax.f32 %v338, %v1875
    %v1893 = vmax.f32 %v339, %v1877
    %v1894 = vsub.f32 %v324, %v1878
    %v1895 = vsub.f32 %v325, %v1879
    %v1896 = vsub.f32 %v326, %v1880
    %v1897 = vsub.f32 %v327, %v1881
    %v1898 = vsub.f32 %v328, %v1882
    %v1899 = vsub.f32 %v329, %v1883
    %v1900 = vsub.f32 %v330, %v1884
    %v1901 = vsub.f32 %v331, %v1885
    %v1902 = vsub.f32 %v332, %v1886
    %v1903 = vsub.f32 %v333, %v1887
    %v1904 = vsub.f32 %v334, %v1888
    %v1905 = vsub.f32 %v335, %v1889
    %v1906 = vsub.f32 %v336, %v1890
    %v1907 = vsub.f32 %v337, %v1891
    %v1908 = vsub.f32 %v338, %v1892
    %v1909 = vsub.f32 %v339, %v1893
    %v1910 = vmul.f32 %v1894, 1.442695
    %v1911 = vpow.pop %v1910
    %v1912 = vmul.f32 %v1895, 1.442695
    %v1913 = vpow.pop %v1912
    %v1914 = vmul.f32 %v1896, 1.442695
    %v1915 = vpow.pop %v1914
    %v1916 = vmul.f32 %v1897, 1.442695
    %v1917 = vpow.pop %v1916
    %v1918 = vmul.f32 %v1898, 1.442695
    %v1919 = vpow.pop %v1918
    %v1920 = vmul.f32 %v1899, 1.442695
    %v1921 = vpow.pop %v1920
    %v1922 = vmul.f32 %v1900, 1.442695
    %v1923 = vpow.pop %v1922
    %v1924 = vmul.f32 %v1901, 1.442695
    %v1925 = vpow.pop %v1924
    %v1926 = vmul.f32 %v1902, 1.442695
    %v1927 = vpow.pop %v1926
    %v1928 = vmul.f32 %v1903, 1.442695
    %v1929 = vpow.pop %v1928
    %v1930 = vmul.f32 %v1904, 1.442695
    %v1931 = vpow.pop %v1930
    %v1932 = vmul.f32 %v1905, 1.442695
    %v1933 = vpow.pop %v1932
    %v1934 = vmul.f32 %v1906, 1.442695
    %v1935 = vpow.pop %v1934
    %v1936 = vmul.f32 %v1907, 1.442695
    %v1937 = vpow.pop %v1936
    %v1938 = vmul.f32 %v1908, 1.442695
    %v1939 = vpow.pop %v1938
    %v1940 = vmul.f32 %v1909, 1.442695
    %v1941 = vpow.pop %v1940
    %1943 = vset.pattern.permute.xlu0 2
    %1944 = vperm.xlu0 %1943, %v1878
    %v1945 = vpop.permute.xlu0 %1944
    %1948 = vset.pattern.permute.xlu0 2
    %1949 = vperm.xlu0 %1948, %v1879
    %v1950 = vpop.permute.xlu0 %1949
    %1953 = vset.pattern.permute.xlu0 2
    %1954 = vperm.xlu0 %1953, %v1880
    %v1955 = vpop.permute.xlu0 %1954
    %1958 = vset.pattern.permute.xlu0 2
    %1959 = vperm.xlu0 %1958, %v1881
    %v1960 = vpop.permute.xlu0 %1959
    %1963 = vset.pattern.permute.xlu0 2
    %1964 = vperm.xlu0 %1963, %v1882
    %v1965 = vpop.permute.xlu0 %1964
    %1968 = vset.pattern.permute.xlu0 2
    %1969 = vperm.xlu0 %1968, %v1883
    %v1970 = vpop.permute.xlu0 %1969
    %1973 = vset.pattern.permute.xlu0 2
    %1974 = vperm.xlu0 %1973, %v1884
    %v1975 = vpop.permute.xlu0 %1974
    %1978 = vset.pattern.permute.xlu0 2
    %1979 = vperm.xlu0 %1978, %v1885
    %v1980 = vpop.permute.xlu0 %1979
    %1983 = vset.pattern.permute.xlu0 2
    %1984 = vperm.xlu0 %1983, %v1886
    %v1985 = vpop.permute.xlu0 %1984
    %1988 = vset.pattern.permute.xlu0 2
    %1989 = vperm.xlu0 %1988, %v1887
    %v1990 = vpop.permute.xlu0 %1989
    %1993 = vset.pattern.permute.xlu0 2
    %1994 = vperm.xlu0 %1993, %v1888
    %v1995 = vpop.permute.xlu0 %1994
    %1998 = vset.pattern.permute.xlu0 2
    %1999 = vperm.xlu0 %1998, %v1889
    %v2000 = vpop.permute.xlu0 %1999
    %2003 = vset.pattern.permute.xlu0 2
    %2004 = vperm.xlu0 %2003, %v1890
    %v2005 = vpop.permute.xlu0 %2004
    %2008 = vset.pattern.permute.xlu0 2
    %2009 = vperm.xlu0 %2008, %v1891
    %v2010 = vpop.permute.xlu0 %2009
    %2013 = vset.pattern.permute.xlu0 2
    %2014 = vperm.xlu0 %2013, %v1892
    %v2015 = vpop.permute.xlu0 %2014
    %2018 = vset.pattern.permute.xlu0 2
    %2019 = vperm.xlu0 %2018, %v1893
    %v2020 = vpop.permute.xlu0 %2019
    %v2022 = vsub.f32 %v1830, %v1945
    %v2023 = vsub.f32 %v1831, %v1950
    %v2024 = vsub.f32 %v1832, %v1955
    %v2025 = vsub.f32 %v1833, %v1960
    %v2026 = vsub.f32 %v1834, %v1965
    %v2027 = vsub.f32 %v1835, %v1970
    %v2028 = vsub.f32 %v1836, %v1975
    %v2029 = vsub.f32 %v1837, %v1980
    %v2030 = vsub.f32 %v1838, %v1985
    %v2031 = vsub.f32 %v1839, %v1990
    %v2032 = vsub.f32 %v1840, %v1995
    %v2033 = vsub.f32 %v1841, %v2000
    %v2034 = vsub.f32 %v1842, %v2005
    %v2035 = vsub.f32 %v1843, %v2010
    %v2036 = vsub.f32 %v1844, %v2015
    %v2037 = vsub.f32 %v1845, %v2020
    %v2038 = vmul.f32 %v2022, 1.442695
    %v2039 = vpow.pop %v2038
    %v2040 = vmul.f32 %v2023, 1.442695
    %v2041 = vpow.pop %v2040
    %v2042 = vmul.f32 %v2024, 1.442695
    %v2043 = vpow.pop %v2042
    %v2044 = vmul.f32 %v2025, 1.442695
    %v2045 = vpow.pop %v2044
    %v2046 = vmul.f32 %v2026, 1.442695
    %v2047 = vpow.pop %v2046
    %v2048 = vmul.f32 %v2027, 1.442695
    %v2049 = vpow.pop %v2048
    %v2050 = vmul.f32 %v2028, 1.442695
    %v2051 = vpow.pop %v2050
    %v2052 = vmul.f32 %v2029, 1.442695
    %v2053 = vpow.pop %v2052
    %v2054 = vmul.f32 %v2030, 1.442695
    %v2055 = vpow.pop %v2054
    %v2056 = vmul.f32 %v2031, 1.442695
    %v2057 = vpow.pop %v2056
    %v2058 = vmul.f32 %v2032, 1.442695
    %v2059 = vpow.pop %v2058
    %v2060 = vmul.f32 %v2033, 1.442695
    %v2061 = vpow.pop %v2060
    %v2062 = vmul.f32 %v2034, 1.442695
    %v2063 = vpow.pop %v2062
    %v2064 = vmul.f32 %v2035, 1.442695
    %v2065 = vpow.pop %v2064
    %v2066 = vmul.f32 %v2036, 1.442695
    %v2067 = vpow.pop %v2066
    %v2068 = vmul.f32 %v2037, 1.442695
    %v2069 = vpow.pop %v2068
    %v2070 = vmul.f32 %v2039, %v95
    %v2071 = vmul.f32 %v2041, %v96
    %v2072 = vmul.f32 %v2043, %v97
    %v2073 = vmul.f32 %v2045, %v98
    %v2074 = vmul.f32 %v2047, %v99
    %v2075 = vmul.f32 %v2049, %v100
    %v2076 = vmul.f32 %v2051, %v101
    %v2077 = vmul.f32 %v2053, %v102
    %v2078 = vmul.f32 %v2055, %v103
    %v2079 = vmul.f32 %v2057, %v104
    %v2080 = vmul.f32 %v2059, %v105
    %v2081 = vmul.f32 %v2061, %v106
    %v2082 = vmul.f32 %v2063, %v107
    %v2083 = vmul.f32 %v2065, %v108
    %v2084 = vmul.f32 %v2067, %v109
    %v2085 = vmul.f32 %v2069, %v110
    %v2086 = vmul.f32 %v1911, %v580
    %v2087 = vmul.f32 %v1913, %v581
    %v2088 = vmul.f32 %v1915, %v582
    %v2089 = vmul.f32 %v1917, %v583
    %v2090 = vmul.f32 %v1919, %v584
    %v2091 = vmul.f32 %v1921, %v585
    %v2092 = vmul.f32 %v1923, %v586
    %v2093 = vmul.f32 %v1925, %v587
    %v2094 = vmul.f32 %v1927, %v588
    %v2095 = vmul.f32 %v1929, %v589
    %v2096 = vmul.f32 %v1931, %v590
    %v2097 = vmul.f32 %v1933, %v591
    %v2098 = vmul.f32 %v1935, %v592
    %v2099 = vmul.f32 %v1937, %v593
    %v2100 = vmul.f32 %v1939, %v594
    %v2101 = vmul.f32 %v1941, %v595
    %2102 = vadd.xlane.f32.xlu0 %v2070
    %v2103 = vpop.xlane.xlu0 %2102
    %2104 = vadd.xlane.f32.xlu0 %v2071
    %v2105 = vpop.xlane.xlu0 %2104
    %2106 = vadd.xlane.f32.xlu0 %v2072
    %v2107 = vpop.xlane.xlu0 %2106
    %2108 = vadd.xlane.f32.xlu0 %v2073
    %v2109 = vpop.xlane.xlu0 %2108
    %2110 = vadd.xlane.f32.xlu0 %v2074
    %v2111 = vpop.xlane.xlu0 %2110
    %2112 = vadd.xlane.f32.xlu0 %v2075
    %v2113 = vpop.xlane.xlu0 %2112
    %2114 = vadd.xlane.f32.xlu0 %v2076
    %v2115 = vpop.xlane.xlu0 %2114
    %2116 = vadd.xlane.f32.xlu0 %v2077
    %v2117 = vpop.xlane.xlu0 %2116
    %2118 = vadd.xlane.f32.xlu0 %v2078
    %v2119 = vpop.xlane.xlu0 %2118
    %2120 = vadd.xlane.f32.xlu0 %v2079
    %v2121 = vpop.xlane.xlu0 %2120
    %2122 = vadd.xlane.f32.xlu0 %v2080
    %v2123 = vpop.xlane.xlu0 %2122
    %2124 = vadd.xlane.f32.xlu0 %v2081
    %v2125 = vpop.xlane.xlu0 %2124
    %2126 = vadd.xlane.f32.xlu0 %v2082
    %v2127 = vpop.xlane.xlu0 %2126
    %2128 = vadd.xlane.f32.xlu0 %v2083
    %v2129 = vpop.xlane.xlu0 %2128
    %2130 = vadd.xlane.f32.xlu0 %v2084
    %v2131 = vpop.xlane.xlu0 %2130
    %2132 = vadd.xlane.f32.xlu0 %v2085
    %v2133 = vpop.xlane.xlu0 %2132
    %v2134 = vadd.f32 %v2086, %v2103
    %v2135 = vadd.f32 %v2087, %v2105
    %v2136 = vadd.f32 %v2088, %v2107
    %v2137 = vadd.f32 %v2089, %v2109
    %v2138 = vadd.f32 %v2090, %v2111
    %v2139 = vadd.f32 %v2091, %v2113
    %v2140 = vadd.f32 %v2092, %v2115
    %v2141 = vadd.f32 %v2093, %v2117
    %v2142 = vadd.f32 %v2094, %v2119
    %v2143 = vadd.f32 %v2095, %v2121
    %v2144 = vadd.f32 %v2096, %v2123
    %v2145 = vadd.f32 %v2097, %v2125
    %v2146 = vadd.f32 %v2098, %v2127
    %v2147 = vadd.f32 %v2099, %v2129
    %v2148 = vadd.f32 %v2100, %v2131
    %v2149 = vadd.f32 %v2101, %v2133
    %v2150 = vpack.c.bf16 %v2071, %v2070
    %v2151 = vpack.c.bf16 %v2073, %v2072
    %v2152 = vpack.c.bf16 %v2075, %v2074
    %v2153 = vpack.c.bf16 %v2077, %v2076
    %v2154 = vpack.c.bf16 %v2079, %v2078
    %v2155 = vpack.c.bf16 %v2081, %v2080
    %v2156 = vpack.c.bf16 %v2083, %v2082
    %v2157 = vpack.c.bf16 %v2085, %v2084
    %2158 = vrot.lane.b32.xlu0 %v700, 64
    %v2159 = vpop.permute.xlu0 %2158
    %2160 = vrot.lane.b32.xlu0 %v701, 64
    %v2161 = vpop.permute.xlu0 %2160
    %2162 = vrot.lane.b32.xlu0 %v702, 64
    %v2163 = vpop.permute.xlu0 %2162
    %2164 = vrot.lane.b32.xlu0 %v703, 64
    %v2165 = vpop.permute.xlu0 %2164
    %2166 = vrot.lane.b32.xlu0 %v704, 64
    %v2167 = vpop.permute.xlu0 %2166
    %2168 = vrot.lane.b32.xlu0 %v705, 64
    %v2169 = vpop.permute.xlu0 %2168
    %2170 = vrot.lane.b32.xlu0 %v706, 64
    %v2171 = vpop.permute.xlu0 %2170
    %2172 = vrot.lane.b32.xlu0 %v707, 64
    %v2173 = vpop.permute.xlu0 %2172
    %2182 = vmatprep.subr.bf16.mxu0 0
    %2183 = vmatpush1.bf16.msra.mxu0 %v2159
    %2184 = vmatprep.subr.bf16.mxu0 0
    %2185 = vmatpush1.bf16.msra.mxu0 %v2161
    %2186 = vmatprep.subr.bf16.mxu0 0
    %2187 = vmatpush1.bf16.msra.mxu0 %v2163
    %2188 = vmatprep.subr.bf16.mxu0 0
    %2189 = vmatpush1.bf16.msra.mxu0 %v2165
    %2190 = vmatprep.subr.bf16.mxu0 0
    %2191 = vmatpush1.bf16.msra.mxu0 %v2167
    %2192 = vmatprep.subr.bf16.mxu0 0
    %2193 = vmatpush1.bf16.msra.mxu0 %v2169
    %2194 = vmatprep.subr.bf16.mxu0 0
    %2195 = vmatpush1.bf16.msra.mxu0 %v2171
    %2196 = vmatprep.subr.bf16.mxu0 0
    %2197 = vmatpush1.bf16.msra.mxu0 %v2173
    %2198 = vmatprep.subr.bf16.mxu0 0
    %2199 = vmatpush1.bf16.msra.mxu0 0
    %2200 = vmatprep.subr.bf16.mxu0 0
    %2201 = vmatpush1.bf16.msra.mxu0 0
    %2202 = vmatprep.subr.bf16.mxu0 0
    %2203 = vmatpush1.bf16.msra.mxu0 0
    %2204 = vmatprep.subr.bf16.mxu0 0
    %2205 = vmatpush1.bf16.msra.mxu0 0
    %2206 = vmatprep.subr.bf16.mxu0 0
    %2207 = vmatpush1.bf16.msra.mxu0 0
    %2208 = vmatprep.subr.bf16.mxu0 0
    %2209 = vmatpush1.bf16.msra.mxu0 0
    %2210 = vmatprep.subr.bf16.mxu0 0
    %2211 = vmatpush1.bf16.msra.mxu0 0
    %2212 = vmatprep.subr.bf16.mxu0 0
    %2213 = vmatpush1.bf16.msra.mxu0 0
    %2214 = vmatprep.mubr.bf16.mxu0 0
    %2215 = vmatmul.mubr.bf16.gmra.mrb[0].mxu0 %v2150
    %v2216 = vpop.f32.mrb[0].mxu0
    %v2217 = vadd.f32 0.0, %v2216
    %v2218 = vpop.f32.mrb[0].mxu0
    %v2219 = vpop.f32.mrb[0].mxu0
    %v2220 = vadd.f32 0.0, %v2219
    %v2221 = vpop.f32.mrb[0].mxu0
    %2222 = vmatprep.mubr.bf16.mxu0 0
    %2223 = vmatmul.mubr.bf16.gmra.mrb[0].mxu0 %v2151
    %v2224 = vpop.f32.mrb[0].mxu0
    %v2225 = vadd.f32 0.0, %v2224
    %v2226 = vpop.f32.mrb[0].mxu0
    %v2227 = vpop.f32.mrb[0].mxu0
    %v2228 = vadd.f32 0.0, %v2227
    %v2229 = vpop.f32.mrb[0].mxu0
    %2230 = vmatprep.mubr.bf16.mxu0 0
    %2231 = vmatmul.mubr.bf16.gmra.mrb[0].mxu0 %v2152
    %v2232 = vpop.f32.mrb[0].mxu0
    %v2233 = vadd.f32 0.0, %v2232
    %v2234 = vpop.f32.mrb[0].mxu0
    %v2235 = vpop.f32.mrb[0].mxu0
    %v2236 = vadd.f32 0.0, %v2235
    %v2237 = vpop.f32.mrb[0].mxu0
    %2238 = vmatprep.mubr.bf16.mxu0 0
    %2239 = vmatmul.mubr.bf16.gmra.mrb[0].mxu0 %v2153
    %v2240 = vpop.f32.mrb[0].mxu0
    %v2241 = vadd.f32 0.0, %v2240
    %v2242 = vpop.f32.mrb[0].mxu0
    %v2243 = vpop.f32.mrb[0].mxu0
    %v2244 = vadd.f32 0.0, %v2243
    %v2245 = vpop.f32.mrb[0].mxu0
    %2246 = vmatprep.mubr.bf16.mxu0 0
    %2247 = vmatmul.mubr.bf16.gmra.mrb[0].mxu0 %v2154
    %v2248 = vpop.f32.mrb[0].mxu0
    %v2249 = vadd.f32 0.0, %v2248
    %v2250 = vpop.f32.mrb[0].mxu0
    %v2251 = vpop.f32.mrb[0].mxu0
    %v2252 = vadd.f32 0.0, %v2251
    %v2253 = vpop.f32.mrb[0].mxu0
    %2254 = vmatprep.mubr.bf16.mxu0 0
    %2255 = vmatmul.mubr.bf16.gmra.mrb[0].mxu0 %v2155
    %v2256 = vpop.f32.mrb[0].mxu0
    %v2257 = vadd.f32 0.0, %v2256
    %v2258 = vpop.f32.mrb[0].mxu0
    %v2259 = vpop.f32.mrb[0].mxu0
    %v2260 = vadd.f32 0.0, %v2259
    %v2261 = vpop.f32.mrb[0].mxu0
    %2262 = vmatprep.mubr.bf16.mxu0 0
    %2263 = vmatmul.mubr.bf16.gmra.mrb[0].mxu0 %v2156
    %v2264 = vpop.f32.mrb[0].mxu0
    %v2265 = vadd.f32 0.0, %v2264
    %v2266 = vpop.f32.mrb[0].mxu0
    %v2267 = vpop.f32.mrb[0].mxu0
    %v2268 = vadd.f32 0.0, %v2267
    %v2269 = vpop.f32.mrb[0].mxu0
    %2270 = vmatprep.mubr.bf16.mxu0 0
    %2271 = vmatmul.mubr.bf16.gmra.mrb[0].mxu0 %v2157
    %v2272 = vpop.f32.mrb[0].mxu0
    %v2273 = vadd.f32 0.0, %v2272
    %v2274 = vpop.f32.mrb[0].mxu0
    %v2275 = vpop.f32.mrb[0].mxu0
    %v2276 = vadd.f32 0.0, %v2275
    %v2277 = vpop.f32.mrb[0].mxu0
    %2278 = vdwg.mxu0
    %2280 = vset.pattern.permute.xlu0 2
    %2281 = vperm.xlu0 %2280, %v1911
    %v2282 = vpop.permute.xlu0 %2281
    %2285 = vset.pattern.permute.xlu0 2
    %2286 = vperm.xlu0 %2285, %v1913
    %v2287 = vpop.permute.xlu0 %2286
    %2290 = vset.pattern.permute.xlu0 2
    %2291 = vperm.xlu0 %2290, %v1915
    %v2292 = vpop.permute.xlu0 %2291
    %2295 = vset.pattern.permute.xlu0 2
    %2296 = vperm.xlu0 %2295, %v1917
    %v2297 = vpop.permute.xlu0 %2296
    %2300 = vset.pattern.permute.xlu0 2
    %2301 = vperm.xlu0 %2300, %v1919
    %v2302 = vpop.permute.xlu0 %2301
    %2305 = vset.pattern.permute.xlu0 2
    %2306 = vperm.xlu0 %2305, %v1921
    %v2307 = vpop.permute.xlu0 %2306
    %2310 = vset.pattern.permute.xlu0 2
    %2311 = vperm.xlu0 %2310, %v1923
    %v2312 = vpop.permute.xlu0 %2311
    %2315 = vset.pattern.permute.xlu0 2
    %2316 = vperm.xlu0 %2315, %v1925
    %v2317 = vpop.permute.xlu0 %2316
    %2320 = vset.pattern.permute.xlu0 2
    %2321 = vperm.xlu0 %2320, %v1927
    %v2322 = vpop.permute.xlu0 %2321
    %2325 = vset.pattern.permute.xlu0 2
    %2326 = vperm.xlu0 %2325, %v1929
    %v2327 = vpop.permute.xlu0 %2326
    %2330 = vset.pattern.permute.xlu0 2
    %2331 = vperm.xlu0 %2330, %v1931
    %v2332 = vpop.permute.xlu0 %2331
    %2335 = vset.pattern.permute.xlu0 2
    %2336 = vperm.xlu0 %2335, %v1933
    %v2337 = vpop.permute.xlu0 %2336
    %2340 = vset.pattern.permute.xlu0 2
    %2341 = vperm.xlu0 %2340, %v1935
    %v2342 = vpop.permute.xlu0 %2341
    %2345 = vset.pattern.permute.xlu0 2
    %2346 = vperm.xlu0 %2345, %v1937
    %v2347 = vpop.permute.xlu0 %2346
    %2350 = vset.pattern.permute.xlu0 2
    %2351 = vperm.xlu0 %2350, %v1939
    %v2352 = vpop.permute.xlu0 %2351
    %2355 = vset.pattern.permute.xlu0 2
    %2356 = vperm.xlu0 %2355, %v1941
    %v2357 = vpop.permute.xlu0 %2356
    %v2359 = vmul.f32 %v2282, %v813
    %v2360 = vmul.f32 %v2287, %v814
    %v2361 = vmul.f32 %v2292, %v815
    %v2362 = vmul.f32 %v2297, %v816
    %v2363 = vmul.f32 %v2302, %v817
    %v2364 = vmul.f32 %v2307, %v818
    %v2365 = vmul.f32 %v2312, %v819
    %v2366 = vmul.f32 %v2317, %v820
    %v2367 = vmul.f32 %v2322, %v821
    %v2368 = vmul.f32 %v2327, %v822
    %v2369 = vmul.f32 %v2332, %v823
    %v2370 = vmul.f32 %v2337, %v824
    %v2371 = vmul.f32 %v2342, %v825
    %v2372 = vmul.f32 %v2347, %v826
    %v2373 = vmul.f32 %v2352, %v827
    %v2374 = vmul.f32 %v2357, %v828
    %2391 = vrot.lane.b32.xlu0 %v2217, 64
    %v2392 = vpop.permute.xlu0 %2391
    %2393 = vrot.lane.b32.xlu0 %v2220, 64
    %v2394 = vpop.permute.xlu0 %2393
    %2395 = vrot.lane.b32.xlu0 %v2225, 64
    %v2396 = vpop.permute.xlu0 %2395
    %2397 = vrot.lane.b32.xlu0 %v2228, 64
    %v2398 = vpop.permute.xlu0 %2397
    %2399 = vrot.lane.b32.xlu0 %v2233, 64
    %v2400 = vpop.permute.xlu0 %2399
    %2401 = vrot.lane.b32.xlu0 %v2236, 64
    %v2402 = vpop.permute.xlu0 %2401
    %2403 = vrot.lane.b32.xlu0 %v2241, 64
    %v2404 = vpop.permute.xlu0 %2403
    %2405 = vrot.lane.b32.xlu0 %v2244, 64
    %v2406 = vpop.permute.xlu0 %2405
    %2407 = vrot.lane.b32.xlu0 %v2249, 64
    %v2408 = vpop.permute.xlu0 %2407
    %2409 = vrot.lane.b32.xlu0 %v2252, 64
    %v2410 = vpop.permute.xlu0 %2409
    %2411 = vrot.lane.b32.xlu0 %v2257, 64
    %v2412 = vpop.permute.xlu0 %2411
    %2413 = vrot.lane.b32.xlu0 %v2260, 64
    %v2414 = vpop.permute.xlu0 %2413
    %2415 = vrot.lane.b32.xlu0 %v2265, 64
    %v2416 = vpop.permute.xlu0 %2415
    %2417 = vrot.lane.b32.xlu0 %v2268, 64
    %v2418 = vpop.permute.xlu0 %2417
    %2419 = vrot.lane.b32.xlu0 %v2273, 64
    %v2420 = vpop.permute.xlu0 %2419
    %2421 = vrot.lane.b32.xlu0 %v2276, 64
    %v2422 = vpop.permute.xlu0 %2421
    %v2439 = vadd.f32 %v2359, %v2392
    %v2440 = vadd.f32 %v2360, %v2394
    %v2441 = vadd.f32 %v2361, %v2396
    %v2442 = vadd.f32 %v2362, %v2398
    %v2443 = vadd.f32 %v2363, %v2400
    %v2444 = vadd.f32 %v2364, %v2402
    %v2445 = vadd.f32 %v2365, %v2404
    %v2446 = vadd.f32 %v2366, %v2406
    %v2447 = vadd.f32 %v2367, %v2408
    %v2448 = vadd.f32 %v2368, %v2410
    %v2449 = vadd.f32 %v2369, %v2412
    %v2450 = vadd.f32 %v2370, %v2414
    %v2451 = vadd.f32 %v2371, %v2416
    %v2452 = vadd.f32 %v2372, %v2418
    %v2453 = vadd.f32 %v2373, %v2420
    %v2454 = vadd.f32 %v2374, %v2422
    %2455 = vset.pattern.permute.xlu0 3
    %2456 = vperm.xlu0 %2455, %v111
    %v2457 = vpop.permute.xlu0 %2456
    %2459 = vset.pattern.permute.xlu0 3
    %2460 = vperm.xlu0 %2459, %v112
    %v2461 = vpop.permute.xlu0 %2460
    %2463 = vset.pattern.permute.xlu0 3
    %2464 = vperm.xlu0 %2463, %v113
    %v2465 = vpop.permute.xlu0 %2464
    %2467 = vset.pattern.permute.xlu0 3
    %2468 = vperm.xlu0 %2467, %v114
    %v2469 = vpop.permute.xlu0 %2468
    %2471 = vset.pattern.permute.xlu0 3
    %2472 = vperm.xlu0 %2471, %v115
    %v2473 = vpop.permute.xlu0 %2472
    %2475 = vset.pattern.permute.xlu0 3
    %2476 = vperm.xlu0 %2475, %v116
    %v2477 = vpop.permute.xlu0 %2476
    %2479 = vset.pattern.permute.xlu0 3
    %2480 = vperm.xlu0 %2479, %v117
    %v2481 = vpop.permute.xlu0 %2480
    %2483 = vset.pattern.permute.xlu0 3
    %2484 = vperm.xlu0 %2483, %v118
    %v2485 = vpop.permute.xlu0 %2484
    %2487 = vset.pattern.permute.xlu0 3
    %2488 = vperm.xlu0 %2487, %v119
    %v2489 = vpop.permute.xlu0 %2488
    %2491 = vset.pattern.permute.xlu0 3
    %2492 = vperm.xlu0 %2491, %v120
    %v2493 = vpop.permute.xlu0 %2492
    %2495 = vset.pattern.permute.xlu0 3
    %2496 = vperm.xlu0 %2495, %v121
    %v2497 = vpop.permute.xlu0 %2496
    %2499 = vset.pattern.permute.xlu0 3
    %2500 = vperm.xlu0 %2499, %v122
    %v2501 = vpop.permute.xlu0 %2500
    %2503 = vset.pattern.permute.xlu0 3
    %2504 = vperm.xlu0 %2503, %v123
    %v2505 = vpop.permute.xlu0 %2504
    %2507 = vset.pattern.permute.xlu0 3
    %2508 = vperm.xlu0 %2507, %v124
    %v2509 = vpop.permute.xlu0 %2508
    %2511 = vset.pattern.permute.xlu0 3
    %2512 = vperm.xlu0 %2511, %v125
    %v2513 = vpop.permute.xlu0 %2512
    %2515 = vset.pattern.permute.xlu0 3
    %2516 = vperm.xlu0 %2515, %v126
    %v2517 = vpop.permute.xlu0 %2516
    %v2519 = vlaneseq
    %v2520 = vshrl.u32 %v2519, 7
    %v2521 = vsub.s32 3, %v2520
    %v2522 = vrot.slane %v127, %v2521
    %v2523 = vadd.f32 %v2457, %v2522
    %v2524 = vadd.f32 %v2461, %v2522
    %v2525 = vadd.f32 %v2465, %v2522
    %v2526 = vadd.f32 %v2469, %v2522
    %v2527 = vadd.f32 %v2473, %v2522
    %v2528 = vadd.f32 %v2477, %v2522
    %v2529 = vadd.f32 %v2481, %v2522
    %v2530 = vadd.f32 %v2485, %v2522
    %v2531 = vadd.f32 %v2489, %v2522
    %v2532 = vadd.f32 %v2493, %v2522
    %v2533 = vadd.f32 %v2497, %v2522
    %v2534 = vadd.f32 %v2501, %v2522
    %v2535 = vadd.f32 %v2505, %v2522
    %v2536 = vadd.f32 %v2509, %v2522
    %v2537 = vadd.f32 %v2513, %v2522
    %v2538 = vadd.f32 %v2517, %v2522
    %vm2539 = vcmp.gt.f32.partialorder %v2523, 0.0
    %vm2540 = vcmp.gt.f32.partialorder %v2524, 0.0
    %vm2541 = vcmp.gt.f32.partialorder %v2525, 0.0
    %vm2542 = vcmp.gt.f32.partialorder %v2526, 0.0
    %vm2543 = vcmp.gt.f32.partialorder %v2527, 0.0
    %vm2544 = vcmp.gt.f32.partialorder %v2528, 0.0
    %vm2545 = vcmp.gt.f32.partialorder %v2529, 0.0
    %vm2546 = vcmp.gt.f32.partialorder %v2530, 0.0
    %vm2547 = vcmp.gt.f32.partialorder %v2531, 0.0
    %vm2548 = vcmp.gt.f32.partialorder %v2532, 0.0
    %vm2549 = vcmp.gt.f32.partialorder %v2533, 0.0
    %vm2550 = vcmp.gt.f32.partialorder %v2534, 0.0
    %vm2551 = vcmp.gt.f32.partialorder %v2535, 0.0
    %vm2552 = vcmp.gt.f32.partialorder %v2536, 0.0
    %vm2553 = vcmp.gt.f32.partialorder %v2537, 0.0
    %vm2554 = vcmp.gt.f32.partialorder %v2538, 0.0
    %v2555 = vmul.f32 %v2523, 0.2
    %v2556 = vmul.f32 %v2524, 0.2
    %v2557 = vmul.f32 %v2525, 0.2
    %v2558 = vmul.f32 %v2526, 0.2
    %v2559 = vmul.f32 %v2527, 0.2
    %v2560 = vmul.f32 %v2528, 0.2
    %v2561 = vmul.f32 %v2529, 0.2
    %v2562 = vmul.f32 %v2530, 0.2
    %v2563 = vmul.f32 %v2531, 0.2
    %v2564 = vmul.f32 %v2532, 0.2
    %v2565 = vmul.f32 %v2533, 0.2
    %v2566 = vmul.f32 %v2534, 0.2
    %v2567 = vmul.f32 %v2535, 0.2
    %v2568 = vmul.f32 %v2536, 0.2
    %v2569 = vmul.f32 %v2537, 0.2
    %v2570 = vmul.f32 %v2538, 0.2
    %v2571 = vsel %vm2539, %v2523, %v2555
    %v2572 = vsel %vm2540, %v2524, %v2556
    %v2573 = vsel %vm2541, %v2525, %v2557
    %v2574 = vsel %vm2542, %v2526, %v2558
    %v2575 = vsel %vm2543, %v2527, %v2559
    %v2576 = vsel %vm2544, %v2528, %v2560
    %v2577 = vsel %vm2545, %v2529, %v2561
    %v2578 = vsel %vm2546, %v2530, %v2562
    %v2579 = vsel %vm2547, %v2531, %v2563
    %v2580 = vsel %vm2548, %v2532, %v2564
    %v2581 = vsel %vm2549, %v2533, %v2565
    %v2582 = vsel %vm2550, %v2534, %v2566
    %v2583 = vsel %vm2551, %v2535, %v2567
    %v2584 = vsel %vm2552, %v2536, %v2568
    %v2585 = vsel %vm2553, %v2537, %v2569
    %v2586 = vsel %vm2554, %v2538, %v2570
    %v2587 = vsel %vm292, %v2571, -1e+30
    %v2588 = vsel %vm293, %v2572, -1e+30
    %v2589 = vsel %vm294, %v2573, -1e+30
    %v2590 = vsel %vm295, %v2574, -1e+30
    %v2591 = vsel %vm296, %v2575, -1e+30
    %v2592 = vsel %vm297, %v2576, -1e+30
    %v2593 = vsel %vm298, %v2577, -1e+30
    %v2594 = vsel %vm299, %v2578, -1e+30
    %v2595 = vsel %vm300, %v2579, -1e+30
    %v2596 = vsel %vm301, %v2580, -1e+30
    %v2597 = vsel %vm302, %v2581, -1e+30
    %v2598 = vsel %vm303, %v2582, -1e+30
    %v2599 = vsel %vm304, %v2583, -1e+30
    %v2600 = vsel %vm305, %v2584, -1e+30
    %v2601 = vsel %vm306, %v2585, -1e+30
    %v2602 = vsel %vm307, %v2586, -1e+30
    %2603 = vmax.xlane.f32.xlu0 %v2587
    %v2604 = vpop.xlane.xlu0 %2603
    %2605 = vmax.xlane.f32.xlu0 %v2588
    %v2606 = vpop.xlane.xlu0 %2605
    %2607 = vmax.xlane.f32.xlu0 %v2589
    %v2608 = vpop.xlane.xlu0 %2607
    %2609 = vmax.xlane.f32.xlu0 %v2590
    %v2610 = vpop.xlane.xlu0 %2609
    %2611 = vmax.xlane.f32.xlu0 %v2591
    %v2612 = vpop.xlane.xlu0 %2611
    %2613 = vmax.xlane.f32.xlu0 %v2592
    %v2614 = vpop.xlane.xlu0 %2613
    %2615 = vmax.xlane.f32.xlu0 %v2593
    %v2616 = vpop.xlane.xlu0 %2615
    %2617 = vmax.xlane.f32.xlu0 %v2594
    %v2618 = vpop.xlane.xlu0 %2617
    %2619 = vmax.xlane.f32.xlu0 %v2595
    %v2620 = vpop.xlane.xlu0 %2619
    %2621 = vmax.xlane.f32.xlu0 %v2596
    %v2622 = vpop.xlane.xlu0 %2621
    %2623 = vmax.xlane.f32.xlu0 %v2597
    %v2624 = vpop.xlane.xlu0 %2623
    %2625 = vmax.xlane.f32.xlu0 %v2598
    %v2626 = vpop.xlane.xlu0 %2625
    %2627 = vmax.xlane.f32.xlu0 %v2599
    %v2628 = vpop.xlane.xlu0 %2627
    %2629 = vmax.xlane.f32.xlu0 %v2600
    %v2630 = vpop.xlane.xlu0 %2629
    %2631 = vmax.xlane.f32.xlu0 %v2601
    %v2632 = vpop.xlane.xlu0 %2631
    %2633 = vmax.xlane.f32.xlu0 %v2602
    %v2634 = vpop.xlane.xlu0 %2633
    %v2635 = vmax.f32 %v324, %v2604
    %v2636 = vmax.f32 %v325, %v2606
    %v2637 = vmax.f32 %v326, %v2608
    %v2638 = vmax.f32 %v327, %v2610
    %v2639 = vmax.f32 %v328, %v2612
    %v2640 = vmax.f32 %v329, %v2614
    %v2641 = vmax.f32 %v330, %v2616
    %v2642 = vmax.f32 %v331, %v2618
    %v2643 = vmax.f32 %v332, %v2620
    %v2644 = vmax.f32 %v333, %v2622
    %v2645 = vmax.f32 %v334, %v2624
    %v2646 = vmax.f32 %v335, %v2626
    %v2647 = vmax.f32 %v336, %v2628
    %v2648 = vmax.f32 %v337, %v2630
    %v2649 = vmax.f32 %v338, %v2632
    %v2650 = vmax.f32 %v339, %v2634
    %v2651 = vsub.f32 %v324, %v2635
    %v2652 = vsub.f32 %v325, %v2636
    %v2653 = vsub.f32 %v326, %v2637
    %v2654 = vsub.f32 %v327, %v2638
    %v2655 = vsub.f32 %v328, %v2639
    %v2656 = vsub.f32 %v329, %v2640
    %v2657 = vsub.f32 %v330, %v2641
    %v2658 = vsub.f32 %v331, %v2642
    %v2659 = vsub.f32 %v332, %v2643
    %v2660 = vsub.f32 %v333, %v2644
    %v2661 = vsub.f32 %v334, %v2645
    %v2662 = vsub.f32 %v335, %v2646
    %v2663 = vsub.f32 %v336, %v2647
    %v2664 = vsub.f32 %v337, %v2648
    %v2665 = vsub.f32 %v338, %v2649
    %v2666 = vsub.f32 %v339, %v2650
    %v2667 = vmul.f32 %v2651, 1.442695
    %v2668 = vpow.pop %v2667
    %v2669 = vmul.f32 %v2652, 1.442695
    %v2670 = vpow.pop %v2669
    %v2671 = vmul.f32 %v2653, 1.442695
    %v2672 = vpow.pop %v2671
    %v2673 = vmul.f32 %v2654, 1.442695
    %v2674 = vpow.pop %v2673
    %v2675 = vmul.f32 %v2655, 1.442695
    %v2676 = vpow.pop %v2675
    %v2677 = vmul.f32 %v2656, 1.442695
    %v2678 = vpow.pop %v2677
    %v2679 = vmul.f32 %v2657, 1.442695
    %v2680 = vpow.pop %v2679
    %v2681 = vmul.f32 %v2658, 1.442695
    %v2682 = vpow.pop %v2681
    %v2683 = vmul.f32 %v2659, 1.442695
    %v2684 = vpow.pop %v2683
    %v2685 = vmul.f32 %v2660, 1.442695
    %v2686 = vpow.pop %v2685
    %v2687 = vmul.f32 %v2661, 1.442695
    %v2688 = vpow.pop %v2687
    %v2689 = vmul.f32 %v2662, 1.442695
    %v2690 = vpow.pop %v2689
    %v2691 = vmul.f32 %v2663, 1.442695
    %v2692 = vpow.pop %v2691
    %v2693 = vmul.f32 %v2664, 1.442695
    %v2694 = vpow.pop %v2693
    %v2695 = vmul.f32 %v2665, 1.442695
    %v2696 = vpow.pop %v2695
    %v2697 = vmul.f32 %v2666, 1.442695
    %v2698 = vpow.pop %v2697
    %2700 = vset.pattern.permute.xlu0 3
    %2701 = vperm.xlu0 %2700, %v2635
    %v2702 = vpop.permute.xlu0 %2701
    %2705 = vset.pattern.permute.xlu0 3
    %2706 = vperm.xlu0 %2705, %v2636
    %v2707 = vpop.permute.xlu0 %2706
    %2710 = vset.pattern.permute.xlu0 3
    %2711 = vperm.xlu0 %2710, %v2637
    %v2712 = vpop.permute.xlu0 %2711
    %2715 = vset.pattern.permute.xlu0 3
    %2716 = vperm.xlu0 %2715, %v2638
    %v2717 = vpop.permute.xlu0 %2716
    %2720 = vset.pattern.permute.xlu0 3
    %2721 = vperm.xlu0 %2720, %v2639
    %v2722 = vpop.permute.xlu0 %2721
    %2725 = vset.pattern.permute.xlu0 3
    %2726 = vperm.xlu0 %2725, %v2640
    %v2727 = vpop.permute.xlu0 %2726
    %2730 = vset.pattern.permute.xlu0 3
    %2731 = vperm.xlu0 %2730, %v2641
    %v2732 = vpop.permute.xlu0 %2731
    %2735 = vset.pattern.permute.xlu0 3
    %2736 = vperm.xlu0 %2735, %v2642
    %v2737 = vpop.permute.xlu0 %2736
    %2740 = vset.pattern.permute.xlu0 3
    %2741 = vperm.xlu0 %2740, %v2643
    %v2742 = vpop.permute.xlu0 %2741
    %2745 = vset.pattern.permute.xlu0 3
    %2746 = vperm.xlu0 %2745, %v2644
    %v2747 = vpop.permute.xlu0 %2746
    %2750 = vset.pattern.permute.xlu0 3
    %2751 = vperm.xlu0 %2750, %v2645
    %v2752 = vpop.permute.xlu0 %2751
    %2755 = vset.pattern.permute.xlu0 3
    %2756 = vperm.xlu0 %2755, %v2646
    %v2757 = vpop.permute.xlu0 %2756
    %2760 = vset.pattern.permute.xlu0 3
    %2761 = vperm.xlu0 %2760, %v2647
    %v2762 = vpop.permute.xlu0 %2761
    %2765 = vset.pattern.permute.xlu0 3
    %2766 = vperm.xlu0 %2765, %v2648
    %v2767 = vpop.permute.xlu0 %2766
    %2770 = vset.pattern.permute.xlu0 3
    %2771 = vperm.xlu0 %2770, %v2649
    %v2772 = vpop.permute.xlu0 %2771
    %2775 = vset.pattern.permute.xlu0 3
    %2776 = vperm.xlu0 %2775, %v2650
    %v2777 = vpop.permute.xlu0 %2776
    %v2779 = vsub.f32 %v2587, %v2702
    %v2780 = vsub.f32 %v2588, %v2707
    %v2781 = vsub.f32 %v2589, %v2712
    %v2782 = vsub.f32 %v2590, %v2717
    %v2783 = vsub.f32 %v2591, %v2722
    %v2784 = vsub.f32 %v2592, %v2727
    %v2785 = vsub.f32 %v2593, %v2732
    %v2786 = vsub.f32 %v2594, %v2737
    %v2787 = vsub.f32 %v2595, %v2742
    %v2788 = vsub.f32 %v2596, %v2747
    %v2789 = vsub.f32 %v2597, %v2752
    %v2790 = vsub.f32 %v2598, %v2757
    %v2791 = vsub.f32 %v2599, %v2762
    %v2792 = vsub.f32 %v2600, %v2767
    %v2793 = vsub.f32 %v2601, %v2772
    %v2794 = vsub.f32 %v2602, %v2777
    %v2795 = vmul.f32 %v2779, 1.442695
    %v2796 = vpow.pop %v2795
    %v2797 = vmul.f32 %v2780, 1.442695
    %v2798 = vpow.pop %v2797
    %v2799 = vmul.f32 %v2781, 1.442695
    %v2800 = vpow.pop %v2799
    %v2801 = vmul.f32 %v2782, 1.442695
    %v2802 = vpow.pop %v2801
    %v2803 = vmul.f32 %v2783, 1.442695
    %v2804 = vpow.pop %v2803
    %v2805 = vmul.f32 %v2784, 1.442695
    %v2806 = vpow.pop %v2805
    %v2807 = vmul.f32 %v2785, 1.442695
    %v2808 = vpow.pop %v2807
    %v2809 = vmul.f32 %v2786, 1.442695
    %v2810 = vpow.pop %v2809
    %v2811 = vmul.f32 %v2787, 1.442695
    %v2812 = vpow.pop %v2811
    %v2813 = vmul.f32 %v2788, 1.442695
    %v2814 = vpow.pop %v2813
    %v2815 = vmul.f32 %v2789, 1.442695
    %v2816 = vpow.pop %v2815
    %v2817 = vmul.f32 %v2790, 1.442695
    %v2818 = vpow.pop %v2817
    %v2819 = vmul.f32 %v2791, 1.442695
    %v2820 = vpow.pop %v2819
    %v2821 = vmul.f32 %v2792, 1.442695
    %v2822 = vpow.pop %v2821
    %v2823 = vmul.f32 %v2793, 1.442695
    %v2824 = vpow.pop %v2823
    %v2825 = vmul.f32 %v2794, 1.442695
    %v2826 = vpow.pop %v2825
    %v2827 = vmul.f32 %v2796, %v95
    %v2828 = vmul.f32 %v2798, %v96
    %v2829 = vmul.f32 %v2800, %v97
    %v2830 = vmul.f32 %v2802, %v98
    %v2831 = vmul.f32 %v2804, %v99
    %v2832 = vmul.f32 %v2806, %v100
    %v2833 = vmul.f32 %v2808, %v101
    %v2834 = vmul.f32 %v2810, %v102
    %v2835 = vmul.f32 %v2812, %v103
    %v2836 = vmul.f32 %v2814, %v104
    %v2837 = vmul.f32 %v2816, %v105
    %v2838 = vmul.f32 %v2818, %v106
    %v2839 = vmul.f32 %v2820, %v107
    %v2840 = vmul.f32 %v2822, %v108
    %v2841 = vmul.f32 %v2824, %v109
    %v2842 = vmul.f32 %v2826, %v110
    %v2843 = vmul.f32 %v2668, %v580
    %v2844 = vmul.f32 %v2670, %v581
    %v2845 = vmul.f32 %v2672, %v582
    %v2846 = vmul.f32 %v2674, %v583
    %v2847 = vmul.f32 %v2676, %v584
    %v2848 = vmul.f32 %v2678, %v585
    %v2849 = vmul.f32 %v2680, %v586
    %v2850 = vmul.f32 %v2682, %v587
    %v2851 = vmul.f32 %v2684, %v588
    %v2852 = vmul.f32 %v2686, %v589
    %v2853 = vmul.f32 %v2688, %v590
    %v2854 = vmul.f32 %v2690, %v591
    %v2855 = vmul.f32 %v2692, %v592
    %v2856 = vmul.f32 %v2694, %v593
    %v2857 = vmul.f32 %v2696, %v594
    %v2858 = vmul.f32 %v2698, %v595
    %2859 = vadd.xlane.f32.xlu0 %v2827
    %v2860 = vpop.xlane.xlu0 %2859
    %2861 = vadd.xlane.f32.xlu0 %v2828
    %v2862 = vpop.xlane.xlu0 %2861
    %2863 = vadd.xlane.f32.xlu0 %v2829
    %v2864 = vpop.xlane.xlu0 %2863
    %2865 = vadd.xlane.f32.xlu0 %v2830
    %v2866 = vpop.xlane.xlu0 %2865
    %2867 = vadd.xlane.f32.xlu0 %v2831
    %v2868 = vpop.xlane.xlu0 %2867
    %2869 = vadd.xlane.f32.xlu0 %v2832
    %v2870 = vpop.xlane.xlu0 %2869
    %2871 = vadd.xlane.f32.xlu0 %v2833
    %v2872 = vpop.xlane.xlu0 %2871
    %2873 = vadd.xlane.f32.xlu0 %v2834
    %v2874 = vpop.xlane.xlu0 %2873
    %2875 = vadd.xlane.f32.xlu0 %v2835
    %v2876 = vpop.xlane.xlu0 %2875
    %2877 = vadd.xlane.f32.xlu0 %v2836
    %v2878 = vpop.xlane.xlu0 %2877
    %2879 = vadd.xlane.f32.xlu0 %v2837
    %v2880 = vpop.xlane.xlu0 %2879
    %2881 = vadd.xlane.f32.xlu0 %v2838
    %v2882 = vpop.xlane.xlu0 %2881
    %2883 = vadd.xlane.f32.xlu0 %v2839
    %v2884 = vpop.xlane.xlu0 %2883
    %2885 = vadd.xlane.f32.xlu0 %v2840
    %v2886 = vpop.xlane.xlu0 %2885
    %2887 = vadd.xlane.f32.xlu0 %v2841
    %v2888 = vpop.xlane.xlu0 %2887
    %2889 = vadd.xlane.f32.xlu0 %v2842
    %v2890 = vpop.xlane.xlu0 %2889
    %v2891 = vadd.f32 %v2843, %v2860
    %v2892 = vadd.f32 %v2844, %v2862
    %v2893 = vadd.f32 %v2845, %v2864
    %v2894 = vadd.f32 %v2846, %v2866
    %v2895 = vadd.f32 %v2847, %v2868
    %v2896 = vadd.f32 %v2848, %v2870
    %v2897 = vadd.f32 %v2849, %v2872
    %v2898 = vadd.f32 %v2850, %v2874
    %v2899 = vadd.f32 %v2851, %v2876
    %v2900 = vadd.f32 %v2852, %v2878
    %v2901 = vadd.f32 %v2853, %v2880
    %v2902 = vadd.f32 %v2854, %v2882
    %v2903 = vadd.f32 %v2855, %v2884
    %v2904 = vadd.f32 %v2856, %v2886
    %v2905 = vadd.f32 %v2857, %v2888
    %v2906 = vadd.f32 %v2858, %v2890
    %v2907 = vpack.c.bf16 %v2828, %v2827
    %v2908 = vpack.c.bf16 %v2830, %v2829
    %v2909 = vpack.c.bf16 %v2832, %v2831
    %v2910 = vpack.c.bf16 %v2834, %v2833
    %v2911 = vpack.c.bf16 %v2836, %v2835
    %v2912 = vpack.c.bf16 %v2838, %v2837
    %v2913 = vpack.c.bf16 %v2840, %v2839
    %v2914 = vpack.c.bf16 %v2842, %v2841
    %2915 = vrot.lane.b32.xlu0 %v700, 32
    %v2916 = vpop.permute.xlu0 %2915
    %2917 = vrot.lane.b32.xlu0 %v701, 32
    %v2918 = vpop.permute.xlu0 %2917
    %2919 = vrot.lane.b32.xlu0 %v702, 32
    %v2920 = vpop.permute.xlu0 %2919
    %2921 = vrot.lane.b32.xlu0 %v703, 32
    %v2922 = vpop.permute.xlu0 %2921
    %2923 = vrot.lane.b32.xlu0 %v704, 32
    %v2924 = vpop.permute.xlu0 %2923
    %2925 = vrot.lane.b32.xlu0 %v705, 32
    %v2926 = vpop.permute.xlu0 %2925
    %2927 = vrot.lane.b32.xlu0 %v706, 32
    %v2928 = vpop.permute.xlu0 %2927
    %2929 = vrot.lane.b32.xlu0 %v707, 32
    %v2930 = vpop.permute.xlu0 %2929
    %2939 = vmatprep.subr.bf16.mxu0 0
    %2940 = vmatpush1.bf16.msra.mxu0 %v2916
    %2941 = vmatprep.subr.bf16.mxu0 0
    %2942 = vmatpush1.bf16.msra.mxu0 %v2918
    %2943 = vmatprep.subr.bf16.mxu0 0
    %2944 = vmatpush1.bf16.msra.mxu0 %v2920
    %2945 = vmatprep.subr.bf16.mxu0 0
    %2946 = vmatpush1.bf16.msra.mxu0 %v2922
    %2947 = vmatprep.subr.bf16.mxu0 0
    %2948 = vmatpush1.bf16.msra.mxu0 %v2924
    %2949 = vmatprep.subr.bf16.mxu0 0
    %2950 = vmatpush1.bf16.msra.mxu0 %v2926
    %2951 = vmatprep.subr.bf16.mxu0 0
    %2952 = vmatpush1.bf16.msra.mxu0 %v2928
    %2953 = vmatprep.subr.bf16.mxu0 0
    %2954 = vmatpush1.bf16.msra.mxu0 %v2930
    %2955 = vmatprep.subr.bf16.mxu0 0
    %2956 = vmatpush1.bf16.msra.mxu0 0
    %2957 = vmatprep.subr.bf16.mxu0 0
    %2958 = vmatpush1.bf16.msra.mxu0 0
    %2959 = vmatprep.subr.bf16.mxu0 0
    %2960 = vmatpush1.bf16.msra.mxu0 0
    %2961 = vmatprep.subr.bf16.mxu0 0
    %2962 = vmatpush1.bf16.msra.mxu0 0
    %2963 = vmatprep.subr.bf16.mxu0 0
    %2964 = vmatpush1.bf16.msra.mxu0 0
    %2965 = vmatprep.subr.bf16.mxu0 0
    %2966 = vmatpush1.bf16.msra.mxu0 0
    %2967 = vmatprep.subr.bf16.mxu0 0
    %2968 = vmatpush1.bf16.msra.mxu0 0
    %2969 = vmatprep.subr.bf16.mxu0 0
    %2970 = vmatpush1.bf16.msra.mxu0 0
    %2971 = vmatprep.mubr.bf16.mxu0 0
    %2972 = vmatmul.mubr.bf16.gmra.mrb[0].mxu0 %v2907
    %v2973 = vpop.f32.mrb[0].mxu0
    %v2974 = vadd.f32 0.0, %v2973
    %v2975 = vpop.f32.mrb[0].mxu0
    %v2976 = vpop.f32.mrb[0].mxu0
    %v2977 = vadd.f32 0.0, %v2976
    %v2978 = vpop.f32.mrb[0].mxu0
    %2979 = vmatprep.mubr.bf16.mxu0 0
    %2980 = vmatmul.mubr.bf16.gmra.mrb[0].mxu0 %v2908
    %v2981 = vpop.f32.mrb[0].mxu0
    %v2982 = vadd.f32 0.0, %v2981
    %v2983 = vpop.f32.mrb[0].mxu0
    %v2984 = vpop.f32.mrb[0].mxu0
    %v2985 = vadd.f32 0.0, %v2984
    %v2986 = vpop.f32.mrb[0].mxu0
    %2987 = vmatprep.mubr.bf16.mxu0 0
    %2988 = vmatmul.mubr.bf16.gmra.mrb[0].mxu0 %v2909
    %v2989 = vpop.f32.mrb[0].mxu0
    %v2990 = vadd.f32 0.0, %v2989
    %v2991 = vpop.f32.mrb[0].mxu0
    %v2992 = vpop.f32.mrb[0].mxu0
    %v2993 = vadd.f32 0.0, %v2992
    %v2994 = vpop.f32.mrb[0].mxu0
    %2995 = vmatprep.mubr.bf16.mxu0 0
    %2996 = vmatmul.mubr.bf16.gmra.mrb[0].mxu0 %v2910
    %v2997 = vpop.f32.mrb[0].mxu0
    %v2998 = vadd.f32 0.0, %v2997
    %v2999 = vpop.f32.mrb[0].mxu0
    %v3000 = vpop.f32.mrb[0].mxu0
    %v3001 = vadd.f32 0.0, %v3000
    %v3002 = vpop.f32.mrb[0].mxu0
    %3003 = vmatprep.mubr.bf16.mxu0 0
    %3004 = vmatmul.mubr.bf16.gmra.mrb[0].mxu0 %v2911
    %v3005 = vpop.f32.mrb[0].mxu0
    %v3006 = vadd.f32 0.0, %v3005
    %v3007 = vpop.f32.mrb[0].mxu0
    %v3008 = vpop.f32.mrb[0].mxu0
    %v3009 = vadd.f32 0.0, %v3008
    %v3010 = vpop.f32.mrb[0].mxu0
    %3011 = vmatprep.mubr.bf16.mxu0 0
    %3012 = vmatmul.mubr.bf16.gmra.mrb[0].mxu0 %v2912
    %v3013 = vpop.f32.mrb[0].mxu0
    %v3014 = vadd.f32 0.0, %v3013
    %v3015 = vpop.f32.mrb[0].mxu0
    %v3016 = vpop.f32.mrb[0].mxu0
    %v3017 = vadd.f32 0.0, %v3016
    %v3018 = vpop.f32.mrb[0].mxu0
    %3019 = vmatprep.mubr.bf16.mxu0 0
    %3020 = vmatmul.mubr.bf16.gmra.mrb[0].mxu0 %v2913
    %v3021 = vpop.f32.mrb[0].mxu0
    %v3022 = vadd.f32 0.0, %v3021
    %v3023 = vpop.f32.mrb[0].mxu0
    %v3024 = vpop.f32.mrb[0].mxu0
    %v3025 = vadd.f32 0.0, %v3024
    %v3026 = vpop.f32.mrb[0].mxu0
    %3027 = vmatprep.mubr.bf16.mxu0 0
    %3028 = vmatmul.mubr.bf16.gmra.mrb[0].mxu0 %v2914
    %v3029 = vpop.f32.mrb[0].mxu0
    %v3030 = vadd.f32 0.0, %v3029
    %v3031 = vpop.f32.mrb[0].mxu0
    %v3032 = vpop.f32.mrb[0].mxu0
    %v3033 = vadd.f32 0.0, %v3032
    %v3034 = vpop.f32.mrb[0].mxu0
    %3035 = vdwg.mxu0
    %3037 = vset.pattern.permute.xlu0 3
    %3038 = vperm.xlu0 %3037, %v2668
    %v3039 = vpop.permute.xlu0 %3038
    %3042 = vset.pattern.permute.xlu0 3
    %3043 = vperm.xlu0 %3042, %v2670
    %v3044 = vpop.permute.xlu0 %3043
    %3047 = vset.pattern.permute.xlu0 3
    %3048 = vperm.xlu0 %3047, %v2672
    %v3049 = vpop.permute.xlu0 %3048
    %3052 = vset.pattern.permute.xlu0 3
    %3053 = vperm.xlu0 %3052, %v2674
    %v3054 = vpop.permute.xlu0 %3053
    %3057 = vset.pattern.permute.xlu0 3
    %3058 = vperm.xlu0 %3057, %v2676
    %v3059 = vpop.permute.xlu0 %3058
    %3062 = vset.pattern.permute.xlu0 3
    %3063 = vperm.xlu0 %3062, %v2678
    %v3064 = vpop.permute.xlu0 %3063
    %3067 = vset.pattern.permute.xlu0 3
    %3068 = vperm.xlu0 %3067, %v2680
    %v3069 = vpop.permute.xlu0 %3068
    %3072 = vset.pattern.permute.xlu0 3
    %3073 = vperm.xlu0 %3072, %v2682
    %v3074 = vpop.permute.xlu0 %3073
    %3077 = vset.pattern.permute.xlu0 3
    %3078 = vperm.xlu0 %3077, %v2684
    %v3079 = vpop.permute.xlu0 %3078
    %3082 = vset.pattern.permute.xlu0 3
    %3083 = vperm.xlu0 %3082, %v2686
    %v3084 = vpop.permute.xlu0 %3083
    %3087 = vset.pattern.permute.xlu0 3
    %3088 = vperm.xlu0 %3087, %v2688
    %v3089 = vpop.permute.xlu0 %3088
    %3092 = vset.pattern.permute.xlu0 3
    %3093 = vperm.xlu0 %3092, %v2690
    %v3094 = vpop.permute.xlu0 %3093
    %3097 = vset.pattern.permute.xlu0 3
    %3098 = vperm.xlu0 %3097, %v2692
    %v3099 = vpop.permute.xlu0 %3098
    %3102 = vset.pattern.permute.xlu0 3
    %3103 = vperm.xlu0 %3102, %v2694
    %v3104 = vpop.permute.xlu0 %3103
    %3107 = vset.pattern.permute.xlu0 3
    %3108 = vperm.xlu0 %3107, %v2696
    %v3109 = vpop.permute.xlu0 %3108
    %3112 = vset.pattern.permute.xlu0 3
    %3113 = vperm.xlu0 %3112, %v2698
    %v3114 = vpop.permute.xlu0 %3113
    %v3116 = vmul.f32 %v3039, %v813
    %v3117 = vmul.f32 %v3044, %v814
    %v3118 = vmul.f32 %v3049, %v815
    %v3119 = vmul.f32 %v3054, %v816
    %v3120 = vmul.f32 %v3059, %v817
    %v3121 = vmul.f32 %v3064, %v818
    %v3122 = vmul.f32 %v3069, %v819
    %v3123 = vmul.f32 %v3074, %v820
    %v3124 = vmul.f32 %v3079, %v821
    %v3125 = vmul.f32 %v3084, %v822
    %v3126 = vmul.f32 %v3089, %v823
    %v3127 = vmul.f32 %v3094, %v824
    %v3128 = vmul.f32 %v3099, %v825
    %v3129 = vmul.f32 %v3104, %v826
    %v3130 = vmul.f32 %v3109, %v827
    %v3131 = vmul.f32 %v3114, %v828
    %3148 = vrot.lane.b32.xlu0 %v2974, 96
    %v3149 = vpop.permute.xlu0 %3148
    %3150 = vrot.lane.b32.xlu0 %v2977, 96
    %v3151 = vpop.permute.xlu0 %3150
    %3152 = vrot.lane.b32.xlu0 %v2982, 96
    %v3153 = vpop.permute.xlu0 %3152
    %3154 = vrot.lane.b32.xlu0 %v2985, 96
    %v3155 = vpop.permute.xlu0 %3154
    %3156 = vrot.lane.b32.xlu0 %v2990, 96
    %v3157 = vpop.permute.xlu0 %3156
    %3158 = vrot.lane.b32.xlu0 %v2993, 96
    %v3159 = vpop.permute.xlu0 %3158
    %3160 = vrot.lane.b32.xlu0 %v2998, 96
    %v3161 = vpop.permute.xlu0 %3160
    %3162 = vrot.lane.b32.xlu0 %v3001, 96
    %v3163 = vpop.permute.xlu0 %3162
    %3164 = vrot.lane.b32.xlu0 %v3006, 96
    %v3165 = vpop.permute.xlu0 %3164
    %3166 = vrot.lane.b32.xlu0 %v3009, 96
    %v3167 = vpop.permute.xlu0 %3166
    %3168 = vrot.lane.b32.xlu0 %v3014, 96
    %v3169 = vpop.permute.xlu0 %3168
    %3170 = vrot.lane.b32.xlu0 %v3017, 96
    %v3171 = vpop.permute.xlu0 %3170
    %3172 = vrot.lane.b32.xlu0 %v3022, 96
    %v3173 = vpop.permute.xlu0 %3172
    %3174 = vrot.lane.b32.xlu0 %v3025, 96
    %v3175 = vpop.permute.xlu0 %3174
    %3176 = vrot.lane.b32.xlu0 %v3030, 96
    %v3177 = vpop.permute.xlu0 %3176
    %3178 = vrot.lane.b32.xlu0 %v3033, 96
    %v3179 = vpop.permute.xlu0 %3178
    %v3196 = vadd.f32 %v3116, %v3149
    %v3197 = vadd.f32 %v3117, %v3151
    %v3198 = vadd.f32 %v3118, %v3153
    %v3199 = vadd.f32 %v3119, %v3155
    %v3200 = vadd.f32 %v3120, %v3157
    %v3201 = vadd.f32 %v3121, %v3159
    %v3202 = vadd.f32 %v3122, %v3161
    %v3203 = vadd.f32 %v3123, %v3163
    %v3204 = vadd.f32 %v3124, %v3165
    %v3205 = vadd.f32 %v3125, %v3167
    %v3206 = vadd.f32 %v3126, %v3169
    %v3207 = vadd.f32 %v3127, %v3171
    %v3208 = vadd.f32 %v3128, %v3173
    %v3209 = vadd.f32 %v3129, %v3175
    %v3210 = vadd.f32 %v3130, %v3177
    %v3211 = vadd.f32 %v3131, %v3179
    %vm3212 = vcmask 7168
    %v3213 = vsel %vm3212, %v372, %v1121
    %v3214 = vsel %vm3212, %v373, %v1122
    %v3215 = vsel %vm3212, %v374, %v1123
    %v3216 = vsel %vm3212, %v375, %v1124
    %v3217 = vsel %vm3212, %v376, %v1125
    %v3218 = vsel %vm3212, %v377, %v1126
    %v3219 = vsel %vm3212, %v378, %v1127
    %v3220 = vsel %vm3212, %v379, %v1128
    %v3221 = vsel %vm3212, %v380, %v1129
    %v3222 = vsel %vm3212, %v381, %v1130
    %v3223 = vsel %vm3212, %v382, %v1131
    %v3224 = vsel %vm3212, %v383, %v1132
    %v3225 = vsel %vm3212, %v384, %v1133
    %v3226 = vsel %vm3212, %v385, %v1134
    %v3227 = vsel %vm3212, %v386, %v1135
    %v3228 = vsel %vm3212, %v387, %v1136
    %vm3229 = vcmask 15360
    %v3230 = vsel %vm3229, %v3213, %v1878
    %v3231 = vsel %vm3229, %v3214, %v1879
    %v3232 = vsel %vm3229, %v3215, %v1880
    %v3233 = vsel %vm3229, %v3216, %v1881
    %v3234 = vsel %vm3229, %v3217, %v1882
    %v3235 = vsel %vm3229, %v3218, %v1883
    %v3236 = vsel %vm3229, %v3219, %v1884
    %v3237 = vsel %vm3229, %v3220, %v1885
    %v3238 = vsel %vm3229, %v3221, %v1886
    %v3239 = vsel %vm3229, %v3222, %v1887
    %v3240 = vsel %vm3229, %v3223, %v1888
    %v3241 = vsel %vm3229, %v3224, %v1889
    %v3242 = vsel %vm3229, %v3225, %v1890
    %v3243 = vsel %vm3229, %v3226, %v1891
    %v3244 = vsel %vm3229, %v3227, %v1892
    %v3245 = vsel %vm3229, %v3228, %v1893
    %vm3246 = vcmask 23552
    %v3247 = vsel %vm3246, %v3230, %v2635
    %v3248 = vsel %vm3246, %v3231, %v2636
    %v3249 = vsel %vm3246, %v3232, %v2637
    %v3250 = vsel %vm3246, %v3233, %v2638
    %v3251 = vsel %vm3246, %v3234, %v2639
    %v3252 = vsel %vm3246, %v3235, %v2640
    %v3253 = vsel %vm3246, %v3236, %v2641
    %v3254 = vsel %vm3246, %v3237, %v2642
    %v3255 = vsel %vm3246, %v3238, %v2643
    %v3256 = vsel %vm3246, %v3239, %v2644
    %v3257 = vsel %vm3246, %v3240, %v2645
    %v3258 = vsel %vm3246, %v3241, %v2646
    %v3259 = vsel %vm3246, %v3242, %v2647
    %v3260 = vsel %vm3246, %v3243, %v2648
    %v3261 = vsel %vm3246, %v3244, %v2649
    %v3262 = vsel %vm3246, %v3245, %v2650
    %vm3263 = vcmask 31744
    %3264 = vst.msk [vmem:[#allocation2] sm:$0xff] %vm3263, %v3247
    %3265 = vst.msk [vmem:[#allocation2 + $0x8] sm:$0xff] %vm3263, %v3248
    %3266 = vst.msk [vmem:[#allocation2 + $0x10] sm:$0xff] %vm3263, %v3249
    %3267 = vst.msk [vmem:[#allocation2 + $0x18] sm:$0xff] %vm3263, %v3250
    %3268 = vst.msk [vmem:[#allocation2 + $0x20] sm:$0xff] %vm3263, %v3251
    %3269 = vst.msk [vmem:[#allocation2 + $0x28] sm:$0xff] %vm3263, %v3252
    %3270 = vst.msk [vmem:[#allocation2 + $0x30] sm:$0xff] %vm3263, %v3253
    %3271 = vst.msk [vmem:[#allocation2 + $0x38] sm:$0xff] %vm3263, %v3254
    %3272 = vst.msk [vmem:[#allocation2 + $0x40] sm:$0xff] %vm3263, %v3255
    %3273 = vst.msk [vmem:[#allocation2 + $0x48] sm:$0xff] %vm3263, %v3256
    %3274 = vst.msk [vmem:[#allocation2 + $0x50] sm:$0xff] %vm3263, %v3257
    %3275 = vst.msk [vmem:[#allocation2 + $0x58] sm:$0xff] %vm3263, %v3258
    %3276 = vst.msk [vmem:[#allocation2 + $0x60] sm:$0xff] %vm3263, %v3259
    %3277 = vst.msk [vmem:[#allocation2 + $0x68] sm:$0xff] %vm3263, %v3260
    %3278 = vst.msk [vmem:[#allocation2 + $0x70] sm:$0xff] %vm3263, %v3261
    %3279 = vst.msk [vmem:[#allocation2 + $0x78] sm:$0xff] %vm3263, %v3262
    %v3280 = vsel %vm3212, %v644, %v1377
    %v3281 = vsel %vm3212, %v645, %v1378
    %v3282 = vsel %vm3212, %v646, %v1379
    %v3283 = vsel %vm3212, %v647, %v1380
    %v3284 = vsel %vm3212, %v648, %v1381
    %v3285 = vsel %vm3212, %v649, %v1382
    %v3286 = vsel %vm3212, %v650, %v1383
    %v3287 = vsel %vm3212, %v651, %v1384
    %v3288 = vsel %vm3212, %v652, %v1385
    %v3289 = vsel %vm3212, %v653, %v1386
    %v3290 = vsel %vm3212, %v654, %v1387
    %v3291 = vsel %vm3212, %v655, %v1388
    %v3292 = vsel %vm3212, %v656, %v1389
    %v3293 = vsel %vm3212, %v657, %v1390
    %v3294 = vsel %vm3212, %v658, %v1391
    %v3295 = vsel %vm3212, %v659, %v1392
    %v3296 = vsel %vm3229, %v3280, %v2134
    %v3297 = vsel %vm3229, %v3281, %v2135
    %v3298 = vsel %vm3229, %v3282, %v2136
    %v3299 = vsel %vm3229, %v3283, %v2137
    %v3300 = vsel %vm3229, %v3284, %v2138
    %v3301 = vsel %vm3229, %v3285, %v2139
    %v3302 = vsel %vm3229, %v3286, %v2140
    %v3303 = vsel %vm3229, %v3287, %v2141
    %v3304 = vsel %vm3229, %v3288, %v2142
    %v3305 = vsel %vm3229, %v3289, %v2143
    %v3306 = vsel %vm3229, %v3290, %v2144
    %v3307 = vsel %vm3229, %v3291, %v2145
    %v3308 = vsel %vm3229, %v3292, %v2146
    %v3309 = vsel %vm3229, %v3293, %v2147
    %v3310 = vsel %vm3229, %v3294, %v2148
    %v3311 = vsel %vm3229, %v3295, %v2149
    %v3312 = vsel %vm3246, %v3296, %v2891
    %v3313 = vsel %vm3246, %v3297, %v2892
    %v3314 = vsel %vm3246, %v3298, %v2893
    %v3315 = vsel %vm3246, %v3299, %v2894
    %v3316 = vsel %vm3246, %v3300, %v2895
    %v3317 = vsel %vm3246, %v3301, %v2896
    %v3318 = vsel %vm3246, %v3302, %v2897
    %v3319 = vsel %vm3246, %v3303, %v2898
    %v3320 = vsel %vm3246, %v3304, %v2899
    %v3321 = vsel %vm3246, %v3305, %v2900
    %v3322 = vsel %vm3246, %v3306, %v2901
    %v3323 = vsel %vm3246, %v3307, %v2902
    %v3324 = vsel %vm3246, %v3308, %v2903
    %v3325 = vsel %vm3246, %v3309, %v2904
    %v3326 = vsel %vm3246, %v3310, %v2905
    %v3327 = vsel %vm3246, %v3311, %v2906
    %3328 = vst.msk [vmem:[#allocation3] sm:$0xff] %vm3263, %v3312
    %3329 = vst.msk [vmem:[#allocation3 + $0x8] sm:$0xff] %vm3263, %v3313
    %3330 = vst.msk [vmem:[#allocation3 + $0x10] sm:$0xff] %vm3263, %v3314
    %3331 = vst.msk [vmem:[#allocation3 + $0x18] sm:$0xff] %vm3263, %v3315
    %3332 = vst.msk [vmem:[#allocation3 + $0x20] sm:$0xff] %vm3263, %v3316
    %3333 = vst.msk [vmem:[#allocation3 + $0x28] sm:$0xff] %vm3263, %v3317
    %3334 = vst.msk [vmem:[#allocation3 + $0x30] sm:$0xff] %vm3263, %v3318
    %3335 = vst.msk [vmem:[#allocation3 + $0x38] sm:$0xff] %vm3263, %v3319
    %3336 = vst.msk [vmem:[#allocation3 + $0x40] sm:$0xff] %vm3263, %v3320
    %3337 = vst.msk [vmem:[#allocation3 + $0x48] sm:$0xff] %vm3263, %v3321
    %3338 = vst.msk [vmem:[#allocation3 + $0x50] sm:$0xff] %vm3263, %v3322
    %3339 = vst.msk [vmem:[#allocation3 + $0x58] sm:$0xff] %vm3263, %v3323
    %3340 = vst.msk [vmem:[#allocation3 + $0x60] sm:$0xff] %vm3263, %v3324
    %3341 = vst.msk [vmem:[#allocation3 + $0x68] sm:$0xff] %vm3263, %v3325
    %3342 = vst.msk [vmem:[#allocation3 + $0x70] sm:$0xff] %vm3263, %v3326
    %3343 = vst.msk [vmem:[#allocation3 + $0x78] sm:$0xff] %vm3263, %v3327
    %vm3344 = vcmask 261120
    %v3345 = vsel %vm3344, %v925, %v1682
    %v3346 = vsel %vm3344, %v926, %v1683
    %v3347 = vsel %vm3344, %v927, %v1684
    %v3348 = vsel %vm3344, %v928, %v1685
    %v3349 = vsel %vm3344, %v929, %v1686
    %v3350 = vsel %vm3344, %v930, %v1687
    %v3351 = vsel %vm3344, %v931, %v1688
    %v3352 = vsel %vm3344, %v932, %v1689
    %v3353 = vsel %vm3344, %v933, %v1690
    %v3354 = vsel %vm3344, %v934, %v1691
    %v3355 = vsel %vm3344, %v935, %v1692
    %v3356 = vsel %vm3344, %v936, %v1693
    %v3357 = vsel %vm3344, %v937, %v1694
    %v3358 = vsel %vm3344, %v938, %v1695
    %v3359 = vsel %vm3344, %v939, %v1696
    %v3360 = vsel %vm3344, %v940, %v1697
    %vm3361 = vcmask 523264
    %v3362 = vsel %vm3361, %v3345, %v2439
    %v3363 = vsel %vm3361, %v3346, %v2440
    %v3364 = vsel %vm3361, %v3347, %v2441
    %v3365 = vsel %vm3361, %v3348, %v2442
    %v3366 = vsel %vm3361, %v3349, %v2443
    %v3367 = vsel %vm3361, %v3350, %v2444
    %v3368 = vsel %vm3361, %v3351, %v2445
    %v3369 = vsel %vm3361, %v3352, %v2446
    %v3370 = vsel %vm3361, %v3353, %v2447
    %v3371 = vsel %vm3361, %v3354, %v2448
    %v3372 = vsel %vm3361, %v3355, %v2449
    %v3373 = vsel %vm3361, %v3356, %v2450
    %v3374 = vsel %vm3361, %v3357, %v2451
    %v3375 = vsel %vm3361, %v3358, %v2452
    %v3376 = vsel %vm3361, %v3359, %v2453
    %v3377 = vsel %vm3361, %v3360, %v2454
    %vm3378 = vcmask 785408
    %v3379 = vsel %vm3378, %v3362, %v3196
    %v3380 = vsel %vm3378, %v3363, %v3197
    %v3381 = vsel %vm3378, %v3364, %v3198
    %v3382 = vsel %vm3378, %v3365, %v3199
    %v3383 = vsel %vm3378, %v3366, %v3200
    %v3384 = vsel %vm3378, %v3367, %v3201
    %v3385 = vsel %vm3378, %v3368, %v3202
    %v3386 = vsel %vm3378, %v3369, %v3203
    %v3387 = vsel %vm3378, %v3370, %v3204
    %v3388 = vsel %vm3378, %v3371, %v3205
    %v3389 = vsel %vm3378, %v3372, %v3206
    %v3390 = vsel %vm3378, %v3373, %v3207
    %v3391 = vsel %vm3378, %v3374, %v3208
    %v3392 = vsel %vm3378, %v3375, %v3209
    %v3393 = vsel %vm3378, %v3376, %v3210
    %v3394 = vsel %vm3378, %v3377, %v3211
    %3395 = vst [vmem:[#allocation4] sm:$0xff] %v3379
    %3396 = vst [vmem:[#allocation4 + $0x8] sm:$0xff] %v3380
    %3397 = vst [vmem:[#allocation4 + $0x10] sm:$0xff] %v3381
    %3398 = vst [vmem:[#allocation4 + $0x18] sm:$0xff] %v3382
    %3399 = vst [vmem:[#allocation4 + $0x20] sm:$0xff] %v3383
    %3400 = vst [vmem:[#allocation4 + $0x28] sm:$0xff] %v3384
    %3401 = vst [vmem:[#allocation4 + $0x30] sm:$0xff] %v3385
    %3402 = vst [vmem:[#allocation4 + $0x38] sm:$0xff] %v3386
    %3403 = vst [vmem:[#allocation4 + $0x40] sm:$0xff] %v3387
    %3404 = vst [vmem:[#allocation4 + $0x48] sm:$0xff] %v3388
    %3405 = vst [vmem:[#allocation4 + $0x50] sm:$0xff] %v3389
    %3406 = vst [vmem:[#allocation4 + $0x58] sm:$0xff] %v3390
    %3407 = vst [vmem:[#allocation4 + $0x60] sm:$0xff] %v3391
    %3408 = vst [vmem:[#allocation4 + $0x68] sm:$0xff] %v3392
    %3409 = vst [vmem:[#allocation4 + $0x70] sm:$0xff] %v3393
    %3410 = vst [vmem:[#allocation4 + $0x78] sm:$0xff] %v3394
    // Predicated region
    $region26: #{tpu_custom_call.1} parent=1 // pred_check
      %p3411 = pneg %p22
    $region27: #{tpu_custom_call.1} parent=1 // pred_check_branch
      %3413 = sbr.rel (%p3411) target = $region29
    $region28: #{tpu_custom_call.1} parent=1 // pred_region
      %v3414 = vld [vmem:[#allocation3] sm:$0xff]
      %v3415 = vld [vmem:[#allocation3 + $0x8] sm:$0xff]
      %v3416 = vld [vmem:[#allocation3 + $0x10] sm:$0xff]
      %v3417 = vld [vmem:[#allocation3 + $0x18] sm:$0xff]
      %v3418 = vld [vmem:[#allocation3 + $0x20] sm:$0xff]
      %v3419 = vld [vmem:[#allocation3 + $0x28] sm:$0xff]
      %v3420 = vld [vmem:[#allocation3 + $0x30] sm:$0xff]
      %v3421 = vld [vmem:[#allocation3 + $0x38] sm:$0xff]
      %v3422 = vld [vmem:[#allocation3 + $0x40] sm:$0xff]
      %v3423 = vld [vmem:[#allocation3 + $0x48] sm:$0xff]
      %v3424 = vld [vmem:[#allocation3 + $0x50] sm:$0xff]
      %v3425 = vld [vmem:[#allocation3 + $0x58] sm:$0xff]
      %v3426 = vld [vmem:[#allocation3 + $0x60] sm:$0xff]
      %v3427 = vld [vmem:[#allocation3 + $0x68] sm:$0xff]
      %v3428 = vld [vmem:[#allocation3 + $0x70] sm:$0xff]
      %v3429 = vld [vmem:[#allocation3 + $0x78] sm:$0xff]
      %v3430 = vadd.f32 %v3414, 1e-20
      %v3431 = vadd.f32 %v3415, 1e-20
      %v3432 = vadd.f32 %v3416, 1e-20
      %v3433 = vadd.f32 %v3417, 1e-20
      %v3434 = vadd.f32 %v3418, 1e-20
      %v3435 = vadd.f32 %v3419, 1e-20
      %v3436 = vadd.f32 %v3420, 1e-20
      %v3437 = vadd.f32 %v3421, 1e-20
      %v3438 = vadd.f32 %v3422, 1e-20
      %v3439 = vadd.f32 %v3423, 1e-20
      %v3440 = vadd.f32 %v3424, 1e-20
      %v3441 = vadd.f32 %v3425, 1e-20
      %v3442 = vadd.f32 %v3426, 1e-20
      %v3443 = vadd.f32 %v3427, 1e-20
      %v3444 = vadd.f32 %v3428, 1e-20
      %v3445 = vadd.f32 %v3429, 1e-20
      %v3446 = vrcp.pop %v3430
      %v3447 = vrcp.pop %v3431
      %v3448 = vrcp.pop %v3432
      %v3449 = vrcp.pop %v3433
      %v3450 = vrcp.pop %v3434
      %v3451 = vrcp.pop %v3435
      %v3452 = vrcp.pop %v3436
      %v3453 = vrcp.pop %v3437
      %v3454 = vrcp.pop %v3438
      %v3455 = vrcp.pop %v3439
      %v3456 = vrcp.pop %v3440
      %v3457 = vrcp.pop %v3441
      %v3458 = vrcp.pop %v3442
      %v3459 = vrcp.pop %v3443
      %v3460 = vrcp.pop %v3444
      %v3461 = vrcp.pop %v3445
      %v3462 = vld [vmem:[#allocation4] sm:$0xff]
      %v3463 = vld [vmem:[#allocation4 + $0x8] sm:$0xff]
      %v3464 = vld [vmem:[#allocation4 + $0x10] sm:$0xff]
      %v3465 = vld [vmem:[#allocation4 + $0x18] sm:$0xff]
      %v3466 = vld [vmem:[#allocation4 + $0x20] sm:$0xff]
      %v3467 = vld [vmem:[#allocation4 + $0x28] sm:$0xff]
      %v3468 = vld [vmem:[#allocation4 + $0x30] sm:$0xff]
      %v3469 = vld [vmem:[#allocation4 + $0x38] sm:$0xff]
      %v3470 = vld [vmem:[#allocation4 + $0x40] sm:$0xff]
      %v3471 = vld [vmem:[#allocation4 + $0x48] sm:$0xff]
      %v3472 = vld [vmem:[#allocation4 + $0x50] sm:$0xff]
      %v3473 = vld [vmem:[#allocation4 + $0x58] sm:$0xff]
      %v3474 = vld [vmem:[#allocation4 + $0x60] sm:$0xff]
      %v3475 = vld [vmem:[#allocation4 + $0x68] sm:$0xff]
      %v3476 = vld [vmem:[#allocation4 + $0x70] sm:$0xff]
      %v3477 = vld [vmem:[#allocation4 + $0x78] sm:$0xff]
      %3479 = vset.pattern.permute.xlu0 0
      %3480 = vperm.xlu0 %3479, %v3446
      %v3481 = vpop.permute.xlu0 %3480
      %3484 = vset.pattern.permute.xlu0 0
      %3485 = vperm.xlu0 %3484, %v3447
      %v3486 = vpop.permute.xlu0 %3485
      %3489 = vset.pattern.permute.xlu0 0
      %3490 = vperm.xlu0 %3489, %v3448
      %v3491 = vpop.permute.xlu0 %3490
      %3494 = vset.pattern.permute.xlu0 0
      %3495 = vperm.xlu0 %3494, %v3449
      %v3496 = vpop.permute.xlu0 %3495
      %3499 = vset.pattern.permute.xlu0 0
      %3500 = vperm.xlu0 %3499, %v3450
      %v3501 = vpop.permute.xlu0 %3500
      %3504 = vset.pattern.permute.xlu0 0
      %3505 = vperm.xlu0 %3504, %v3451
      %v3506 = vpop.permute.xlu0 %3505
      %3509 = vset.pattern.permute.xlu0 0
      %3510 = vperm.xlu0 %3509, %v3452
      %v3511 = vpop.permute.xlu0 %3510
      %3514 = vset.pattern.permute.xlu0 0
      %3515 = vperm.xlu0 %3514, %v3453
      %v3516 = vpop.permute.xlu0 %3515
      %3519 = vset.pattern.permute.xlu0 0
      %3520 = vperm.xlu0 %3519, %v3454
      %v3521 = vpop.permute.xlu0 %3520
      %3524 = vset.pattern.permute.xlu0 0
      %3525 = vperm.xlu0 %3524, %v3455
      %v3526 = vpop.permute.xlu0 %3525
      %3529 = vset.pattern.permute.xlu0 0
      %3530 = vperm.xlu0 %3529, %v3456
      %v3531 = vpop.permute.xlu0 %3530
      %3534 = vset.pattern.permute.xlu0 0
      %3535 = vperm.xlu0 %3534, %v3457
      %v3536 = vpop.permute.xlu0 %3535
      %3539 = vset.pattern.permute.xlu0 0
      %3540 = vperm.xlu0 %3539, %v3458
      %v3541 = vpop.permute.xlu0 %3540
      %3544 = vset.pattern.permute.xlu0 0
      %3545 = vperm.xlu0 %3544, %v3459
      %v3546 = vpop.permute.xlu0 %3545
      %3549 = vset.pattern.permute.xlu0 0
      %3550 = vperm.xlu0 %3549, %v3460
      %v3551 = vpop.permute.xlu0 %3550
      %3554 = vset.pattern.permute.xlu0 0
      %3555 = vperm.xlu0 %3554, %v3461
      %v3556 = vpop.permute.xlu0 %3555
      %v3558 = vmul.f32 %v3462, %v3481
      %v3559 = vmul.f32 %v3463, %v3486
      %v3560 = vmul.f32 %v3464, %v3491
      %v3561 = vmul.f32 %v3465, %v3496
      %v3562 = vmul.f32 %v3466, %v3501
      %v3563 = vmul.f32 %v3467, %v3506
      %v3564 = vmul.f32 %v3468, %v3511
      %v3565 = vmul.f32 %v3469, %v3516
      %v3566 = vmul.f32 %v3470, %v3521
      %v3567 = vmul.f32 %v3471, %v3526
      %v3568 = vmul.f32 %v3472, %v3531
      %v3569 = vmul.f32 %v3473, %v3536
      %v3570 = vmul.f32 %v3474, %v3541
      %v3571 = vmul.f32 %v3475, %v3546
      %v3572 = vmul.f32 %v3476, %v3551
      %v3573 = vmul.f32 %v3477, %v3556
      %3574 = vset.pattern.permute.xlu0 1
      %3575 = vperm.xlu0 %3574, %v3446
      %v3576 = vpop.permute.xlu0 %3575
      %3578 = vset.pattern.permute.xlu0 1
      %3579 = vperm.xlu0 %3578, %v3447
      %v3580 = vpop.permute.xlu0 %3579
      %3582 = vset.pattern.permute.xlu0 1
      %3583 = vperm.xlu0 %3582, %v3448
      %v3584 = vpop.permute.xlu0 %3583
      %3586 = vset.pattern.permute.xlu0 1
      %3587 = vperm.xlu0 %3586, %v3449
      %v3588 = vpop.permute.xlu0 %3587
      %3590 = vset.pattern.permute.xlu0 1
      %3591 = vperm.xlu0 %3590, %v3450
      %v3592 = vpop.permute.xlu0 %3591
      %3594 = vset.pattern.permute.xlu0 1
      %3595 = vperm.xlu0 %3594, %v3451
      %v3596 = vpop.permute.xlu0 %3595
      %3598 = vset.pattern.permute.xlu0 1
      %3599 = vperm.xlu0 %3598, %v3452
      %v3600 = vpop.permute.xlu0 %3599
      %3602 = vset.pattern.permute.xlu0 1
      %3603 = vperm.xlu0 %3602, %v3453
      %v3604 = vpop.permute.xlu0 %3603
      %3606 = vset.pattern.permute.xlu0 1
      %3607 = vperm.xlu0 %3606, %v3454
      %v3608 = vpop.permute.xlu0 %3607
      %3610 = vset.pattern.permute.xlu0 1
      %3611 = vperm.xlu0 %3610, %v3455
      %v3612 = vpop.permute.xlu0 %3611
      %3614 = vset.pattern.permute.xlu0 1
      %3615 = vperm.xlu0 %3614, %v3456
      %v3616 = vpop.permute.xlu0 %3615
      %3618 = vset.pattern.permute.xlu0 1
      %3619 = vperm.xlu0 %3618, %v3457
      %v3620 = vpop.permute.xlu0 %3619
      %3622 = vset.pattern.permute.xlu0 1
      %3623 = vperm.xlu0 %3622, %v3458
      %v3624 = vpop.permute.xlu0 %3623
      %3626 = vset.pattern.permute.xlu0 1
      %3627 = vperm.xlu0 %3626, %v3459
      %v3628 = vpop.permute.xlu0 %3627
      %3630 = vset.pattern.permute.xlu0 1
      %3631 = vperm.xlu0 %3630, %v3460
      %v3632 = vpop.permute.xlu0 %3631
      %3634 = vset.pattern.permute.xlu0 1
      %3635 = vperm.xlu0 %3634, %v3461
      %v3636 = vpop.permute.xlu0 %3635
      %v3638 = vmul.f32 %v3462, %v3576
      %v3639 = vmul.f32 %v3463, %v3580
      %v3640 = vmul.f32 %v3464, %v3584
      %v3641 = vmul.f32 %v3465, %v3588
      %v3642 = vmul.f32 %v3466, %v3592
      %v3643 = vmul.f32 %v3467, %v3596
      %v3644 = vmul.f32 %v3468, %v3600
      %v3645 = vmul.f32 %v3469, %v3604
      %v3646 = vmul.f32 %v3470, %v3608
      %v3647 = vmul.f32 %v3471, %v3612
      %v3648 = vmul.f32 %v3472, %v3616
      %v3649 = vmul.f32 %v3473, %v3620
      %v3650 = vmul.f32 %v3474, %v3624
      %v3651 = vmul.f32 %v3475, %v3628
      %v3652 = vmul.f32 %v3476, %v3632
      %v3653 = vmul.f32 %v3477, %v3636
      %3654 = vset.pattern.permute.xlu0 2
      %3655 = vperm.xlu0 %3654, %v3446
      %v3656 = vpop.permute.xlu0 %3655
      %3658 = vset.pattern.permute.xlu0 2
      %3659 = vperm.xlu0 %3658, %v3447
      %v3660 = vpop.permute.xlu0 %3659
      %3662 = vset.pattern.permute.xlu0 2
      %3663 = vperm.xlu0 %3662, %v3448
      %v3664 = vpop.permute.xlu0 %3663
      %3666 = vset.pattern.permute.xlu0 2
      %3667 = vperm.xlu0 %3666, %v3449
      %v3668 = vpop.permute.xlu0 %3667
      %3670 = vset.pattern.permute.xlu0 2
      %3671 = vperm.xlu0 %3670, %v3450
      %v3672 = vpop.permute.xlu0 %3671
      %3674 = vset.pattern.permute.xlu0 2
      %3675 = vperm.xlu0 %3674, %v3451
      %v3676 = vpop.permute.xlu0 %3675
      %3678 = vset.pattern.permute.xlu0 2
      %3679 = vperm.xlu0 %3678, %v3452
      %v3680 = vpop.permute.xlu0 %3679
      %3682 = vset.pattern.permute.xlu0 2
      %3683 = vperm.xlu0 %3682, %v3453
      %v3684 = vpop.permute.xlu0 %3683
      %3686 = vset.pattern.permute.xlu0 2
      %3687 = vperm.xlu0 %3686, %v3454
      %v3688 = vpop.permute.xlu0 %3687
      %3690 = vset.pattern.permute.xlu0 2
      %3691 = vperm.xlu0 %3690, %v3455
      %v3692 = vpop.permute.xlu0 %3691
      %3694 = vset.pattern.permute.xlu0 2
      %3695 = vperm.xlu0 %3694, %v3456
      %v3696 = vpop.permute.xlu0 %3695
      %3698 = vset.pattern.permute.xlu0 2
      %3699 = vperm.xlu0 %3698, %v3457
      %v3700 = vpop.permute.xlu0 %3699
      %3702 = vset.pattern.permute.xlu0 2
      %3703 = vperm.xlu0 %3702, %v3458
      %v3704 = vpop.permute.xlu0 %3703
      %3706 = vset.pattern.permute.xlu0 2
      %3707 = vperm.xlu0 %3706, %v3459
      %v3708 = vpop.permute.xlu0 %3707
      %3710 = vset.pattern.permute.xlu0 2
      %3711 = vperm.xlu0 %3710, %v3460
      %v3712 = vpop.permute.xlu0 %3711
      %3714 = vset.pattern.permute.xlu0 2
      %3715 = vperm.xlu0 %3714, %v3461
      %v3716 = vpop.permute.xlu0 %3715
      %v3718 = vmul.f32 %v3462, %v3656
      %v3719 = vmul.f32 %v3463, %v3660
      %v3720 = vmul.f32 %v3464, %v3664
      %v3721 = vmul.f32 %v3465, %v3668
      %v3722 = vmul.f32 %v3466, %v3672
      %v3723 = vmul.f32 %v3467, %v3676
      %v3724 = vmul.f32 %v3468, %v3680
      %v3725 = vmul.f32 %v3469, %v3684
      %v3726 = vmul.f32 %v3470, %v3688
      %v3727 = vmul.f32 %v3471, %v3692
      %v3728 = vmul.f32 %v3472, %v3696
      %v3729 = vmul.f32 %v3473, %v3700
      %v3730 = vmul.f32 %v3474, %v3704
      %v3731 = vmul.f32 %v3475, %v3708
      %v3732 = vmul.f32 %v3476, %v3712
      %v3733 = vmul.f32 %v3477, %v3716
      %3734 = vset.pattern.permute.xlu0 3
      %3735 = vperm.xlu0 %3734, %v3446
      %v3736 = vpop.permute.xlu0 %3735
      %3738 = vset.pattern.permute.xlu0 3
      %3739 = vperm.xlu0 %3738, %v3447
      %v3740 = vpop.permute.xlu0 %3739
      %3742 = vset.pattern.permute.xlu0 3
      %3743 = vperm.xlu0 %3742, %v3448
      %v3744 = vpop.permute.xlu0 %3743
      %3746 = vset.pattern.permute.xlu0 3
      %3747 = vperm.xlu0 %3746, %v3449
      %v3748 = vpop.permute.xlu0 %3747
      %3750 = vset.pattern.permute.xlu0 3
      %3751 = vperm.xlu0 %3750, %v3450
      %v3752 = vpop.permute.xlu0 %3751
      %3754 = vset.pattern.permute.xlu0 3
      %3755 = vperm.xlu0 %3754, %v3451
      %v3756 = vpop.permute.xlu0 %3755
      %3758 = vset.pattern.permute.xlu0 3
      %3759 = vperm.xlu0 %3758, %v3452
      %v3760 = vpop.permute.xlu0 %3759
      %3762 = vset.pattern.permute.xlu0 3
      %3763 = vperm.xlu0 %3762, %v3453
      %v3764 = vpop.permute.xlu0 %3763
      %3766 = vset.pattern.permute.xlu0 3
      %3767 = vperm.xlu0 %3766, %v3454
      %v3768 = vpop.permute.xlu0 %3767
      %3770 = vset.pattern.permute.xlu0 3
      %3771 = vperm.xlu0 %3770, %v3455
      %v3772 = vpop.permute.xlu0 %3771
      %3774 = vset.pattern.permute.xlu0 3
      %3775 = vperm.xlu0 %3774, %v3456
      %v3776 = vpop.permute.xlu0 %3775
      %3778 = vset.pattern.permute.xlu0 3
      %3779 = vperm.xlu0 %3778, %v3457
      %v3780 = vpop.permute.xlu0 %3779
      %3782 = vset.pattern.permute.xlu0 3
      %3783 = vperm.xlu0 %3782, %v3458
      %v3784 = vpop.permute.xlu0 %3783
      %3786 = vset.pattern.permute.xlu0 3
      %3787 = vperm.xlu0 %3786, %v3459
      %v3788 = vpop.permute.xlu0 %3787
      %3790 = vset.pattern.permute.xlu0 3
      %3791 = vperm.xlu0 %3790, %v3460
      %v3792 = vpop.permute.xlu0 %3791
      %3794 = vset.pattern.permute.xlu0 3
      %3795 = vperm.xlu0 %3794, %v3461
      %v3796 = vpop.permute.xlu0 %3795
      %v3798 = vmul.f32 %v3462, %v3736
      %v3799 = vmul.f32 %v3463, %v3740
      %v3800 = vmul.f32 %v3464, %v3744
      %v3801 = vmul.f32 %v3465, %v3748
      %v3802 = vmul.f32 %v3466, %v3752
      %v3803 = vmul.f32 %v3467, %v3756
      %v3804 = vmul.f32 %v3468, %v3760
      %v3805 = vmul.f32 %v3469, %v3764
      %v3806 = vmul.f32 %v3470, %v3768
      %v3807 = vmul.f32 %v3471, %v3772
      %v3808 = vmul.f32 %v3472, %v3776
      %v3809 = vmul.f32 %v3473, %v3780
      %v3810 = vmul.f32 %v3474, %v3784
      %v3811 = vmul.f32 %v3475, %v3788
      %v3812 = vmul.f32 %v3476, %v3792
      %v3813 = vmul.f32 %v3477, %v3796
      %v3814 = vsel %vm3344, %v3558, %v3638
      %v3815 = vsel %vm3344, %v3559, %v3639
      %v3816 = vsel %vm3344, %v3560, %v3640
      %v3817 = vsel %vm3344, %v3561, %v3641
      %v3818 = vsel %vm3344, %v3562, %v3642
      %v3819 = vsel %vm3344, %v3563, %v3643
      %v3820 = vsel %vm3344, %v3564, %v3644
      %v3821 = vsel %vm3344, %v3565, %v3645
      %v3822 = vsel %vm3344, %v3566, %v3646
      %v3823 = vsel %vm3344, %v3567, %v3647
      %v3824 = vsel %vm3344, %v3568, %v3648
      %v3825 = vsel %vm3344, %v3569, %v3649
      %v3826 = vsel %vm3344, %v3570, %v3650
      %v3827 = vsel %vm3344, %v3571, %v3651
      %v3828 = vsel %vm3344, %v3572, %v3652
      %v3829 = vsel %vm3344, %v3573, %v3653
      %v3830 = vsel %vm3361, %v3814, %v3718
      %v3831 = vsel %vm3361, %v3815, %v3719
      %v3832 = vsel %vm3361, %v3816, %v3720
      %v3833 = vsel %vm3361, %v3817, %v3721
      %v3834 = vsel %vm3361, %v3818, %v3722
      %v3835 = vsel %vm3361, %v3819, %v3723
      %v3836 = vsel %vm3361, %v3820, %v3724
      %v3837 = vsel %vm3361, %v3821, %v3725
      %v3838 = vsel %vm3361, %v3822, %v3726
      %v3839 = vsel %vm3361, %v3823, %v3727
      %v3840 = vsel %vm3361, %v3824, %v3728
      %v3841 = vsel %vm3361, %v3825, %v3729
      %v3842 = vsel %vm3361, %v3826, %v3730
      %v3843 = vsel %vm3361, %v3827, %v3731
      %v3844 = vsel %vm3361, %v3828, %v3732
      %v3845 = vsel %vm3361, %v3829, %v3733
      %v3846 = vsel %vm3378, %v3830, %v3798
      %v3847 = vsel %vm3378, %v3831, %v3799
      %v3848 = vsel %vm3378, %v3832, %v3800
      %v3849 = vsel %vm3378, %v3833, %v3801
      %v3850 = vsel %vm3378, %v3834, %v3802
      %v3851 = vsel %vm3378, %v3835, %v3803
      %v3852 = vsel %vm3378, %v3836, %v3804
      %v3853 = vsel %vm3378, %v3837, %v3805
      %v3854 = vsel %vm3378, %v3838, %v3806
      %v3855 = vsel %vm3378, %v3839, %v3807
      %v3856 = vsel %vm3378, %v3840, %v3808
      %v3857 = vsel %vm3378, %v3841, %v3809
      %v3858 = vsel %vm3378, %v3842, %v3810
      %v3859 = vsel %vm3378, %v3843, %v3811
      %v3860 = vsel %vm3378, %v3844, %v3812
      %v3861 = vsel %vm3378, %v3845, %v3813
      %v3862 = vld [vmem:[%s4] sm:$0x1]
      %v3864 = vlaneseq
      %v3865 = vshrl.u32 %v3864, 7
      %v3866 = vsub.s32 0, %v3865
      %v3867 = vrot.slane %v3862, %v3866
      %v3869 = vadd.f32 %v3846, %v3867
      %v3870 = vadd.f32 %v3847, %v3867
      %v3871 = vadd.f32 %v3848, %v3867
      %v3872 = vadd.f32 %v3849, %v3867
      %v3873 = vadd.f32 %v3850, %v3867
      %v3874 = vadd.f32 %v3851, %v3867
      %v3875 = vadd.f32 %v3852, %v3867
      %v3876 = vadd.f32 %v3853, %v3867
      %v3877 = vadd.f32 %v3854, %v3867
      %v3878 = vadd.f32 %v3855, %v3867
      %v3879 = vadd.f32 %v3856, %v3867
      %v3880 = vadd.f32 %v3857, %v3867
      %v3881 = vadd.f32 %v3858, %v3867
      %v3882 = vadd.f32 %v3859, %v3867
      %v3883 = vadd.f32 %v3860, %v3867
      %v3884 = vadd.f32 %v3861, %v3867
      %v3885 = vmax.f32 %v3869, 0.0
      %v3886 = vmax.f32 %v3870, 0.0
      %v3887 = vmax.f32 %v3871, 0.0
      %v3888 = vmax.f32 %v3872, 0.0
      %v3889 = vmax.f32 %v3873, 0.0
      %v3890 = vmax.f32 %v3874, 0.0
      %v3891 = vmax.f32 %v3875, 0.0
      %v3892 = vmax.f32 %v3876, 0.0
      %v3893 = vmax.f32 %v3877, 0.0
      %v3894 = vmax.f32 %v3878, 0.0
      %v3895 = vmax.f32 %v3879, 0.0
      %v3896 = vmax.f32 %v3880, 0.0
      %v3897 = vmax.f32 %v3881, 0.0
      %v3898 = vmax.f32 %v3882, 0.0
      %v3899 = vmax.f32 %v3883, 0.0
      %v3900 = vmax.f32 %v3884, 0.0
      %3901 = vst [vmem:[#allocation5] sm:$0xff] %v3885
      %3902 = vst [vmem:[#allocation5 + $0x8] sm:$0xff] %v3886
      %3903 = vst [vmem:[#allocation5 + $0x10] sm:$0xff] %v3887
      %3904 = vst [vmem:[#allocation5 + $0x18] sm:$0xff] %v3888
      %3905 = vst [vmem:[#allocation5 + $0x20] sm:$0xff] %v3889
      %3906 = vst [vmem:[#allocation5 + $0x28] sm:$0xff] %v3890
      %3907 = vst [vmem:[#allocation5 + $0x30] sm:$0xff] %v3891
      %3908 = vst [vmem:[#allocation5 + $0x38] sm:$0xff] %v3892
      %3909 = vst [vmem:[#allocation5 + $0x40] sm:$0xff] %v3893
      %3910 = vst [vmem:[#allocation5 + $0x48] sm:$0xff] %v3894
      %3911 = vst [vmem:[#allocation5 + $0x50] sm:$0xff] %v3895
      %3912 = vst [vmem:[#allocation5 + $0x58] sm:$0xff] %v3896
      %3913 = vst [vmem:[#allocation5 + $0x60] sm:$0xff] %v3897
      %3914 = vst [vmem:[#allocation5 + $0x68] sm:$0xff] %v3898
      %3915 = vst [vmem:[#allocation5 + $0x70] sm:$0xff] %v3899
      %3916 = vst [vmem:[#allocation5 + $0x78] sm:$0xff] %v3900
    $region29: #{tpu_custom_call.1} parent=1 // pred_fallthru
      _
    // Predicated region
    $region30: #{tpu_custom_call.1} parent=1 // pred_check
      _
    $region31: #{tpu_custom_call.1} parent=1 // pred_check_branch
      %3918 = sbr.rel (0) target = $region33
    $region32: #{tpu_custom_call.1} parent=1 // pred_region
      %s3920 = ssub.s32 2048, 2048
      %3921 = vsyncadd [#allocation6], %s3920
      %s3922 = sshll.u32 [#allocation5], 4
      %s3923 = int_to_ptr.vmem [resolvable:$true] %s3922
      %3928 = dma.vmem_to_hbm [thread:$0]  %s3923, 2048, %s5, [#allocation6], 128, 128, 8
    $region33: #{tpu_custom_call.1} parent=1 // pred_fallthru
      _
    // Predicated region
    $region34: #{tpu_custom_call.1} parent=1 // pred_check
      _
    $region35: #{tpu_custom_call.1} parent=1 // pred_check_branch
      %3930 = sbr.rel (0) target = $region37
    $region36: #{tpu_custom_call.1} parent=1 // pred_region
      %3931 = dma.done [#allocation6], 2048
    $region37: #{tpu_custom_call.1} parent=1 // pred_fallthru
      _
    %3932 = vsyncpa [#allocation6], 1

</llo_original>
